<compile_context>
chip_gen: v6e
topology: v6e:2x2x1
jax: 0.10.0
libtpu: 0.0.40
codegen_flags: <defaults>
</compile_context>

<pallas_src>
import functools
import math

import jax
import jax.numpy as jnp
from jax.experimental import pallas as pl
from jax.experimental.pallas import tpu as pltpu

# ---------------- model hyper-parameters (small synthetic encoder) ----------
B = 2              # number of sentences
S = 8              # tokens per sentence (equal lengths -> no pad mask needed)
H = 32             # hidden / embedding dim
NH = 4             # attention heads
HD = H // NH
F = 64             # FFN intermediate dim
L = 2              # encoder layers
VOCAB = 128        # lane-aligned synthetic vocab
N = B * S          # total tokens in the folded batch

# TODO(synk): string tokenization (model.encode(sentence)) and the pretrained
# distilroberta checkpoint have no Pallas equivalent; inputs are synthetic
# pre-tokenized ids and deterministic random weights.


def _layernorm(x, g, b, eps=1e-5):
    # Single-pass mean / mean-of-squares (review: fuse the two LN reductions).
    # E[x^2] - mu^2 is marginally less stable than the two-pass form; accepted
    # at layernorm magnitudes.
    mu = jnp.mean(x, axis=-1, keepdims=True)
    msq = jnp.mean(x * x, axis=-1, keepdims=True)
    var = msq - mu * mu
    return (x - mu) * jax.lax.rsqrt(var + eps) * g + b


def encoder_kernel(tok_ref, emb_ref, w_attn_ref, w1_ref, w2_ref,
                   bias_h_ref, bias_f_ref, ln_ref, out_ref,
                   *, n_layers, n_heads, head_dim, n_sent, seq_len):
    hidden = n_heads * head_dim
    n_tok = n_sent * seq_len
    scale = 1.0 / math.sqrt(head_dim)

    # ---- fused embedding gather: bf16 one-hot (N, VOCAB) @ table (VOCAB, H) --
    ids = tok_ref[...]                                              # (N, 1) int32
    iota = jax.lax.broadcasted_iota(jnp.int32, (n_tok, VOCAB), 1)   # (N, VOCAB)
    onehot = (iota == ids).astype(jnp.bfloat16)                     # bf16 directly
    x = jnp.dot(onehot, emb_ref[...],
                preferred_element_type=jnp.float32)                 # (N, H) f32

    for l in range(n_layers):                                       # static unroll
        wq = w_attn_ref[l, 0]                  # (H, H) bf16  (leading-dim index: free)
        wk = w_attn_ref[l, 1]
        wv = w_attn_ref[l, 2]
        wo = w_attn_ref[l, 3]
        w1 = w1_ref[l]                         # (H, F) bf16
        w2 = w2_ref[l]                         # (F, H) bf16
        bh = bias_h_ref[l]                     # (5, H) f32: [bq, bk, bv, bo, b2]
        bf = bias_f_ref[l]                     # (1, F) f32: b1
        ln_l = ln_ref[l]                       # (4, H) f32: [g1, be1, g2, be2]

        # ---- self-attention: all sentences & all heads at once --------------
        xb = x.astype(jnp.bfloat16)
        q = jnp.dot(xb, wq, preferred_element_type=jnp.float32) + bh[0:1, :]
        k = jnp.dot(xb, wk, preferred_element_type=jnp.float32) + bh[1:2, :]
        v = jnp.dot(xb, wv, preferred_element_type=jnp.float32) + bh[2:3, :]
        q = q * scale                                               # hoisted 1/sqrt(hd)

        q3 = q.reshape(n_sent, seq_len, hidden)                     # leading split (free)
        k3 = k.reshape(n_sent, seq_len, hidden)
        v3 = v.reshape(n_sent, seq_len, hidden)

        # Fold heads into the leading batch dim -> single batched einsums over
        # batch B*NH (known-good 'bqd,bkd->bqk' pattern). Heads never mix.
        def to_bh(t):
            return jnp.concatenate(
                [t[:, :, h * head_dim:(h + 1) * head_dim]
                 for h in range(n_heads)], axis=0)                  # (B*NH, S, HD)

        q_bh = to_bh(q3).astype(jnp.bfloat16)
        k_bh = to_bh(k3).astype(jnp.bfloat16)
        v_bh = to_bh(v3).astype(jnp.bfloat16)

        s = jnp.einsum('bqd,bkd->bqk', q_bh, k_bh,
                       preferred_element_type=jnp.float32)          # (B*NH, S, S)
        s = s - jnp.max(s, axis=-1, keepdims=True)
        p = jnp.exp(s)
        p = p * pl.reciprocal(jnp.sum(p, axis=-1, keepdims=True), approx=True)
        ctx = jnp.einsum('bqk,bkd->bqd', p.astype(jnp.bfloat16), v_bh,
                         preferred_element_type=jnp.float32)        # (B*NH, S, HD)

        # Re-assemble heads along lanes (head-major, matches Wo row order),
        # then ONE output projection (N, H) @ (H, H).
        ctx = jnp.concatenate(
            [ctx[h * n_sent:(h + 1) * n_sent] for h in range(n_heads)],
            axis=-1)                                                # (B, S, H)
        ctx = ctx.reshape(n_tok, hidden)
        attn = jnp.dot(ctx.astype(jnp.bfloat16), wo,
                       preferred_element_type=jnp.float32) + bh[3:4, :]
        x = _layernorm(x + attn, ln_l[0:1, :], ln_l[1:2, :])        # post-LN (RoBERTa)

        # ---- feed-forward ----------------------------------------------------
        ff = jnp.dot(x.astype(jnp.bfloat16), w1,
                     preferred_element_type=jnp.float32) + bf       # (N, F)
        # TODO(synk): RoBERTa uses exact erf GELU; tanh approximation used here.
        ff = jax.nn.gelu(ff, approximate=True)
        ff = jnp.dot(ff.astype(jnp.bfloat16), w2,
                     preferred_element_type=jnp.float32) + bh[4:5, :]  # (N, H)
        x = _layernorm(x + ff, ln_l[2:3, :], ln_l[3:4, :])

    # ---- mean pooling over tokens -> sentence embeddings (single store) -----
    pooled = jnp.mean(x.reshape(n_sent, seq_len, hidden), axis=1)   # (B, H)
    out_ref[...] = pooled


def sentence_features(token_ids, params):
    """token_ids: [B, S] int32 pre-tokenized sentences.
    Returns [B, H] float32 pooled sentence embeddings."""
    emb, w_attn, w1, w2, bias_h, bias_f, ln = params
    b_, s_ = token_ids.shape
    tok = token_ids.reshape(b_ * s_, 1).astype(jnp.int32)

    kernel = functools.partial(encoder_kernel, n_layers=L, n_heads=NH,
                               head_dim=HD, n_sent=b_, seq_len=s_)

    def full(shp):
        return pl.BlockSpec(shp, lambda i: (0,) * len(shp))

    out = pl.pallas_call(
        kernel,
        out_shape=jax.ShapeDtypeStruct((b_, H), jnp.float32),
        grid_spec=pltpu.PrefetchScalarGridSpec(
            num_scalar_prefetch=0,
            grid=(1,),                               # single block: whole batch folded
            in_specs=[
                full(tok.shape), full(emb.shape), full(w_attn.shape),
                full(w1.shape), full(w2.shape), full(bias_h.shape),
                full(bias_f.shape), full(ln.shape),
            ],
            out_specs=full((b_, H)),
        ),
        compiler_params=pltpu.CompilerParams(
            dimension_semantics=("arbitrary",)),
    )(tok, emb, w_attn, w1, w2, bias_h, bias_f, ln)
    return out


def init_params(key):
    ks = jax.random.split(key, 4)
    sd = 0.02
    emb = (sd * jax.random.normal(ks[0], (VOCAB, H), jnp.float32)).astype(jnp.bfloat16)
    # Wq / Wk / Wv / Wo packed only along LEADING dims -> lane-aligned loads.
    w_attn = (sd * jax.random.normal(ks[1], (L, 4, H, H), jnp.float32)).astype(jnp.bfloat16)
    w1 = (sd * jax.random.normal(ks[2], (L, H, F), jnp.float32)).astype(jnp.bfloat16)
    w2 = (sd * jax.random.normal(ks[3], (L, F, H), jnp.float32)).astype(jnp.bfloat16)
    bias_h = jnp.zeros((L, 5, H), jnp.float32)        # rows: [bq, bk, bv, bo, b2]
    bias_f = jnp.zeros((L, 1, F), jnp.float32)        # b1
    ln = jnp.concatenate(                             # rows: [g1, be1, g2, be2]
        [jnp.ones((L, 1, H)), jnp.zeros((L, 1, H)),
         jnp.ones((L, 1, H)), jnp.zeros((L, 1, H))], axis=1).astype(jnp.float32)
    return (emb, w_attn, w1, w2, bias_h, bias_f, ln)


if __name__ == "__main__":
    key = jax.random.PRNGKey(0)
    k_tok, k_par = jax.random.split(key, 2)

    # deterministic synthetic "tokenized sentences"
    token_ids = jax.random.randint(k_tok, (B, S), 0, VOCAB, dtype=jnp.int32)
    params = init_params(k_par)

    out = sentence_features(token_ids, params)      # [B, H]
    jax.block_until_ready(out)
    assert out.shape == (B, H) and out.dtype == jnp.float32
    assert bool(jnp.all(jnp.isfinite(out)))
    print("KERNEL_OK")
</pallas_src>

<mosaic_0001>
module attributes {stable_mosaic.version = 11 : i64} {
  func.func @encoder_kernel(%arg0: i32, %arg1: memref<16x1xi32, #tpu.memory_space<vmem>>, %arg2: memref<128x32xbf16, #tpu.memory_space<vmem>>, %arg3: memref<2x4x32x32xbf16, #tpu.memory_space<vmem>>, %arg4: memref<2x32x64xbf16, #tpu.memory_space<vmem>>, %arg5: memref<2x64x32xbf16, #tpu.memory_space<vmem>>, %arg6: memref<2x5x32xf32, #tpu.memory_space<vmem>>, %arg7: memref<2x1x64xf32, #tpu.memory_space<vmem>>, %arg8: memref<2x4x32xf32, #tpu.memory_space<vmem>>, %arg9: memref<2x32xf32, #tpu.memory_space<vmem>>) attributes {dimension_semantics = [#tpu.dimension_semantics<arbitrary>], iteration_bounds = array<i64: 1>, scalar_prefetch = 0 : i64, scratch_operands = 0 : i64, tpu.core_type = #tpu.core_type<tc>, window_params = [{pipeline_mode = #tpu.pipeline_mode<synchronous>, transform_indices = @transform_0, window_bounds = array<i64: 16, 1>}, {pipeline_mode = #tpu.pipeline_mode<synchronous>, transform_indices = @transform_1, window_bounds = array<i64: 128, 32>}, {pipeline_mode = #tpu.pipeline_mode<synchronous>, transform_indices = @transform_2, window_bounds = array<i64: 2, 4, 32, 32>}, {pipeline_mode = #tpu.pipeline_mode<synchronous>, transform_indices = @transform_3, window_bounds = array<i64: 2, 32, 64>}, {pipeline_mode = #tpu.pipeline_mode<synchronous>, transform_indices = @transform_4, window_bounds = array<i64: 2, 64, 32>}, {pipeline_mode = #tpu.pipeline_mode<synchronous>, transform_indices = @transform_5, window_bounds = array<i64: 2, 5, 32>}, {pipeline_mode = #tpu.pipeline_mode<synchronous>, transform_indices = @transform_6, window_bounds = array<i64: 2, 1, 64>}, {pipeline_mode = #tpu.pipeline_mode<synchronous>, transform_indices = @transform_7, window_bounds = array<i64: 2, 4, 32>}, {pipeline_mode = #tpu.pipeline_mode<synchronous>, transform_indices = @transform_8, window_bounds = array<i64: 2, 32>}]} {
    %c0 = arith.constant 0 : index
    %c0_0 = arith.constant 0 : index
    %0 = vector.load %arg1[%c0, %c0_0] : memref<16x1xi32, #tpu.memory_space<vmem>>, vector<16x1xi32>
    %1 = tpu.iota {dimensions = array<i32: 1>} : vector<16x128xi32>
    %2 = vector.broadcast %0 : vector<16x1xi32> to vector<16x128xi32>
    %3 = arith.cmpi eq, %1, %2 : vector<16x128xi32>
    %4 = arith.extui %3 : vector<16x128xi1> to vector<16x128xi32>
    %5 = arith.sitofp %4 : vector<16x128xi32> to vector<16x128xf32>
    %6 = arith.truncf %5 : vector<16x128xf32> to vector<16x128xbf16>
    %c0_1 = arith.constant 0 : index
    %c0_2 = arith.constant 0 : index
    %7 = vector.load %arg2[%c0_1, %c0_2] : memref<128x32xbf16, #tpu.memory_space<vmem>>, vector<128x32xbf16>
    %cst = arith.constant dense<0.000000e+00> : vector<16x32xf32>
    %8 = tpu.matmul %6, %7, %cst {dimension_numbers = #tpu.dot_dimension_numbers<[1], [0], [0], [1], [0, 0, 1, 1], [], []>} : vector<16x128xbf16>, vector<128x32xbf16>, vector<16x32xf32> -> vector<16x32xf32>
    %c0_3 = arith.constant 0 : index
    %c0_4 = arith.constant 0 : index
    %c0_5 = arith.constant 0 : index
    %c0_6 = arith.constant 0 : index
    %9 = vector.load %arg3[%c0_3, %c0_4, %c0_5, %c0_6] : memref<2x4x32x32xbf16, #tpu.memory_space<vmem>>, vector<1x1x32x32xbf16>
    %10 = vector.shape_cast %9 : vector<1x1x32x32xbf16> to vector<32x32xbf16>
    %c0_7 = arith.constant 0 : index
    %c1 = arith.constant 1 : index
    %c0_8 = arith.constant 0 : index
    %c0_9 = arith.constant 0 : index
    %11 = vector.load %arg3[%c0_7, %c1, %c0_8, %c0_9] : memref<2x4x32x32xbf16, #tpu.memory_space<vmem>>, vector<1x1x32x32xbf16>
    %12 = vector.shape_cast %11 : vector<1x1x32x32xbf16> to vector<32x32xbf16>
    %c0_10 = arith.constant 0 : index
    %c2 = arith.constant 2 : index
    %c0_11 = arith.constant 0 : index
    %c0_12 = arith.constant 0 : index
    %13 = vector.load %arg3[%c0_10, %c2, %c0_11, %c0_12] : memref<2x4x32x32xbf16, #tpu.memory_space<vmem>>, vector<1x1x32x32xbf16>
    %14 = vector.shape_cast %13 : vector<1x1x32x32xbf16> to vector<32x32xbf16>
    %c0_13 = arith.constant 0 : index
    %c3 = arith.constant 3 : index
    %c0_14 = arith.constant 0 : index
    %c0_15 = arith.constant 0 : index
    %15 = vector.load %arg3[%c0_13, %c3, %c0_14, %c0_15] : memref<2x4x32x32xbf16, #tpu.memory_space<vmem>>, vector<1x1x32x32xbf16>
    %16 = vector.shape_cast %15 : vector<1x1x32x32xbf16> to vector<32x32xbf16>
    %c0_16 = arith.constant 0 : index
    %c0_17 = arith.constant 0 : index
    %c0_18 = arith.constant 0 : index
    %17 = vector.load %arg4[%c0_16, %c0_17, %c0_18] : memref<2x32x64xbf16, #tpu.memory_space<vmem>>, vector<1x32x64xbf16>
    %18 = vector.shape_cast %17 : vector<1x32x64xbf16> to vector<32x64xbf16>
    %c0_19 = arith.constant 0 : index
    %c0_20 = arith.constant 0 : index
    %c0_21 = arith.constant 0 : index
    %19 = vector.load %arg5[%c0_19, %c0_20, %c0_21] : memref<2x64x32xbf16, #tpu.memory_space<vmem>>, vector<1x64x32xbf16>
    %20 = vector.shape_cast %19 : vector<1x64x32xbf16> to vector<64x32xbf16>
    %c0_22 = arith.constant 0 : index
    %c0_23 = arith.constant 0 : index
    %c0_24 = arith.constant 0 : index
    %21 = vector.load %arg6[%c0_22, %c0_23, %c0_24] : memref<2x5x32xf32, #tpu.memory_space<vmem>>, vector<1x5x32xf32>
    %22 = vector.shape_cast %21 : vector<1x5x32xf32> to vector<5x32xf32>
    %c0_25 = arith.constant 0 : index
    %c0_26 = arith.constant 0 : index
    %c0_27 = arith.constant 0 : index
    %23 = vector.load %arg7[%c0_25, %c0_26, %c0_27] : memref<2x1x64xf32, #tpu.memory_space<vmem>>, vector<1x1x64xf32>
    %24 = vector.shape_cast %23 : vector<1x1x64xf32> to vector<1x64xf32>
    %c0_28 = arith.constant 0 : index
    %c0_29 = arith.constant 0 : index
    %c0_30 = arith.constant 0 : index
    %25 = vector.load %arg8[%c0_28, %c0_29, %c0_30] : memref<2x4x32xf32, #tpu.memory_space<vmem>>, vector<1x4x32xf32>
    %26 = vector.shape_cast %25 : vector<1x4x32xf32> to vector<4x32xf32>
    %27 = arith.truncf %8 : vector<16x32xf32> to vector<16x32xbf16>
    %cst_31 = arith.constant dense<0.000000e+00> : vector<16x32xf32>
    %28 = tpu.matmul %27, %10, %cst_31 {dimension_numbers = #tpu.dot_dimension_numbers<[1], [0], [0], [1], [0, 0, 1, 1], [], []>} : vector<16x32xbf16>, vector<32x32xbf16>, vector<16x32xf32> -> vector<16x32xf32>
    %29 = vector.extract_strided_slice %22 {offsets = [0, 0], sizes = [1, 32], strides = [1, 1]} : vector<5x32xf32> to vector<1x32xf32>
    %30 = vector.broadcast %29 : vector<1x32xf32> to vector<16x32xf32>
    %31 = arith.addf %28, %30 : vector<16x32xf32>
    %cst_32 = arith.constant dense<0.000000e+00> : vector<16x32xf32>
    %32 = tpu.matmul %27, %12, %cst_32 {dimension_numbers = #tpu.dot_dimension_numbers<[1], [0], [0], [1], [0, 0, 1, 1], [], []>} : vector<16x32xbf16>, vector<32x32xbf16>, vector<16x32xf32> -> vector<16x32xf32>
    %33 = vector.extract_strided_slice %22 {offsets = [1, 0], sizes = [1, 32], strides = [1, 1]} : vector<5x32xf32> to vector<1x32xf32>
    %34 = vector.broadcast %33 : vector<1x32xf32> to vector<16x32xf32>
    %35 = arith.addf %32, %34 : vector<16x32xf32>
    %cst_33 = arith.constant dense<0.000000e+00> : vector<16x32xf32>
    %36 = tpu.matmul %27, %14, %cst_33 {dimension_numbers = #tpu.dot_dimension_numbers<[1], [0], [0], [1], [0, 0, 1, 1], [], []>} : vector<16x32xbf16>, vector<32x32xbf16>, vector<16x32xf32> -> vector<16x32xf32>
    %37 = vector.extract_strided_slice %22 {offsets = [2, 0], sizes = [1, 32], strides = [1, 1]} : vector<5x32xf32> to vector<1x32xf32>
    %38 = vector.broadcast %37 : vector<1x32xf32> to vector<16x32xf32>
    %39 = arith.addf %36, %38 : vector<16x32xf32>
    %cst_34 = arith.constant 0.353553385 : f32
    %40 = vector.broadcast %cst_34 : f32 to vector<16x32xf32>
    %41 = arith.mulf %31, %40 : vector<16x32xf32>
    %42 = vector.shape_cast %41 : vector<16x32xf32> to vector<2x8x32xf32>
    %43 = vector.shape_cast %35 : vector<16x32xf32> to vector<2x8x32xf32>
    %44 = vector.shape_cast %39 : vector<16x32xf32> to vector<2x8x32xf32>
    %45 = vector.extract_strided_slice %42 {offsets = [0, 0, 0], sizes = [2, 8, 8], strides = [1, 1, 1]} : vector<2x8x32xf32> to vector<2x8x8xf32>
    %46 = vector.extract_strided_slice %42 {offsets = [0, 0, 8], sizes = [2, 8, 8], strides = [1, 1, 1]} : vector<2x8x32xf32> to vector<2x8x8xf32>
    %47 = vector.extract_strided_slice %42 {offsets = [0, 0, 16], sizes = [2, 8, 8], strides = [1, 1, 1]} : vector<2x8x32xf32> to vector<2x8x8xf32>
    %48 = vector.extract_strided_slice %42 {offsets = [0, 0, 24], sizes = [2, 8, 8], strides = [1, 1, 1]} : vector<2x8x32xf32> to vector<2x8x8xf32>
    %49 = tpu.concatenate %45, %46, %47, %48 in 0 : vector<2x8x8xf32>, vector<2x8x8xf32>, vector<2x8x8xf32>, vector<2x8x8xf32> -> vector<8x8x8xf32>
    %50 = arith.truncf %49 : vector<8x8x8xf32> to vector<8x8x8xbf16>
    %51 = vector.extract_strided_slice %43 {offsets = [0, 0, 0], sizes = [2, 8, 8], strides = [1, 1, 1]} : vector<2x8x32xf32> to vector<2x8x8xf32>
    %52 = vector.extract_strided_slice %43 {offsets = [0, 0, 8], sizes = [2, 8, 8], strides = [1, 1, 1]} : vector<2x8x32xf32> to vector<2x8x8xf32>
    %53 = vector.extract_strided_slice %43 {offsets = [0, 0, 16], sizes = [2, 8, 8], strides = [1, 1, 1]} : vector<2x8x32xf32> to vector<2x8x8xf32>
    %54 = vector.extract_strided_slice %43 {offsets = [0, 0, 24], sizes = [2, 8, 8], strides = [1, 1, 1]} : vector<2x8x32xf32> to vector<2x8x8xf32>
    %55 = tpu.concatenate %51, %52, %53, %54 in 0 : vector<2x8x8xf32>, vector<2x8x8xf32>, vector<2x8x8xf32>, vector<2x8x8xf32> -> vector<8x8x8xf32>
    %56 = arith.truncf %55 : vector<8x8x8xf32> to vector<8x8x8xbf16>
    %57 = vector.extract_strided_slice %44 {offsets = [0, 0, 0], sizes = [2, 8, 8], strides = [1, 1, 1]} : vector<2x8x32xf32> to vector<2x8x8xf32>
    %58 = vector.extract_strided_slice %44 {offsets = [0, 0, 8], sizes = [2, 8, 8], strides = [1, 1, 1]} : vector<2x8x32xf32> to vector<2x8x8xf32>
    %59 = vector.extract_strided_slice %44 {offsets = [0, 0, 16], sizes = [2, 8, 8], strides = [1, 1, 1]} : vector<2x8x32xf32> to vector<2x8x8xf32>
    %60 = vector.extract_strided_slice %44 {offsets = [0, 0, 24], sizes = [2, 8, 8], strides = [1, 1, 1]} : vector<2x8x32xf32> to vector<2x8x8xf32>
    %61 = tpu.concatenate %57, %58, %59, %60 in 0 : vector<2x8x8xf32>, vector<2x8x8xf32>, vector<2x8x8xf32>, vector<2x8x8xf32> -> vector<8x8x8xf32>
    %62 = arith.truncf %61 : vector<8x8x8xf32> to vector<8x8x8xbf16>
    "tpu.trace_start"() <{level = 10 : i32, message = "bqd,bkd->bqk"}> : () -> ()
    %cst_35 = arith.constant dense<0.000000e+00> : vector<8x8x8xf32>
    %63 = tpu.matmul %50, %56, %cst_35 {dimension_numbers = #tpu.dot_dimension_numbers<[2], [2], [1], [1], [0, 0, 0, 1, 1, 1], [0], [0]>} : vector<8x8x8xbf16>, vector<8x8x8xbf16>, vector<8x8x8xf32> -> vector<8x8x8xf32>
    "tpu.trace_stop"() : () -> ()
    %cst_36 = arith.constant dense<0xFF800000> : vector<8x8xf32>
    %64 = vector.multi_reduction <maximumf>, %63, %cst_36 [2] : vector<8x8x8xf32> to vector<8x8xf32>
    %65 = vector.shape_cast %64 : vector<8x8xf32> to vector<8x8x1xf32>
    %66 = vector.broadcast %65 : vector<8x8x1xf32> to vector<8x8x8xf32>
    %67 = arith.subf %63, %66 : vector<8x8x8xf32>
    %68 = math.exp %67 : vector<8x8x8xf32>
    %cst_37 = arith.constant dense<0.000000e+00> : vector<8x8xf32>
    %69 = vector.multi_reduction <add>, %68, %cst_37 [2] : vector<8x8x8xf32> to vector<8x8xf32>
    %70 = vector.shape_cast %69 : vector<8x8xf32> to vector<8x8x1xf32>
    %71 = tpu.reciprocal %70 {approx = true} : vector<8x8x1xf32> -> vector<8x8x1xf32>
    %72 = vector.broadcast %71 : vector<8x8x1xf32> to vector<8x8x8xf32>
    %73 = arith.mulf %68, %72 : vector<8x8x8xf32>
    %74 = arith.truncf %73 : vector<8x8x8xf32> to vector<8x8x8xbf16>
    "tpu.trace_start"() <{level = 10 : i32, message = "bqk,bkd->bqd"}> : () -> ()
    %cst_38 = arith.constant dense<0.000000e+00> : vector<8x8x8xf32>
    %75 = tpu.matmul %74, %62, %cst_38 {dimension_numbers = #tpu.dot_dimension_numbers<[2], [1], [1], [2], [0, 0, 0, 1, 1, 2], [0], [0]>} : vector<8x8x8xbf16>, vector<8x8x8xbf16>, vector<8x8x8xf32> -> vector<8x8x8xf32>
    "tpu.trace_stop"() : () -> ()
    %76 = vector.extract_strided_slice %75 {offsets = [0, 0, 0], sizes = [2, 8, 8], strides = [1, 1, 1]} : vector<8x8x8xf32> to vector<2x8x8xf32>
    %77 = vector.extract_strided_slice %75 {offsets = [2, 0, 0], sizes = [2, 8, 8], strides = [1, 1, 1]} : vector<8x8x8xf32> to vector<2x8x8xf32>
    %78 = vector.extract_strided_slice %75 {offsets = [4, 0, 0], sizes = [2, 8, 8], strides = [1, 1, 1]} : vector<8x8x8xf32> to vector<2x8x8xf32>
    %79 = vector.extract_strided_slice %75 {offsets = [6, 0, 0], sizes = [2, 8, 8], strides = [1, 1, 1]} : vector<8x8x8xf32> to vector<2x8x8xf32>
    %80 = tpu.concatenate %76, %77, %78, %79 in 2 : vector<2x8x8xf32>, vector<2x8x8xf32>, vector<2x8x8xf32>, vector<2x8x8xf32> -> vector<2x8x32xf32>
    %81 = vector.shape_cast %80 : vector<2x8x32xf32> to vector<16x32xf32>
    %82 = arith.truncf %81 : vector<16x32xf32> to vector<16x32xbf16>
    %cst_39 = arith.constant dense<0.000000e+00> : vector<16x32xf32>
    %83 = tpu.matmul %82, %16, %cst_39 {dimension_numbers = #tpu.dot_dimension_numbers<[1], [0], [0], [1], [0, 0, 1, 1], [], []>} : vector<16x32xbf16>, vector<32x32xbf16>, vector<16x32xf32> -> vector<16x32xf32>
    %84 = vector.extract_strided_slice %22 {offsets = [3, 0], sizes = [1, 32], strides = [1, 1]} : vector<5x32xf32> to vector<1x32xf32>
    %85 = vector.broadcast %84 : vector<1x32xf32> to vector<16x32xf32>
    %86 = arith.addf %83, %85 : vector<16x32xf32>
    %87 = arith.addf %8, %86 : vector<16x32xf32>
    %88 = vector.extract_strided_slice %26 {offsets = [0, 0], sizes = [1, 32], strides = [1, 1]} : vector<4x32xf32> to vector<1x32xf32>
    %89 = vector.extract_strided_slice %26 {offsets = [1, 0], sizes = [1, 32], strides = [1, 1]} : vector<4x32xf32> to vector<1x32xf32>
    %cst_40 = arith.constant dense<0.000000e+00> : vector<16xf32>
    %90 = vector.multi_reduction <add>, %87, %cst_40 [1] : vector<16x32xf32> to vector<16xf32>
    %91 = vector.shape_cast %90 : vector<16xf32> to vector<16x1xf32>
    %cst_41 = arith.constant 3.200000e+01 : f32
    %92 = vector.broadcast %cst_41 : f32 to vector<16x1xf32>
    %93 = arith.divf %91, %92 : vector<16x1xf32>
    %94 = arith.mulf %87, %87 : vector<16x32xf32>
    %cst_42 = arith.constant dense<0.000000e+00> : vector<16xf32>
    %95 = vector.multi_reduction <add>, %94, %cst_42 [1] : vector<16x32xf32> to vector<16xf32>
    %96 = vector.shape_cast %95 : vector<16xf32> to vector<16x1xf32>
    %cst_43 = arith.constant 3.200000e+01 : f32
    %97 = vector.broadcast %cst_43 : f32 to vector<16x1xf32>
    %98 = arith.divf %96, %97 : vector<16x1xf32>
    %99 = arith.mulf %93, %93 : vector<16x1xf32>
    %100 = arith.subf %98, %99 : vector<16x1xf32>
    %101 = vector.broadcast %93 : vector<16x1xf32> to vector<16x32xf32>
    %102 = arith.subf %87, %101 : vector<16x32xf32>
    %cst_44 = arith.constant 9.99999974E-6 : f32
    %103 = vector.broadcast %cst_44 : f32 to vector<16x1xf32>
    %104 = arith.addf %100, %103 : vector<16x1xf32>
    %105 = math.rsqrt %104 : vector<16x1xf32>
    %106 = vector.broadcast %105 : vector<16x1xf32> to vector<16x32xf32>
    %107 = arith.mulf %102, %106 : vector<16x32xf32>
    %108 = vector.broadcast %88 : vector<1x32xf32> to vector<16x32xf32>
    %109 = arith.mulf %107, %108 : vector<16x32xf32>
    %110 = vector.broadcast %89 : vector<1x32xf32> to vector<16x32xf32>
    %111 = arith.addf %109, %110 : vector<16x32xf32>
    %112 = arith.truncf %111 : vector<16x32xf32> to vector<16x32xbf16>
    %cst_45 = arith.constant dense<0.000000e+00> : vector<16x64xf32>
    %113 = tpu.matmul %112, %18, %cst_45 {dimension_numbers = #tpu.dot_dimension_numbers<[1], [0], [0], [1], [0, 0, 1, 1], [], []>} : vector<16x32xbf16>, vector<32x64xbf16>, vector<16x64xf32> -> vector<16x64xf32>
    %114 = vector.broadcast %24 : vector<1x64xf32> to vector<16x64xf32>
    %115 = arith.addf %113, %114 : vector<16x64xf32>
    %116 = arith.mulf %115, %115 : vector<16x64xf32>
    %117 = arith.mulf %115, %116 : vector<16x64xf32>
    %cst_46 = arith.constant 4.471500e-02 : f32
    %118 = vector.broadcast %cst_46 : f32 to vector<16x64xf32>
    %119 = arith.mulf %118, %117 : vector<16x64xf32>
    %120 = arith.addf %115, %119 : vector<16x64xf32>
    %cst_47 = arith.constant 0.797884583 : f32
    %121 = vector.broadcast %cst_47 : f32 to vector<16x64xf32>
    %122 = arith.mulf %121, %120 : vector<16x64xf32>
    %123 = math.tanh %122 : vector<16x64xf32>
    %cst_48 = arith.constant 1.000000e+00 : f32
    %124 = vector.broadcast %cst_48 : f32 to vector<16x64xf32>
    %125 = arith.addf %124, %123 : vector<16x64xf32>
    %cst_49 = arith.constant 5.000000e-01 : f32
    %126 = vector.broadcast %cst_49 : f32 to vector<16x64xf32>
    %127 = arith.mulf %126, %125 : vector<16x64xf32>
    %128 = arith.mulf %115, %127 : vector<16x64xf32>
    %129 = arith.truncf %128 : vector<16x64xf32> to vector<16x64xbf16>
    %cst_50 = arith.constant dense<0.000000e+00> : vector<16x32xf32>
    %130 = tpu.matmul %129, %20, %cst_50 {dimension_numbers = #tpu.dot_dimension_numbers<[1], [0], [0], [1], [0, 0, 1, 1], [], []>} : vector<16x64xbf16>, vector<64x32xbf16>, vector<16x32xf32> -> vector<16x32xf32>
    %131 = vector.extract_strided_slice %22 {offsets = [4, 0], sizes = [1, 32], strides = [1, 1]} : vector<5x32xf32> to vector<1x32xf32>
    %132 = vector.broadcast %131 : vector<1x32xf32> to vector<16x32xf32>
    %133 = arith.addf %130, %132 : vector<16x32xf32>
    %134 = arith.addf %111, %133 : vector<16x32xf32>
    %135 = vector.extract_strided_slice %26 {offsets = [2, 0], sizes = [1, 32], strides = [1, 1]} : vector<4x32xf32> to vector<1x32xf32>
    %136 = vector.extract_strided_slice %26 {offsets = [3, 0], sizes = [1, 32], strides = [1, 1]} : vector<4x32xf32> to vector<1x32xf32>
    %cst_51 = arith.constant dense<0.000000e+00> : vector<16xf32>
    %137 = vector.multi_reduction <add>, %134, %cst_51 [1] : vector<16x32xf32> to vector<16xf32>
    %138 = vector.shape_cast %137 : vector<16xf32> to vector<16x1xf32>
    %cst_52 = arith.constant 3.200000e+01 : f32
    %139 = vector.broadcast %cst_52 : f32 to vector<16x1xf32>
    %140 = arith.divf %138, %139 : vector<16x1xf32>
    %141 = arith.mulf %134, %134 : vector<16x32xf32>
    %cst_53 = arith.constant dense<0.000000e+00> : vector<16xf32>
    %142 = vector.multi_reduction <add>, %141, %cst_53 [1] : vector<16x32xf32> to vector<16xf32>
    %143 = vector.shape_cast %142 : vector<16xf32> to vector<16x1xf32>
    %cst_54 = arith.constant 3.200000e+01 : f32
    %144 = vector.broadcast %cst_54 : f32 to vector<16x1xf32>
    %145 = arith.divf %143, %144 : vector<16x1xf32>
    %146 = arith.mulf %140, %140 : vector<16x1xf32>
    %147 = arith.subf %145, %146 : vector<16x1xf32>
    %148 = vector.broadcast %140 : vector<16x1xf32> to vector<16x32xf32>
    %149 = arith.subf %134, %148 : vector<16x32xf32>
    %cst_55 = arith.constant 9.99999974E-6 : f32
    %150 = vector.broadcast %cst_55 : f32 to vector<16x1xf32>
    %151 = arith.addf %147, %150 : vector<16x1xf32>
    %152 = math.rsqrt %151 : vector<16x1xf32>
    %153 = vector.broadcast %152 : vector<16x1xf32> to vector<16x32xf32>
    %154 = arith.mulf %149, %153 : vector<16x32xf32>
    %155 = vector.broadcast %135 : vector<1x32xf32> to vector<16x32xf32>
    %156 = arith.mulf %154, %155 : vector<16x32xf32>
    %157 = vector.broadcast %136 : vector<1x32xf32> to vector<16x32xf32>
    %158 = arith.addf %156, %157 : vector<16x32xf32>
    %c1_56 = arith.constant 1 : index
    %c0_57 = arith.constant 0 : index
    %c0_58 = arith.constant 0 : index
    %c0_59 = arith.constant 0 : index
    %159 = vector.load %arg3[%c1_56, %c0_57, %c0_58, %c0_59] : memref<2x4x32x32xbf16, #tpu.memory_space<vmem>>, vector<1x1x32x32xbf16>
    %160 = vector.shape_cast %159 : vector<1x1x32x32xbf16> to vector<32x32xbf16>
    %c1_60 = arith.constant 1 : index
    %c1_61 = arith.constant 1 : index
    %c0_62 = arith.constant 0 : index
    %c0_63 = arith.constant 0 : index
    %161 = vector.load %arg3[%c1_60, %c1_61, %c0_62, %c0_63] : memref<2x4x32x32xbf16, #tpu.memory_space<vmem>>, vector<1x1x32x32xbf16>
    %162 = vector.shape_cast %161 : vector<1x1x32x32xbf16> to vector<32x32xbf16>
    %c1_64 = arith.constant 1 : index
    %c2_65 = arith.constant 2 : index
    %c0_66 = arith.constant 0 : index
    %c0_67 = arith.constant 0 : index
    %163 = vector.load %arg3[%c1_64, %c2_65, %c0_66, %c0_67] : memref<2x4x32x32xbf16, #tpu.memory_space<vmem>>, vector<1x1x32x32xbf16>
    %164 = vector.shape_cast %163 : vector<1x1x32x32xbf16> to vector<32x32xbf16>
    %c1_68 = arith.constant 1 : index
    %c3_69 = arith.constant 3 : index
    %c0_70 = arith.constant 0 : index
    %c0_71 = arith.constant 0 : index
    %165 = vector.load %arg3[%c1_68, %c3_69, %c0_70, %c0_71] : memref<2x4x32x32xbf16, #tpu.memory_space<vmem>>, vector<1x1x32x32xbf16>
    %166 = vector.shape_cast %165 : vector<1x1x32x32xbf16> to vector<32x32xbf16>
    %c1_72 = arith.constant 1 : index
    %c0_73 = arith.constant 0 : index
    %c0_74 = arith.constant 0 : index
    %167 = vector.load %arg4[%c1_72, %c0_73, %c0_74] : memref<2x32x64xbf16, #tpu.memory_space<vmem>>, vector<1x32x64xbf16>
    %168 = vector.shape_cast %167 : vector<1x32x64xbf16> to vector<32x64xbf16>
    %c1_75 = arith.constant 1 : index
    %c0_76 = arith.constant 0 : index
    %c0_77 = arith.constant 0 : index
    %169 = vector.load %arg5[%c1_75, %c0_76, %c0_77] : memref<2x64x32xbf16, #tpu.memory_space<vmem>>, vector<1x64x32xbf16>
    %170 = vector.shape_cast %169 : vector<1x64x32xbf16> to vector<64x32xbf16>
    %c1_78 = arith.constant 1 : index
    %c0_79 = arith.constant 0 : index
    %c0_80 = arith.constant 0 : index
    %171 = vector.load %arg6[%c1_78, %c0_79, %c0_80] : memref<2x5x32xf32, #tpu.memory_space<vmem>>, vector<1x5x32xf32>
    %172 = vector.shape_cast %171 : vector<1x5x32xf32> to vector<5x32xf32>
    %c1_81 = arith.constant 1 : index
    %c0_82 = arith.constant 0 : index
    %c0_83 = arith.constant 0 : index
    %173 = vector.load %arg7[%c1_81, %c0_82, %c0_83] : memref<2x1x64xf32, #tpu.memory_space<vmem>>, vector<1x1x64xf32>
    %174 = vector.shape_cast %173 : vector<1x1x64xf32> to vector<1x64xf32>
    %c1_84 = arith.constant 1 : index
    %c0_85 = arith.constant 0 : index
    %c0_86 = arith.constant 0 : index
    %175 = vector.load %arg8[%c1_84, %c0_85, %c0_86] : memref<2x4x32xf32, #tpu.memory_space<vmem>>, vector<1x4x32xf32>
    %176 = vector.shape_cast %175 : vector<1x4x32xf32> to vector<4x32xf32>
    %177 = arith.truncf %158 : vector<16x32xf32> to vector<16x32xbf16>
    %cst_87 = arith.constant dense<0.000000e+00> : vector<16x32xf32>
    %178 = tpu.matmul %177, %160, %cst_87 {dimension_numbers = #tpu.dot_dimension_numbers<[1], [0], [0], [1], [0, 0, 1, 1], [], []>} : vector<16x32xbf16>, vector<32x32xbf16>, vector<16x32xf32> -> vector<16x32xf32>
    %179 = vector.extract_strided_slice %172 {offsets = [0, 0], sizes = [1, 32], strides = [1, 1]} : vector<5x32xf32> to vector<1x32xf32>
    %180 = vector.broadcast %179 : vector<1x32xf32> to vector<16x32xf32>
    %181 = arith.addf %178, %180 : vector<16x32xf32>
    %cst_88 = arith.constant dense<0.000000e+00> : vector<16x32xf32>
    %182 = tpu.matmul %177, %162, %cst_88 {dimension_numbers = #tpu.dot_dimension_numbers<[1], [0], [0], [1], [0, 0, 1, 1], [], []>} : vector<16x32xbf16>, vector<32x32xbf16>, vector<16x32xf32> -> vector<16x32xf32>
    %183 = vector.extract_strided_slice %172 {offsets = [1, 0], sizes = [1, 32], strides = [1, 1]} : vector<5x32xf32> to vector<1x32xf32>
    %184 = vector.broadcast %183 : vector<1x32xf32> to vector<16x32xf32>
    %185 = arith.addf %182, %184 : vector<16x32xf32>
    %cst_89 = arith.constant dense<0.000000e+00> : vector<16x32xf32>
    %186 = tpu.matmul %177, %164, %cst_89 {dimension_numbers = #tpu.dot_dimension_numbers<[1], [0], [0], [1], [0, 0, 1, 1], [], []>} : vector<16x32xbf16>, vector<32x32xbf16>, vector<16x32xf32> -> vector<16x32xf32>
    %187 = vector.extract_strided_slice %172 {offsets = [2, 0], sizes = [1, 32], strides = [1, 1]} : vector<5x32xf32> to vector<1x32xf32>
    %188 = vector.broadcast %187 : vector<1x32xf32> to vector<16x32xf32>
    %189 = arith.addf %186, %188 : vector<16x32xf32>
    %cst_90 = arith.constant 0.353553385 : f32
    %190 = vector.broadcast %cst_90 : f32 to vector<16x32xf32>
    %191 = arith.mulf %181, %190 : vector<16x32xf32>
    %192 = vector.shape_cast %191 : vector<16x32xf32> to vector<2x8x32xf32>
    %193 = vector.shape_cast %185 : vector<16x32xf32> to vector<2x8x32xf32>
    %194 = vector.shape_cast %189 : vector<16x32xf32> to vector<2x8x32xf32>
    %195 = vector.extract_strided_slice %192 {offsets = [0, 0, 0], sizes = [2, 8, 8], strides = [1, 1, 1]} : vector<2x8x32xf32> to vector<2x8x8xf32>
    %196 = vector.extract_strided_slice %192 {offsets = [0, 0, 8], sizes = [2, 8, 8], strides = [1, 1, 1]} : vector<2x8x32xf32> to vector<2x8x8xf32>
    %197 = vector.extract_strided_slice %192 {offsets = [0, 0, 16], sizes = [2, 8, 8], strides = [1, 1, 1]} : vector<2x8x32xf32> to vector<2x8x8xf32>
    %198 = vector.extract_strided_slice %192 {offsets = [0, 0, 24], sizes = [2, 8, 8], strides = [1, 1, 1]} : vector<2x8x32xf32> to vector<2x8x8xf32>
    %199 = tpu.concatenate %195, %196, %197, %198 in 0 : vector<2x8x8xf32>, vector<2x8x8xf32>, vector<2x8x8xf32>, vector<2x8x8xf32> -> vector<8x8x8xf32>
    %200 = arith.truncf %199 : vector<8x8x8xf32> to vector<8x8x8xbf16>
    %201 = vector.extract_strided_slice %193 {offsets = [0, 0, 0], sizes = [2, 8, 8], strides = [1, 1, 1]} : vector<2x8x32xf32> to vector<2x8x8xf32>
    %202 = vector.extract_strided_slice %193 {offsets = [0, 0, 8], sizes = [2, 8, 8], strides = [1, 1, 1]} : vector<2x8x32xf32> to vector<2x8x8xf32>
    %203 = vector.extract_strided_slice %193 {offsets = [0, 0, 16], sizes = [2, 8, 8], strides = [1, 1, 1]} : vector<2x8x32xf32> to vector<2x8x8xf32>
    %204 = vector.extract_strided_slice %193 {offsets = [0, 0, 24], sizes = [2, 8, 8], strides = [1, 1, 1]} : vector<2x8x32xf32> to vector<2x8x8xf32>
    %205 = tpu.concatenate %201, %202, %203, %204 in 0 : vector<2x8x8xf32>, vector<2x8x8xf32>, vector<2x8x8xf32>, vector<2x8x8xf32> -> vector<8x8x8xf32>
    %206 = arith.truncf %205 : vector<8x8x8xf32> to vector<8x8x8xbf16>
    %207 = vector.extract_strided_slice %194 {offsets = [0, 0, 0], sizes = [2, 8, 8], strides = [1, 1, 1]} : vector<2x8x32xf32> to vector<2x8x8xf32>
    %208 = vector.extract_strided_slice %194 {offsets = [0, 0, 8], sizes = [2, 8, 8], strides = [1, 1, 1]} : vector<2x8x32xf32> to vector<2x8x8xf32>
    %209 = vector.extract_strided_slice %194 {offsets = [0, 0, 16], sizes = [2, 8, 8], strides = [1, 1, 1]} : vector<2x8x32xf32> to vector<2x8x8xf32>
    %210 = vector.extract_strided_slice %194 {offsets = [0, 0, 24], sizes = [2, 8, 8], strides = [1, 1, 1]} : vector<2x8x32xf32> to vector<2x8x8xf32>
    %211 = tpu.concatenate %207, %208, %209, %210 in 0 : vector<2x8x8xf32>, vector<2x8x8xf32>, vector<2x8x8xf32>, vector<2x8x8xf32> -> vector<8x8x8xf32>
    %212 = arith.truncf %211 : vector<8x8x8xf32> to vector<8x8x8xbf16>
    "tpu.trace_start"() <{level = 10 : i32, message = "bqd,bkd->bqk"}> : () -> ()
    %cst_91 = arith.constant dense<0.000000e+00> : vector<8x8x8xf32>
    %213 = tpu.matmul %200, %206, %cst_91 {dimension_numbers = #tpu.dot_dimension_numbers<[2], [2], [1], [1], [0, 0, 0, 1, 1, 1], [0], [0]>} : vector<8x8x8xbf16>, vector<8x8x8xbf16>, vector<8x8x8xf32> -> vector<8x8x8xf32>
    "tpu.trace_stop"() : () -> ()
    %cst_92 = arith.constant dense<0xFF800000> : vector<8x8xf32>
    %214 = vector.multi_reduction <maximumf>, %213, %cst_92 [2] : vector<8x8x8xf32> to vector<8x8xf32>
    %215 = vector.shape_cast %214 : vector<8x8xf32> to vector<8x8x1xf32>
    %216 = vector.broadcast %215 : vector<8x8x1xf32> to vector<8x8x8xf32>
    %217 = arith.subf %213, %216 : vector<8x8x8xf32>
    %218 = math.exp %217 : vector<8x8x8xf32>
    %cst_93 = arith.constant dense<0.000000e+00> : vector<8x8xf32>
    %219 = vector.multi_reduction <add>, %218, %cst_93 [2] : vector<8x8x8xf32> to vector<8x8xf32>
    %220 = vector.shape_cast %219 : vector<8x8xf32> to vector<8x8x1xf32>
    %221 = tpu.reciprocal %220 {approx = true} : vector<8x8x1xf32> -> vector<8x8x1xf32>
    %222 = vector.broadcast %221 : vector<8x8x1xf32> to vector<8x8x8xf32>
    %223 = arith.mulf %218, %222 : vector<8x8x8xf32>
    %224 = arith.truncf %223 : vector<8x8x8xf32> to vector<8x8x8xbf16>
    "tpu.trace_start"() <{level = 10 : i32, message = "bqk,bkd->bqd"}> : () -> ()
    %cst_94 = arith.constant dense<0.000000e+00> : vector<8x8x8xf32>
    %225 = tpu.matmul %224, %212, %cst_94 {dimension_numbers = #tpu.dot_dimension_numbers<[2], [1], [1], [2], [0, 0, 0, 1, 1, 2], [0], [0]>} : vector<8x8x8xbf16>, vector<8x8x8xbf16>, vector<8x8x8xf32> -> vector<8x8x8xf32>
    "tpu.trace_stop"() : () -> ()
    %226 = vector.extract_strided_slice %225 {offsets = [0, 0, 0], sizes = [2, 8, 8], strides = [1, 1, 1]} : vector<8x8x8xf32> to vector<2x8x8xf32>
    %227 = vector.extract_strided_slice %225 {offsets = [2, 0, 0], sizes = [2, 8, 8], strides = [1, 1, 1]} : vector<8x8x8xf32> to vector<2x8x8xf32>
    %228 = vector.extract_strided_slice %225 {offsets = [4, 0, 0], sizes = [2, 8, 8], strides = [1, 1, 1]} : vector<8x8x8xf32> to vector<2x8x8xf32>
    %229 = vector.extract_strided_slice %225 {offsets = [6, 0, 0], sizes = [2, 8, 8], strides = [1, 1, 1]} : vector<8x8x8xf32> to vector<2x8x8xf32>
    %230 = tpu.concatenate %226, %227, %228, %229 in 2 : vector<2x8x8xf32>, vector<2x8x8xf32>, vector<2x8x8xf32>, vector<2x8x8xf32> -> vector<2x8x32xf32>
    %231 = vector.shape_cast %230 : vector<2x8x32xf32> to vector<16x32xf32>
    %232 = arith.truncf %231 : vector<16x32xf32> to vector<16x32xbf16>
    %cst_95 = arith.constant dense<0.000000e+00> : vector<16x32xf32>
    %233 = tpu.matmul %232, %166, %cst_95 {dimension_numbers = #tpu.dot_dimension_numbers<[1], [0], [0], [1], [0, 0, 1, 1], [], []>} : vector<16x32xbf16>, vector<32x32xbf16>, vector<16x32xf32> -> vector<16x32xf32>
    %234 = vector.extract_strided_slice %172 {offsets = [3, 0], sizes = [1, 32], strides = [1, 1]} : vector<5x32xf32> to vector<1x32xf32>
    %235 = vector.broadcast %234 : vector<1x32xf32> to vector<16x32xf32>
    %236 = arith.addf %233, %235 : vector<16x32xf32>
    %237 = arith.addf %158, %236 : vector<16x32xf32>
    %238 = vector.extract_strided_slice %176 {offsets = [0, 0], sizes = [1, 32], strides = [1, 1]} : vector<4x32xf32> to vector<1x32xf32>
    %239 = vector.extract_strided_slice %176 {offsets = [1, 0], sizes = [1, 32], strides = [1, 1]} : vector<4x32xf32> to vector<1x32xf32>
    %cst_96 = arith.constant dense<0.000000e+00> : vector<16xf32>
    %240 = vector.multi_reduction <add>, %237, %cst_96 [1] : vector<16x32xf32> to vector<16xf32>
    %241 = vector.shape_cast %240 : vector<16xf32> to vector<16x1xf32>
    %cst_97 = arith.constant 3.200000e+01 : f32
    %242 = vector.broadcast %cst_97 : f32 to vector<16x1xf32>
    %243 = arith.divf %241, %242 : vector<16x1xf32>
    %244 = arith.mulf %237, %237 : vector<16x32xf32>
    %cst_98 = arith.constant dense<0.000000e+00> : vector<16xf32>
    %245 = vector.multi_reduction <add>, %244, %cst_98 [1] : vector<16x32xf32> to vector<16xf32>
    %246 = vector.shape_cast %245 : vector<16xf32> to vector<16x1xf32>
    %cst_99 = arith.constant 3.200000e+01 : f32
    %247 = vector.broadcast %cst_99 : f32 to vector<16x1xf32>
    %248 = arith.divf %246, %247 : vector<16x1xf32>
    %249 = arith.mulf %243, %243 : vector<16x1xf32>
    %250 = arith.subf %248, %249 : vector<16x1xf32>
    %251 = vector.broadcast %243 : vector<16x1xf32> to vector<16x32xf32>
    %252 = arith.subf %237, %251 : vector<16x32xf32>
    %cst_100 = arith.constant 9.99999974E-6 : f32
    %253 = vector.broadcast %cst_100 : f32 to vector<16x1xf32>
    %254 = arith.addf %250, %253 : vector<16x1xf32>
    %255 = math.rsqrt %254 : vector<16x1xf32>
    %256 = vector.broadcast %255 : vector<16x1xf32> to vector<16x32xf32>
    %257 = arith.mulf %252, %256 : vector<16x32xf32>
    %258 = vector.broadcast %238 : vector<1x32xf32> to vector<16x32xf32>
    %259 = arith.mulf %257, %258 : vector<16x32xf32>
    %260 = vector.broadcast %239 : vector<1x32xf32> to vector<16x32xf32>
    %261 = arith.addf %259, %260 : vector<16x32xf32>
    %262 = arith.truncf %261 : vector<16x32xf32> to vector<16x32xbf16>
    %cst_101 = arith.constant dense<0.000000e+00> : vector<16x64xf32>
    %263 = tpu.matmul %262, %168, %cst_101 {dimension_numbers = #tpu.dot_dimension_numbers<[1], [0], [0], [1], [0, 0, 1, 1], [], []>} : vector<16x32xbf16>, vector<32x64xbf16>, vector<16x64xf32> -> vector<16x64xf32>
    %264 = vector.broadcast %174 : vector<1x64xf32> to vector<16x64xf32>
    %265 = arith.addf %263, %264 : vector<16x64xf32>
    %266 = arith.mulf %265, %265 : vector<16x64xf32>
    %267 = arith.mulf %265, %266 : vector<16x64xf32>
    %cst_102 = arith.constant 4.471500e-02 : f32
    %268 = vector.broadcast %cst_102 : f32 to vector<16x64xf32>
    %269 = arith.mulf %268, %267 : vector<16x64xf32>
    %270 = arith.addf %265, %269 : vector<16x64xf32>
    %cst_103 = arith.constant 0.797884583 : f32
    %271 = vector.broadcast %cst_103 : f32 to vector<16x64xf32>
    %272 = arith.mulf %271, %270 : vector<16x64xf32>
    %273 = math.tanh %272 : vector<16x64xf32>
    %cst_104 = arith.constant 1.000000e+00 : f32
    %274 = vector.broadcast %cst_104 : f32 to vector<16x64xf32>
    %275 = arith.addf %274, %273 : vector<16x64xf32>
    %cst_105 = arith.constant 5.000000e-01 : f32
    %276 = vector.broadcast %cst_105 : f32 to vector<16x64xf32>
    %277 = arith.mulf %276, %275 : vector<16x64xf32>
    %278 = arith.mulf %265, %277 : vector<16x64xf32>
    %279 = arith.truncf %278 : vector<16x64xf32> to vector<16x64xbf16>
    %cst_106 = arith.constant dense<0.000000e+00> : vector<16x32xf32>
    %280 = tpu.matmul %279, %170, %cst_106 {dimension_numbers = #tpu.dot_dimension_numbers<[1], [0], [0], [1], [0, 0, 1, 1], [], []>} : vector<16x64xbf16>, vector<64x32xbf16>, vector<16x32xf32> -> vector<16x32xf32>
    %281 = vector.extract_strided_slice %172 {offsets = [4, 0], sizes = [1, 32], strides = [1, 1]} : vector<5x32xf32> to vector<1x32xf32>
    %282 = vector.broadcast %281 : vector<1x32xf32> to vector<16x32xf32>
    %283 = arith.addf %280, %282 : vector<16x32xf32>
    %284 = arith.addf %261, %283 : vector<16x32xf32>
    %285 = vector.extract_strided_slice %176 {offsets = [2, 0], sizes = [1, 32], strides = [1, 1]} : vector<4x32xf32> to vector<1x32xf32>
    %286 = vector.extract_strided_slice %176 {offsets = [3, 0], sizes = [1, 32], strides = [1, 1]} : vector<4x32xf32> to vector<1x32xf32>
    %cst_107 = arith.constant dense<0.000000e+00> : vector<16xf32>
    %287 = vector.multi_reduction <add>, %284, %cst_107 [1] : vector<16x32xf32> to vector<16xf32>
    %288 = vector.shape_cast %287 : vector<16xf32> to vector<16x1xf32>
    %cst_108 = arith.constant 3.200000e+01 : f32
    %289 = vector.broadcast %cst_108 : f32 to vector<16x1xf32>
    %290 = arith.divf %288, %289 : vector<16x1xf32>
    %291 = arith.mulf %284, %284 : vector<16x32xf32>
    %cst_109 = arith.constant dense<0.000000e+00> : vector<16xf32>
    %292 = vector.multi_reduction <add>, %291, %cst_109 [1] : vector<16x32xf32> to vector<16xf32>
    %293 = vector.shape_cast %292 : vector<16xf32> to vector<16x1xf32>
    %cst_110 = arith.constant 3.200000e+01 : f32
    %294 = vector.broadcast %cst_110 : f32 to vector<16x1xf32>
    %295 = arith.divf %293, %294 : vector<16x1xf32>
    %296 = arith.mulf %290, %290 : vector<16x1xf32>
    %297 = arith.subf %295, %296 : vector<16x1xf32>
    %298 = vector.broadcast %290 : vector<16x1xf32> to vector<16x32xf32>
    %299 = arith.subf %284, %298 : vector<16x32xf32>
    %cst_111 = arith.constant 9.99999974E-6 : f32
    %300 = vector.broadcast %cst_111 : f32 to vector<16x1xf32>
    %301 = arith.addf %297, %300 : vector<16x1xf32>
    %302 = math.rsqrt %301 : vector<16x1xf32>
    %303 = vector.broadcast %302 : vector<16x1xf32> to vector<16x32xf32>
    %304 = arith.mulf %299, %303 : vector<16x32xf32>
    %305 = vector.broadcast %285 : vector<1x32xf32> to vector<16x32xf32>
    %306 = arith.mulf %304, %305 : vector<16x32xf32>
    %307 = vector.broadcast %286 : vector<1x32xf32> to vector<16x32xf32>
    %308 = arith.addf %306, %307 : vector<16x32xf32>
    %309 = vector.shape_cast %308 : vector<16x32xf32> to vector<2x8x32xf32>
    %cst_112 = arith.constant dense<0.000000e+00> : vector<2x32xf32>
    %310 = vector.multi_reduction <add>, %309, %cst_112 [1] : vector<2x8x32xf32> to vector<2x32xf32>
    %cst_113 = arith.constant 8.000000e+00 : f32
    %311 = vector.broadcast %cst_113 : f32 to vector<2x32xf32>
    %312 = arith.divf %310, %311 : vector<2x32xf32>
    %c0_114 = arith.constant 0 : index
    %c0_115 = arith.constant 0 : index
    %313 = vector.load %arg9[%c0_114, %c0_115] : memref<2x32xf32, #tpu.memory_space<vmem>>, vector<2x32xf32>
    tpu.vector_store %arg9[%c0_114, %c0_115], %312 {strides = array<i32>} : memref<2x32xf32, #tpu.memory_space<vmem>>, vector<2x32xf32>,
    return
  }
  func.func @transform_0(%arg0: i32) -> (i32, i32) {
    %c0_i32 = arith.constant 0 : i32
    %c0_i32_0 = arith.constant 0 : i32
    %c0_i32_1 = arith.constant 0 : i32
    return %c0_i32, %c0_i32_0 : i32, i32
  }
  func.func @transform_1(%arg0: i32) -> (i32, i32) {
    %c0_i32 = arith.constant 0 : i32
    %c0_i32_0 = arith.constant 0 : i32
    %c0_i32_1 = arith.constant 0 : i32
    return %c0_i32, %c0_i32_0 : i32, i32
  }
  func.func @transform_2(%arg0: i32) -> (i32, i32, i32, i32) {
    %c0_i32 = arith.constant 0 : i32
    %c0_i32_0 = arith.constant 0 : i32
    %c0_i32_1 = arith.constant 0 : i32
    %c0_i32_2 = arith.constant 0 : i32
    %c0_i32_3 = arith.constant 0 : i32
    return %c0_i32, %c0_i32_0, %c0_i32_1, %c0_i32_2 : i32, i32, i32, i32
  }
  func.func @transform_3(%arg0: i32) -> (i32, i32, i32) {
    %c0_i32 = arith.constant 0 : i32
    %c0_i32_0 = arith.constant 0 : i32
    %c0_i32_1 = arith.constant 0 : i32
    %c0_i32_2 = arith.constant 0 : i32
    return %c0_i32, %c0_i32_0, %c0_i32_1 : i32, i32, i32
  }
  func.func @transform_4(%arg0: i32) -> (i32, i32, i32) {
    %c0_i32 = arith.constant 0 : i32
    %c0_i32_0 = arith.constant 0 : i32
    %c0_i32_1 = arith.constant 0 : i32
    %c0_i32_2 = arith.constant 0 : i32
    return %c0_i32, %c0_i32_0, %c0_i32_1 : i32, i32, i32
  }
  func.func @transform_5(%arg0: i32) -> (i32, i32, i32) {
    %c0_i32 = arith.constant 0 : i32
    %c0_i32_0 = arith.constant 0 : i32
    %c0_i32_1 = arith.constant 0 : i32
    %c0_i32_2 = arith.constant 0 : i32
    return %c0_i32, %c0_i32_0, %c0_i32_1 : i32, i32, i32
  }
  func.func @transform_6(%arg0: i32) -> (i32, i32, i32) {
    %c0_i32 = arith.constant 0 : i32
    %c0_i32_0 = arith.constant 0 : i32
    %c0_i32_1 = arith.constant 0 : i32
    %c0_i32_2 = arith.constant 0 : i32
    return %c0_i32, %c0_i32_0, %c0_i32_1 : i32, i32, i32
  }
  func.func @transform_7(%arg0: i32) -> (i32, i32, i32) {
    %c0_i32 = arith.constant 0 : i32
    %c0_i32_0 = arith.constant 0 : i32
    %c0_i32_1 = arith.constant 0 : i32
    %c0_i32_2 = arith.constant 0 : i32
    return %c0_i32, %c0_i32_0, %c0_i32_1 : i32, i32, i32
  }
  func.func @transform_8(%arg0: i32) -> (i32, i32) {
    %c0_i32 = arith.constant 0 : i32
    %c0_i32_0 = arith.constant 0 : i32
    %c0_i32_1 = arith.constant 0 : i32
    return %c0_i32, %c0_i32_0 : i32, i32
  }
}

</mosaic_0001>

<llo_original>
// kernel: tpu_custom_call.1
$region0: #{tpu_custom_call.1}
  #allocation0 [shape = 'u32[]', space=smem, size = 0x4, offset = 0x4, fixed_abs, tag = 'smem constant byte address 0x4 - core index']
  #allocation1 [shape = 'u32[144,128]{1,0:T(1,128)}', space=vmem, size = 0x12000, scoped, tag = 'internal scratch']
  %s0 = inlined_call_operand.vmem [shape: s32[16,1], index: 0, kind: input, shape index: {}]
  %s1 = inlined_call_operand.vmem [shape: bf16[128,32], index: 1, kind: input, shape index: {}]
  %s2 = inlined_call_operand.vmem [shape: bf16[2,4,32,32], index: 2, kind: input, shape index: {}]
  %s3 = inlined_call_operand.vmem [shape: bf16[2,32,64], index: 3, kind: input, shape index: {}]
  %s4 = inlined_call_operand.vmem [shape: bf16[2,64,32], index: 4, kind: input, shape index: {}]
  %s5 = inlined_call_operand.vmem [shape: f32[2,5,32], index: 5, kind: input, shape index: {}]
  %s6 = inlined_call_operand.vmem [shape: f32[2,1,64], index: 6, kind: input, shape index: {}]
  %s7 = inlined_call_operand.vmem [shape: f32[2,4,32], index: 7, kind: input, shape index: {}]
  %s8 = inlined_call_operand.hbm [shape: f32[2,32], index: 8, kind: output, shape index: {}]
  %s9 = sld [smem:[#allocation0]]
  $region42: #{tpu_custom_call.1} parent=0
    _
  %s11 = ssub.s32 1, %s9
  %s12 = scalar_select 0, %s11, %s9
  $region1: #{tpu_custom_call.1} parent=0
    #allocation2 [shape = 'u8[1024]{0}', space=vmem, size = 0x400, scoped, tag = 'output window, operand 0, single buffered']
    #allocation3 [shape = 's32[1]{0}', space=sflag, size = 0x4, scoped, tag = 'scoped memory for tpu_custom_call.1']
    %13 = vsyncpa [#allocation3], 0
    // Predicated region
    $region2: #{tpu_custom_call.1} parent=1 // pred_check
      _
    $region3: #{tpu_custom_call.1} parent=1 // pred_check_branch
      %15 = sbr.rel (0) target = $region5
    $region4: #{tpu_custom_call.1} parent=1 // pred_region
      _
    $region5: #{tpu_custom_call.1} parent=1 // pred_fallthru
      _
    // Predicated region
    $region6: #{tpu_custom_call.1} parent=1 // pred_check
      _
    $region7: #{tpu_custom_call.1} parent=1 // pred_check_branch
      %17 = sbr.rel (0) target = $region9
    $region8: #{tpu_custom_call.1} parent=1 // pred_region
      _
    $region9: #{tpu_custom_call.1} parent=1 // pred_fallthru
      _
    // Predicated region
    $region10: #{tpu_custom_call.1} parent=1 // pred_check
      _
    $region11: #{tpu_custom_call.1} parent=1 // pred_check_branch
      %19 = sbr.rel (0) target = $region13
    $region12: #{tpu_custom_call.1} parent=1 // pred_region
      _
    $region13: #{tpu_custom_call.1} parent=1 // pred_fallthru
      _
    // Predicated region
    $region14: #{tpu_custom_call.1} parent=1 // pred_check
      _
    $region15: #{tpu_custom_call.1} parent=1 // pred_check_branch
      %21 = sbr.rel (0) target = $region17
    $region16: #{tpu_custom_call.1} parent=1 // pred_region
      _
    $region17: #{tpu_custom_call.1} parent=1 // pred_fallthru
      _
    // Predicated region
    $region18: #{tpu_custom_call.1} parent=1 // pred_check
      _
    $region19: #{tpu_custom_call.1} parent=1 // pred_check_branch
      %23 = sbr.rel (0) target = $region21
    $region20: #{tpu_custom_call.1} parent=1 // pred_region
      _
    $region21: #{tpu_custom_call.1} parent=1 // pred_fallthru
      _
    // Predicated region
    $region22: #{tpu_custom_call.1} parent=1 // pred_check
      _
    $region23: #{tpu_custom_call.1} parent=1 // pred_check_branch
      %25 = sbr.rel (0) target = $region25
    $region24: #{tpu_custom_call.1} parent=1 // pred_region
      _
    $region25: #{tpu_custom_call.1} parent=1 // pred_fallthru
      _
    // Predicated region
    $region26: #{tpu_custom_call.1} parent=1 // pred_check
      _
    $region27: #{tpu_custom_call.1} parent=1 // pred_check_branch
      %27 = sbr.rel (0) target = $region29
    $region28: #{tpu_custom_call.1} parent=1 // pred_region
      _
    $region29: #{tpu_custom_call.1} parent=1 // pred_fallthru
      _
    // Predicated region
    $region30: #{tpu_custom_call.1} parent=1 // pred_check
      _
    $region31: #{tpu_custom_call.1} parent=1 // pred_check_branch
      %29 = sbr.rel (0) target = $region33
    $region32: #{tpu_custom_call.1} parent=1 // pred_region
      _
    $region33: #{tpu_custom_call.1} parent=1 // pred_fallthru
      _
    %v31 = vld [vmem:[%s0] sm:$0xff]
    %v32 = vld [vmem:[%s0 + $0x8] sm:$0xff]
    %v33 = vlaneseq
    %v34 = vand.u32 %v33, 127
    %35 = vset.pattern.permute.xlu0 0
    %36 = vperm.xlu0 %35, %v31
    %v37 = vpop.permute.xlu0 %36
    %38 = vset.pattern.permute.xlu0 0
    %39 = vperm.xlu0 %38, %v32
    %v40 = vpop.permute.xlu0 %39
    %vm41 = vcmp.eq.s32.totalorder %v34, %v37
    %vm42 = vcmp.eq.s32.totalorder %v34, %v40
    %v43 = vsel %vm41, 1, 0
    %v44 = vsel %vm42, 1, 0
    %v45 = vcvt.s32.f32 %v43
    %v46 = vcvt.s32.f32 %v44
    %v47 = vpack.c.bf16 %v46, %v45
    %v48 = vld [vmem:[%s1] sm:$0xf]
    %v49 = vld [vmem:[%s1 + $0x4] sm:$0xf]
    %v50 = vld [vmem:[%s1 + $0x8] sm:$0xf]
    %v51 = vld [vmem:[%s1 + $0xc] sm:$0xf]
    %v52 = vld [vmem:[%s1 + $0x10] sm:$0xf]
    %v53 = vld [vmem:[%s1 + $0x14] sm:$0xf]
    %v54 = vld [vmem:[%s1 + $0x18] sm:$0xf]
    %v55 = vld [vmem:[%s1 + $0x1c] sm:$0xf]
    %v56 = vld [vmem:[%s1 + $0x20] sm:$0xf]
    %v57 = vld [vmem:[%s1 + $0x24] sm:$0xf]
    %v58 = vld [vmem:[%s1 + $0x28] sm:$0xf]
    %v59 = vld [vmem:[%s1 + $0x2c] sm:$0xf]
    %v60 = vld [vmem:[%s1 + $0x30] sm:$0xf]
    %v61 = vld [vmem:[%s1 + $0x34] sm:$0xf]
    %v62 = vld [vmem:[%s1 + $0x38] sm:$0xf]
    %v63 = vld [vmem:[%s1 + $0x3c] sm:$0xf]
    %v80 = vunpack.c.l.b16 %v48
    %v81 = vunpack.c.l.b16 %v49
    %v82 = vunpack.c.l.b16 %v50
    %v83 = vunpack.c.l.b16 %v51
    %v84 = vunpack.c.l.b16 %v52
    %v85 = vunpack.c.l.b16 %v53
    %v86 = vunpack.c.l.b16 %v54
    %v87 = vunpack.c.l.b16 %v55
    %v88 = vunpack.c.l.b16 %v56
    %v89 = vunpack.c.l.b16 %v57
    %v90 = vunpack.c.l.b16 %v58
    %v91 = vunpack.c.l.b16 %v59
    %v92 = vunpack.c.l.b16 %v60
    %v93 = vunpack.c.l.b16 %v61
    %v94 = vunpack.c.l.b16 %v62
    %v95 = vunpack.c.l.b16 %v63
    %v96 = vpack.c.b16 %v81, %v80
    %v97 = vpack.c.b16 %v83, %v82
    %v98 = vpack.c.b16 %v85, %v84
    %v99 = vpack.c.b16 %v87, %v86
    %v100 = vpack.c.b16 %v89, %v88
    %v101 = vpack.c.b16 %v91, %v90
    %v102 = vpack.c.b16 %v93, %v92
    %v103 = vpack.c.b16 %v95, %v94
    %112 = vmatprep.subr.bf16.mxu0 0
    %113 = vmatpush1.bf16.msra.mxu0 %v103
    %114 = vmatprep.subr.bf16.mxu0 0
    %115 = vmatpush1.bf16.msra.mxu0 %v102
    %116 = vmatprep.subr.bf16.mxu0 0
    %117 = vmatpush1.bf16.msra.mxu0 %v101
    %118 = vmatprep.subr.bf16.mxu0 0
    %119 = vmatpush1.bf16.msra.mxu0 %v100
    %120 = vmatprep.subr.bf16.mxu0 0
    %121 = vmatpush1.bf16.msra.mxu0 %v99
    %122 = vmatprep.subr.bf16.mxu0 0
    %123 = vmatpush1.bf16.msra.mxu0 %v98
    %124 = vmatprep.subr.bf16.mxu0 0
    %125 = vmatpush1.bf16.msra.mxu0 %v97
    %126 = vmatprep.subr.bf16.mxu0 0
    %127 = vmatpush1.bf16.msra.mxu0 %v96
    %128 = vmatprep.subr.bf16.mxu0 0
    %129 = vmatpush2.bf16.msra.mxu0 0
    %130 = vmatprep.subr.bf16.mxu0 0
    %131 = vmatpush2.bf16.msra.mxu0 0
    %132 = vmatprep.subr.bf16.mxu0 0
    %133 = vmatpush2.bf16.msra.mxu0 0
    %134 = vmatprep.subr.bf16.mxu0 0
    %135 = vmatpush2.bf16.msra.mxu0 0
    %136 = vmatprep.subr.bf16.mxu0 0
    %137 = vmatpush2.bf16.msra.mxu0 0
    %138 = vmatprep.subr.bf16.mxu0 0
    %139 = vmatpush2.bf16.msra.mxu0 0
    %140 = vmatprep.subr.bf16.mxu0 0
    %141 = vmatpush2.bf16.msra.mxu0 0
    %142 = vmatprep.subr.bf16.mxu0 0
    %143 = vmatpush2.bf16.msra.mxu0 0
    %144 = vmatprep.mubr.bf16.mxu0 0
    %145 = vmatmul.mubr.bf16.gmra.mxu0 %v47
    %v146 = vpop.f32.mrf.mxu0
    %v147 = vadd.f32 0.0, %v146
    %v148 = vpop.f32.mrf.mxu0
    %v149 = vpop.f32.mrf.mxu0
    %v150 = vadd.f32 0.0, %v149
    %v151 = vpop.f32.mrf.mxu0
    %152 = vdwg.mxu0
    %v153 = vld [vmem:[%s2] sm:$0xf]
    %v154 = vld [vmem:[%s2 + $0x4] sm:$0xf]
    %v155 = vld [vmem:[%s2 + $0x8] sm:$0xf]
    %v156 = vld [vmem:[%s2 + $0xc] sm:$0xf]
    %s157 = scalar_lea.vmem %s2, 16
    %v158 = vld [vmem:[%s157] sm:$0xf]
    %v159 = vld [vmem:[%s157 + $0x4] sm:$0xf]
    %v160 = vld [vmem:[%s157 + $0x8] sm:$0xf]
    %v161 = vld [vmem:[%s157 + $0xc] sm:$0xf]
    %s162 = scalar_lea.vmem %s2, 32
    %v163 = vld [vmem:[%s162] sm:$0xf]
    %v164 = vld [vmem:[%s162 + $0x4] sm:$0xf]
    %v165 = vld [vmem:[%s162 + $0x8] sm:$0xf]
    %v166 = vld [vmem:[%s162 + $0xc] sm:$0xf]
    %s167 = scalar_lea.vmem %s2, 48
    %v168 = vld [vmem:[%s167] sm:$0xf]
    %v169 = vld [vmem:[%s167 + $0x4] sm:$0xf]
    %v170 = vld [vmem:[%s167 + $0x8] sm:$0xf]
    %v171 = vld [vmem:[%s167 + $0xc] sm:$0xf]
    %v172 = vld [vmem:[%s3] sm:$0xf]
    %v173 = vld [vmem:[%s3 + $0x4] sm:$0xf]
    %v174 = vld [vmem:[%s3 + $0x8] sm:$0xf]
    %v175 = vld [vmem:[%s3 + $0xc] sm:$0xf]
    %v176 = vld [vmem:[%s4] sm:$0xf]
    %v177 = vld [vmem:[%s4 + $0x4] sm:$0xf]
    %v178 = vld [vmem:[%s4 + $0x8] sm:$0xf]
    %v179 = vld [vmem:[%s4 + $0xc] sm:$0xf]
    %v180 = vld [vmem:[%s4 + $0x10] sm:$0xf]
    %v181 = vld [vmem:[%s4 + $0x14] sm:$0xf]
    %v182 = vld [vmem:[%s4 + $0x18] sm:$0xf]
    %v183 = vld [vmem:[%s4 + $0x1c] sm:$0xf]
    %v184 = vld [vmem:[%s5] sm:$0x1f]
    %v185 = vld [vmem:[%s6] sm:$0x1]
    %v186 = vld [vmem:[%s7] sm:$0xf]
    %v187 = vpack.c.bf16 %v150, %v147
    %v188 = vlaneseq
    %v189 = vshrl.u32 %v188, 7
    %v190 = vsub.s32 0, %v189
    %v191 = vrot.slane %v184, %v190
    %v196 = vunpack.c.l.b16 %v153
    %v197 = vunpack.c.l.b16 %v154
    %v198 = vunpack.c.l.b16 %v155
    %v199 = vunpack.c.l.b16 %v156
    %v200 = vpack.c.b16 %v197, %v196
    %v201 = vpack.c.b16 %v199, %v198
    %vm204 = vcmask 261120
    %v206 = vsel %vm204, %v187, 0
    %208 = vmatprep.subr.bf16.mxu0 0
    %209 = vmatpush1.bf16.msra.mxu0 0
    %210 = vmatprep.subr.bf16.mxu0 0
    %211 = vmatpush1.bf16.msra.mxu0 0
    %212 = vmatprep.subr.bf16.mxu0 0
    %213 = vmatpush1.bf16.msra.mxu0 0
    %214 = vmatprep.subr.bf16.mxu0 0
    %215 = vmatpush1.bf16.msra.mxu0 0
    %216 = vmatprep.subr.bf16.mxu0 0
    %217 = vmatpush1.bf16.msra.mxu0 0
    %218 = vmatprep.subr.bf16.mxu0 0
    %219 = vmatpush1.bf16.msra.mxu0 0
    %220 = vmatprep.subr.bf16.mxu0 0
    %221 = vmatpush1.bf16.msra.mxu0 %v201
    %222 = vmatprep.subr.bf16.mxu0 0
    %223 = vmatpush1.bf16.msra.mxu0 %v200
    %224 = vmatprep.subr.bf16.mxu0 0
    %225 = vmatpush2.bf16.msra.mxu0 0
    %226 = vmatprep.subr.bf16.mxu0 0
    %227 = vmatpush2.bf16.msra.mxu0 0
    %228 = vmatprep.subr.bf16.mxu0 0
    %229 = vmatpush2.bf16.msra.mxu0 0
    %230 = vmatprep.subr.bf16.mxu0 0
    %231 = vmatpush2.bf16.msra.mxu0 0
    %232 = vmatprep.subr.bf16.mxu0 0
    %233 = vmatpush2.bf16.msra.mxu0 0
    %234 = vmatprep.subr.bf16.mxu0 0
    %235 = vmatpush2.bf16.msra.mxu0 0
    %236 = vmatprep.subr.bf16.mxu0 0
    %237 = vmatpush2.bf16.msra.mxu0 0
    %238 = vmatprep.subr.bf16.mxu0 0
    %239 = vmatpush2.bf16.msra.mxu0 0
    %240 = vmatprep.mubr.bf16.mxu0 0
    %241 = vmatmul.mubr.bf16.gmra.mxu0 %v206
    %v242 = vpop.f32.mrf.mxu0
    %v243 = vadd.f32 %v191, %v242
    %v244 = vpop.f32.mrf.mxu0
    %v245 = vpop.f32.mrf.mxu0
    %v246 = vadd.f32 %v191, %v245
    %v247 = vpop.f32.mrf.mxu0
    %248 = vdwg.mxu0
    %v249 = vlaneseq
    %v250 = vshrl.u32 %v249, 7
    %v251 = vsub.s32 1, %v250
    %v252 = vrot.slane %v184, %v251
    %v257 = vunpack.c.l.b16 %v158
    %v258 = vunpack.c.l.b16 %v159
    %v259 = vunpack.c.l.b16 %v160
    %v260 = vunpack.c.l.b16 %v161
    %v261 = vpack.c.b16 %v258, %v257
    %v262 = vpack.c.b16 %v260, %v259
    %265 = vmatprep.subr.bf16.mxu0 0
    %266 = vmatpush1.bf16.msra.mxu0 0
    %267 = vmatprep.subr.bf16.mxu0 0
    %268 = vmatpush1.bf16.msra.mxu0 0
    %269 = vmatprep.subr.bf16.mxu0 0
    %270 = vmatpush1.bf16.msra.mxu0 0
    %271 = vmatprep.subr.bf16.mxu0 0
    %272 = vmatpush1.bf16.msra.mxu0 0
    %273 = vmatprep.subr.bf16.mxu0 0
    %274 = vmatpush1.bf16.msra.mxu0 0
    %275 = vmatprep.subr.bf16.mxu0 0
    %276 = vmatpush1.bf16.msra.mxu0 0
    %277 = vmatprep.subr.bf16.mxu0 0
    %278 = vmatpush1.bf16.msra.mxu0 %v262
    %279 = vmatprep.subr.bf16.mxu0 0
    %280 = vmatpush1.bf16.msra.mxu0 %v261
    %281 = vmatprep.subr.bf16.mxu0 0
    %282 = vmatpush2.bf16.msra.mxu0 0
    %283 = vmatprep.subr.bf16.mxu0 0
    %284 = vmatpush2.bf16.msra.mxu0 0
    %285 = vmatprep.subr.bf16.mxu0 0
    %286 = vmatpush2.bf16.msra.mxu0 0
    %287 = vmatprep.subr.bf16.mxu0 0
    %288 = vmatpush2.bf16.msra.mxu0 0
    %289 = vmatprep.subr.bf16.mxu0 0
    %290 = vmatpush2.bf16.msra.mxu0 0
    %291 = vmatprep.subr.bf16.mxu0 0
    %292 = vmatpush2.bf16.msra.mxu0 0
    %293 = vmatprep.subr.bf16.mxu0 0
    %294 = vmatpush2.bf16.msra.mxu0 0
    %295 = vmatprep.subr.bf16.mxu0 0
    %296 = vmatpush2.bf16.msra.mxu0 0
    %297 = vmatprep.mubr.bf16.mxu0 0
    %298 = vmatmul.mubr.bf16.gmra.mxu0 %v206
    %v299 = vpop.f32.mrf.mxu0
    %v300 = vadd.f32 %v252, %v299
    %v301 = vpop.f32.mrf.mxu0
    %v302 = vpop.f32.mrf.mxu0
    %v303 = vadd.f32 %v252, %v302
    %v304 = vpop.f32.mrf.mxu0
    %305 = vdwg.mxu0
    %v306 = vlaneseq
    %v307 = vshrl.u32 %v306, 7
    %v308 = vsub.s32 2, %v307
    %v309 = vrot.slane %v184, %v308
    %v314 = vunpack.c.l.b16 %v163
    %v315 = vunpack.c.l.b16 %v164
    %v316 = vunpack.c.l.b16 %v165
    %v317 = vunpack.c.l.b16 %v166
    %v318 = vpack.c.b16 %v315, %v314
    %v319 = vpack.c.b16 %v317, %v316
    %322 = vmatprep.subr.bf16.mxu0 0
    %323 = vmatpush1.bf16.msra.mxu0 0
    %324 = vmatprep.subr.bf16.mxu0 0
    %325 = vmatpush1.bf16.msra.mxu0 0
    %326 = vmatprep.subr.bf16.mxu0 0
    %327 = vmatpush1.bf16.msra.mxu0 0
    %328 = vmatprep.subr.bf16.mxu0 0
    %329 = vmatpush1.bf16.msra.mxu0 0
    %330 = vmatprep.subr.bf16.mxu0 0
    %331 = vmatpush1.bf16.msra.mxu0 0
    %332 = vmatprep.subr.bf16.mxu0 0
    %333 = vmatpush1.bf16.msra.mxu0 0
    %334 = vmatprep.subr.bf16.mxu0 0
    %335 = vmatpush1.bf16.msra.mxu0 %v319
    %336 = vmatprep.subr.bf16.mxu0 0
    %337 = vmatpush1.bf16.msra.mxu0 %v318
    %338 = vmatprep.subr.bf16.mxu0 0
    %339 = vmatpush2.bf16.msra.mxu0 0
    %340 = vmatprep.subr.bf16.mxu0 0
    %341 = vmatpush2.bf16.msra.mxu0 0
    %342 = vmatprep.subr.bf16.mxu0 0
    %343 = vmatpush2.bf16.msra.mxu0 0
    %344 = vmatprep.subr.bf16.mxu0 0
    %345 = vmatpush2.bf16.msra.mxu0 0
    %346 = vmatprep.subr.bf16.mxu0 0
    %347 = vmatpush2.bf16.msra.mxu0 0
    %348 = vmatprep.subr.bf16.mxu0 0
    %349 = vmatpush2.bf16.msra.mxu0 0
    %350 = vmatprep.subr.bf16.mxu0 0
    %351 = vmatpush2.bf16.msra.mxu0 0
    %352 = vmatprep.subr.bf16.mxu0 0
    %353 = vmatpush2.bf16.msra.mxu0 0
    %354 = vmatprep.mubr.bf16.mxu0 0
    %355 = vmatmul.mubr.bf16.gmra.mxu0 %v206
    %v356 = vpop.f32.mrf.mxu0
    %v357 = vadd.f32 %v309, %v356
    %v358 = vpop.f32.mrf.mxu0
    %v359 = vpop.f32.mrf.mxu0
    %v360 = vadd.f32 %v309, %v359
    %v361 = vpop.f32.mrf.mxu0
    %362 = vdwg.mxu0
    %v363 = vmul.f32 %v243, 0.35355338
    %v364 = vmul.f32 %v246, 0.35355338
    %367 = vrot.lane.b32.xlu0 %v363, 120
    %v368 = vpop.permute.xlu0 %367
    %369 = vrot.lane.b32.xlu0 %v364, 120
    %v370 = vpop.permute.xlu0 %369
    %373 = vrot.lane.b32.xlu0 %v363, 112
    %v374 = vpop.permute.xlu0 %373
    %375 = vrot.lane.b32.xlu0 %v364, 112
    %v376 = vpop.permute.xlu0 %375
    %379 = vrot.lane.b32.xlu0 %v363, 104
    %v380 = vpop.permute.xlu0 %379
    %381 = vrot.lane.b32.xlu0 %v364, 104
    %v382 = vpop.permute.xlu0 %381
    %v385 = vpack.c.bf16 %v363, %v363
    %v386 = vpack.c.bf16 %v364, %v364
    %v387 = vpack.c.bf16 %v368, %v368
    %v388 = vpack.c.bf16 %v370, %v370
    %v389 = vpack.c.bf16 %v374, %v374
    %v390 = vpack.c.bf16 %v376, %v376
    %v391 = vpack.c.bf16 %v380, %v380
    %v392 = vpack.c.bf16 %v382, %v382
    %395 = vrot.lane.b32.xlu0 %v300, 120
    %v396 = vpop.permute.xlu0 %395
    %397 = vrot.lane.b32.xlu0 %v303, 120
    %v398 = vpop.permute.xlu0 %397
    %401 = vrot.lane.b32.xlu0 %v300, 112
    %v402 = vpop.permute.xlu0 %401
    %403 = vrot.lane.b32.xlu0 %v303, 112
    %v404 = vpop.permute.xlu0 %403
    %407 = vrot.lane.b32.xlu0 %v300, 104
    %v408 = vpop.permute.xlu0 %407
    %409 = vrot.lane.b32.xlu0 %v303, 104
    %v410 = vpop.permute.xlu0 %409
    %v413 = vpack.c.bf16 %v300, %v300
    %v414 = vpack.c.bf16 %v303, %v303
    %v415 = vpack.c.bf16 %v396, %v396
    %v416 = vpack.c.bf16 %v398, %v398
    %v417 = vpack.c.bf16 %v402, %v402
    %v418 = vpack.c.bf16 %v404, %v404
    %v419 = vpack.c.bf16 %v408, %v408
    %v420 = vpack.c.bf16 %v410, %v410
    %423 = vrot.lane.b32.xlu0 %v357, 120
    %v424 = vpop.permute.xlu0 %423
    %425 = vrot.lane.b32.xlu0 %v360, 120
    %v426 = vpop.permute.xlu0 %425
    %429 = vrot.lane.b32.xlu0 %v357, 112
    %v430 = vpop.permute.xlu0 %429
    %431 = vrot.lane.b32.xlu0 %v360, 112
    %v432 = vpop.permute.xlu0 %431
    %435 = vrot.lane.b32.xlu0 %v357, 104
    %v436 = vpop.permute.xlu0 %435
    %437 = vrot.lane.b32.xlu0 %v360, 104
    %v438 = vpop.permute.xlu0 %437
    %v441 = vpack.c.bf16 %v357, %v357
    %v442 = vpack.c.bf16 %v360, %v360
    %v443 = vpack.c.bf16 %v424, %v424
    %v444 = vpack.c.bf16 %v426, %v426
    %v445 = vpack.c.bf16 %v430, %v430
    %v446 = vpack.c.bf16 %v432, %v432
    %v447 = vpack.c.bf16 %v436, %v436
    %v448 = vpack.c.bf16 %v438, %v438
    %vm449 = vcmask 64512
    %v451 = vsel %vm449, %v385, 0
    %v454 = vsel %vm449, %v413, 0
    %456 = vmatprep.subr.bf16.mxu0 0
    %457 = vmatpush1.bf16.xpose.msra.mxu0 0
    %458 = vmatprep.subr.bf16.mxu0 0
    %459 = vmatpush1.bf16.xpose.msra.mxu0 0
    %460 = vmatprep.subr.bf16.mxu0 0
    %461 = vmatpush1.bf16.xpose.msra.mxu0 0
    %462 = vmatprep.subr.bf16.mxu0 0
    %463 = vmatpush1.bf16.xpose.msra.mxu0 0
    %464 = vmatprep.subr.bf16.mxu0 0
    %465 = vmatpush1.bf16.xpose.msra.mxu0 0
    %466 = vmatprep.subr.bf16.mxu0 0
    %467 = vmatpush1.bf16.xpose.msra.mxu0 0
    %468 = vmatprep.subr.bf16.mxu0 0
    %469 = vmatpush1.bf16.xpose.msra.mxu0 0
    %470 = vmatprep.subr.bf16.mxu0 0
    %471 = vmatpush1.bf16.xpose.msra.mxu0 %v454
    %472 = vmatprep.subr.bf16.mxu0 0
    %473 = vmatpush2.bf16.xpose.msra.mxu0 0
    %474 = vmatprep.subr.bf16.mxu0 0
    %475 = vmatpush2.bf16.xpose.msra.mxu0 0
    %476 = vmatprep.subr.bf16.mxu0 0
    %477 = vmatpush2.bf16.xpose.msra.mxu0 0
    %478 = vmatprep.subr.bf16.mxu0 0
    %479 = vmatpush2.bf16.xpose.msra.mxu0 0
    %480 = vmatprep.subr.bf16.mxu0 0
    %481 = vmatpush2.bf16.xpose.msra.mxu0 0
    %482 = vmatprep.subr.bf16.mxu0 0
    %483 = vmatpush2.bf16.xpose.msra.mxu0 0
    %484 = vmatprep.subr.bf16.mxu0 0
    %485 = vmatpush2.bf16.xpose.msra.mxu0 0
    %486 = vmatprep.subr.bf16.mxu0 0
    %487 = vmatpush2.bf16.xpose.msra.mxu0 0
    %488 = vmatprep.mubr.bf16.mxu0 0
    %489 = vmatmul.mubr.bf16.gmra.mxu0 %v451
    %v490 = vpop.f32.mrf.mxu0
    %v491 = vadd.f32 0.0, %v490
    %v492 = vpop.f32.mrf.mxu0
    %v493 = vpop.f32.mrf.mxu0
    %v494 = vpop.f32.mrf.mxu0
    %495 = vdwg.mxu0
    %v497 = vsel %vm449, %v386, 0
    %v500 = vsel %vm449, %v414, 0
    %502 = vmatprep.subr.bf16.mxu0 0
    %503 = vmatpush1.bf16.xpose.msra.mxu0 0
    %504 = vmatprep.subr.bf16.mxu0 0
    %505 = vmatpush1.bf16.xpose.msra.mxu0 0
    %506 = vmatprep.subr.bf16.mxu0 0
    %507 = vmatpush1.bf16.xpose.msra.mxu0 0
    %508 = vmatprep.subr.bf16.mxu0 0
    %509 = vmatpush1.bf16.xpose.msra.mxu0 0
    %510 = vmatprep.subr.bf16.mxu0 0
    %511 = vmatpush1.bf16.xpose.msra.mxu0 0
    %512 = vmatprep.subr.bf16.mxu0 0
    %513 = vmatpush1.bf16.xpose.msra.mxu0 0
    %514 = vmatprep.subr.bf16.mxu0 0
    %515 = vmatpush1.bf16.xpose.msra.mxu0 0
    %516 = vmatprep.subr.bf16.mxu0 0
    %517 = vmatpush1.bf16.xpose.msra.mxu0 %v500
    %518 = vmatprep.subr.bf16.mxu0 0
    %519 = vmatpush2.bf16.xpose.msra.mxu0 0
    %520 = vmatprep.subr.bf16.mxu0 0
    %521 = vmatpush2.bf16.xpose.msra.mxu0 0
    %522 = vmatprep.subr.bf16.mxu0 0
    %523 = vmatpush2.bf16.xpose.msra.mxu0 0
    %524 = vmatprep.subr.bf16.mxu0 0
    %525 = vmatpush2.bf16.xpose.msra.mxu0 0
    %526 = vmatprep.subr.bf16.mxu0 0
    %527 = vmatpush2.bf16.xpose.msra.mxu0 0
    %528 = vmatprep.subr.bf16.mxu0 0
    %529 = vmatpush2.bf16.xpose.msra.mxu0 0
    %530 = vmatprep.subr.bf16.mxu0 0
    %531 = vmatpush2.bf16.xpose.msra.mxu0 0
    %532 = vmatprep.subr.bf16.mxu0 0
    %533 = vmatpush2.bf16.xpose.msra.mxu0 0
    %534 = vmatprep.mubr.bf16.mxu0 0
    %535 = vmatmul.mubr.bf16.gmra.mxu0 %v497
    %v536 = vpop.f32.mrf.mxu0
    %v537 = vadd.f32 0.0, %v536
    %v538 = vpop.f32.mrf.mxu0
    %v539 = vpop.f32.mrf.mxu0
    %v540 = vpop.f32.mrf.mxu0
    %541 = vdwg.mxu0
    %v543 = vsel %vm449, %v387, 0
    %v546 = vsel %vm449, %v415, 0
    %548 = vmatprep.subr.bf16.mxu0 0
    %549 = vmatpush1.bf16.xpose.msra.mxu0 0
    %550 = vmatprep.subr.bf16.mxu0 0
    %551 = vmatpush1.bf16.xpose.msra.mxu0 0
    %552 = vmatprep.subr.bf16.mxu0 0
    %553 = vmatpush1.bf16.xpose.msra.mxu0 0
    %554 = vmatprep.subr.bf16.mxu0 0
    %555 = vmatpush1.bf16.xpose.msra.mxu0 0
    %556 = vmatprep.subr.bf16.mxu0 0
    %557 = vmatpush1.bf16.xpose.msra.mxu0 0
    %558 = vmatprep.subr.bf16.mxu0 0
    %559 = vmatpush1.bf16.xpose.msra.mxu0 0
    %560 = vmatprep.subr.bf16.mxu0 0
    %561 = vmatpush1.bf16.xpose.msra.mxu0 0
    %562 = vmatprep.subr.bf16.mxu0 0
    %563 = vmatpush1.bf16.xpose.msra.mxu0 %v546
    %564 = vmatprep.subr.bf16.mxu0 0
    %565 = vmatpush2.bf16.xpose.msra.mxu0 0
    %566 = vmatprep.subr.bf16.mxu0 0
    %567 = vmatpush2.bf16.xpose.msra.mxu0 0
    %568 = vmatprep.subr.bf16.mxu0 0
    %569 = vmatpush2.bf16.xpose.msra.mxu0 0
    %570 = vmatprep.subr.bf16.mxu0 0
    %571 = vmatpush2.bf16.xpose.msra.mxu0 0
    %572 = vmatprep.subr.bf16.mxu0 0
    %573 = vmatpush2.bf16.xpose.msra.mxu0 0
    %574 = vmatprep.subr.bf16.mxu0 0
    %575 = vmatpush2.bf16.xpose.msra.mxu0 0
    %576 = vmatprep.subr.bf16.mxu0 0
    %577 = vmatpush2.bf16.xpose.msra.mxu0 0
    %578 = vmatprep.subr.bf16.mxu0 0
    %579 = vmatpush2.bf16.xpose.msra.mxu0 0
    %580 = vmatprep.mubr.bf16.mxu0 0
    %581 = vmatmul.mubr.bf16.gmra.mxu0 %v543
    %v582 = vpop.f32.mrf.mxu0
    %v583 = vadd.f32 0.0, %v582
    %v584 = vpop.f32.mrf.mxu0
    %v585 = vpop.f32.mrf.mxu0
    %v586 = vpop.f32.mrf.mxu0
    %587 = vdwg.mxu0
    %v589 = vsel %vm449, %v388, 0
    %v592 = vsel %vm449, %v416, 0
    %594 = vmatprep.subr.bf16.mxu0 0
    %595 = vmatpush1.bf16.xpose.msra.mxu0 0
    %596 = vmatprep.subr.bf16.mxu0 0
    %597 = vmatpush1.bf16.xpose.msra.mxu0 0
    %598 = vmatprep.subr.bf16.mxu0 0
    %599 = vmatpush1.bf16.xpose.msra.mxu0 0
    %600 = vmatprep.subr.bf16.mxu0 0
    %601 = vmatpush1.bf16.xpose.msra.mxu0 0
    %602 = vmatprep.subr.bf16.mxu0 0
    %603 = vmatpush1.bf16.xpose.msra.mxu0 0
    %604 = vmatprep.subr.bf16.mxu0 0
    %605 = vmatpush1.bf16.xpose.msra.mxu0 0
    %606 = vmatprep.subr.bf16.mxu0 0
    %607 = vmatpush1.bf16.xpose.msra.mxu0 0
    %608 = vmatprep.subr.bf16.mxu0 0
    %609 = vmatpush1.bf16.xpose.msra.mxu0 %v592
    %610 = vmatprep.subr.bf16.mxu0 0
    %611 = vmatpush2.bf16.xpose.msra.mxu0 0
    %612 = vmatprep.subr.bf16.mxu0 0
    %613 = vmatpush2.bf16.xpose.msra.mxu0 0
    %614 = vmatprep.subr.bf16.mxu0 0
    %615 = vmatpush2.bf16.xpose.msra.mxu0 0
    %616 = vmatprep.subr.bf16.mxu0 0
    %617 = vmatpush2.bf16.xpose.msra.mxu0 0
    %618 = vmatprep.subr.bf16.mxu0 0
    %619 = vmatpush2.bf16.xpose.msra.mxu0 0
    %620 = vmatprep.subr.bf16.mxu0 0
    %621 = vmatpush2.bf16.xpose.msra.mxu0 0
    %622 = vmatprep.subr.bf16.mxu0 0
    %623 = vmatpush2.bf16.xpose.msra.mxu0 0
    %624 = vmatprep.subr.bf16.mxu0 0
    %625 = vmatpush2.bf16.xpose.msra.mxu0 0
    %626 = vmatprep.mubr.bf16.mxu0 0
    %627 = vmatmul.mubr.bf16.gmra.mxu0 %v589
    %v628 = vpop.f32.mrf.mxu0
    %v629 = vadd.f32 0.0, %v628
    %v630 = vpop.f32.mrf.mxu0
    %v631 = vpop.f32.mrf.mxu0
    %v632 = vpop.f32.mrf.mxu0
    %633 = vdwg.mxu0
    %v635 = vsel %vm449, %v389, 0
    %v638 = vsel %vm449, %v417, 0
    %640 = vmatprep.subr.bf16.mxu0 0
    %641 = vmatpush1.bf16.xpose.msra.mxu0 0
    %642 = vmatprep.subr.bf16.mxu0 0
    %643 = vmatpush1.bf16.xpose.msra.mxu0 0
    %644 = vmatprep.subr.bf16.mxu0 0
    %645 = vmatpush1.bf16.xpose.msra.mxu0 0
    %646 = vmatprep.subr.bf16.mxu0 0
    %647 = vmatpush1.bf16.xpose.msra.mxu0 0
    %648 = vmatprep.subr.bf16.mxu0 0
    %649 = vmatpush1.bf16.xpose.msra.mxu0 0
    %650 = vmatprep.subr.bf16.mxu0 0
    %651 = vmatpush1.bf16.xpose.msra.mxu0 0
    %652 = vmatprep.subr.bf16.mxu0 0
    %653 = vmatpush1.bf16.xpose.msra.mxu0 0
    %654 = vmatprep.subr.bf16.mxu0 0
    %655 = vmatpush1.bf16.xpose.msra.mxu0 %v638
    %656 = vmatprep.subr.bf16.mxu0 0
    %657 = vmatpush2.bf16.xpose.msra.mxu0 0
    %658 = vmatprep.subr.bf16.mxu0 0
    %659 = vmatpush2.bf16.xpose.msra.mxu0 0
    %660 = vmatprep.subr.bf16.mxu0 0
    %661 = vmatpush2.bf16.xpose.msra.mxu0 0
    %662 = vmatprep.subr.bf16.mxu0 0
    %663 = vmatpush2.bf16.xpose.msra.mxu0 0
    %664 = vmatprep.subr.bf16.mxu0 0
    %665 = vmatpush2.bf16.xpose.msra.mxu0 0
    %666 = vmatprep.subr.bf16.mxu0 0
    %667 = vmatpush2.bf16.xpose.msra.mxu0 0
    %668 = vmatprep.subr.bf16.mxu0 0
    %669 = vmatpush2.bf16.xpose.msra.mxu0 0
    %670 = vmatprep.subr.bf16.mxu0 0
    %671 = vmatpush2.bf16.xpose.msra.mxu0 0
    %672 = vmatprep.mubr.bf16.mxu0 0
    %673 = vmatmul.mubr.bf16.gmra.mxu0 %v635
    %v674 = vpop.f32.mrf.mxu0
    %v675 = vadd.f32 0.0, %v674
    %v676 = vpop.f32.mrf.mxu0
    %v677 = vpop.f32.mrf.mxu0
    %v678 = vpop.f32.mrf.mxu0
    %679 = vdwg.mxu0
    %v681 = vsel %vm449, %v390, 0
    %v684 = vsel %vm449, %v418, 0
    %686 = vmatprep.subr.bf16.mxu0 0
    %687 = vmatpush1.bf16.xpose.msra.mxu0 0
    %688 = vmatprep.subr.bf16.mxu0 0
    %689 = vmatpush1.bf16.xpose.msra.mxu0 0
    %690 = vmatprep.subr.bf16.mxu0 0
    %691 = vmatpush1.bf16.xpose.msra.mxu0 0
    %692 = vmatprep.subr.bf16.mxu0 0
    %693 = vmatpush1.bf16.xpose.msra.mxu0 0
    %694 = vmatprep.subr.bf16.mxu0 0
    %695 = vmatpush1.bf16.xpose.msra.mxu0 0
    %696 = vmatprep.subr.bf16.mxu0 0
    %697 = vmatpush1.bf16.xpose.msra.mxu0 0
    %698 = vmatprep.subr.bf16.mxu0 0
    %699 = vmatpush1.bf16.xpose.msra.mxu0 0
    %700 = vmatprep.subr.bf16.mxu0 0
    %701 = vmatpush1.bf16.xpose.msra.mxu0 %v684
    %702 = vmatprep.subr.bf16.mxu0 0
    %703 = vmatpush2.bf16.xpose.msra.mxu0 0
    %704 = vmatprep.subr.bf16.mxu0 0
    %705 = vmatpush2.bf16.xpose.msra.mxu0 0
    %706 = vmatprep.subr.bf16.mxu0 0
    %707 = vmatpush2.bf16.xpose.msra.mxu0 0
    %708 = vmatprep.subr.bf16.mxu0 0
    %709 = vmatpush2.bf16.xpose.msra.mxu0 0
    %710 = vmatprep.subr.bf16.mxu0 0
    %711 = vmatpush2.bf16.xpose.msra.mxu0 0
    %712 = vmatprep.subr.bf16.mxu0 0
    %713 = vmatpush2.bf16.xpose.msra.mxu0 0
    %714 = vmatprep.subr.bf16.mxu0 0
    %715 = vmatpush2.bf16.xpose.msra.mxu0 0
    %716 = vmatprep.subr.bf16.mxu0 0
    %717 = vmatpush2.bf16.xpose.msra.mxu0 0
    %718 = vmatprep.mubr.bf16.mxu0 0
    %719 = vmatmul.mubr.bf16.gmra.mxu0 %v681
    %v720 = vpop.f32.mrf.mxu0
    %v721 = vadd.f32 0.0, %v720
    %v722 = vpop.f32.mrf.mxu0
    %v723 = vpop.f32.mrf.mxu0
    %v724 = vpop.f32.mrf.mxu0
    %725 = vdwg.mxu0
    %v727 = vsel %vm449, %v391, 0
    %v730 = vsel %vm449, %v419, 0
    %732 = vmatprep.subr.bf16.mxu0 0
    %733 = vmatpush1.bf16.xpose.msra.mxu0 0
    %734 = vmatprep.subr.bf16.mxu0 0
    %735 = vmatpush1.bf16.xpose.msra.mxu0 0
    %736 = vmatprep.subr.bf16.mxu0 0
    %737 = vmatpush1.bf16.xpose.msra.mxu0 0
    %738 = vmatprep.subr.bf16.mxu0 0
    %739 = vmatpush1.bf16.xpose.msra.mxu0 0
    %740 = vmatprep.subr.bf16.mxu0 0
    %741 = vmatpush1.bf16.xpose.msra.mxu0 0
    %742 = vmatprep.subr.bf16.mxu0 0
    %743 = vmatpush1.bf16.xpose.msra.mxu0 0
    %744 = vmatprep.subr.bf16.mxu0 0
    %745 = vmatpush1.bf16.xpose.msra.mxu0 0
    %746 = vmatprep.subr.bf16.mxu0 0
    %747 = vmatpush1.bf16.xpose.msra.mxu0 %v730
    %748 = vmatprep.subr.bf16.mxu0 0
    %749 = vmatpush2.bf16.xpose.msra.mxu0 0
    %750 = vmatprep.subr.bf16.mxu0 0
    %751 = vmatpush2.bf16.xpose.msra.mxu0 0
    %752 = vmatprep.subr.bf16.mxu0 0
    %753 = vmatpush2.bf16.xpose.msra.mxu0 0
    %754 = vmatprep.subr.bf16.mxu0 0
    %755 = vmatpush2.bf16.xpose.msra.mxu0 0
    %756 = vmatprep.subr.bf16.mxu0 0
    %757 = vmatpush2.bf16.xpose.msra.mxu0 0
    %758 = vmatprep.subr.bf16.mxu0 0
    %759 = vmatpush2.bf16.xpose.msra.mxu0 0
    %760 = vmatprep.subr.bf16.mxu0 0
    %761 = vmatpush2.bf16.xpose.msra.mxu0 0
    %762 = vmatprep.subr.bf16.mxu0 0
    %763 = vmatpush2.bf16.xpose.msra.mxu0 0
    %764 = vmatprep.mubr.bf16.mxu0 0
    %765 = vmatmul.mubr.bf16.gmra.mxu0 %v727
    %v766 = vpop.f32.mrf.mxu0
    %v767 = vadd.f32 0.0, %v766
    %v768 = vpop.f32.mrf.mxu0
    %v769 = vpop.f32.mrf.mxu0
    %v770 = vpop.f32.mrf.mxu0
    %771 = vdwg.mxu0
    %v773 = vsel %vm449, %v392, 0
    %v776 = vsel %vm449, %v420, 0
    %778 = vmatprep.subr.bf16.mxu0 0
    %779 = vmatpush1.bf16.xpose.msra.mxu0 0
    %780 = vmatprep.subr.bf16.mxu0 0
    %781 = vmatpush1.bf16.xpose.msra.mxu0 0
    %782 = vmatprep.subr.bf16.mxu0 0
    %783 = vmatpush1.bf16.xpose.msra.mxu0 0
    %784 = vmatprep.subr.bf16.mxu0 0
    %785 = vmatpush1.bf16.xpose.msra.mxu0 0
    %786 = vmatprep.subr.bf16.mxu0 0
    %787 = vmatpush1.bf16.xpose.msra.mxu0 0
    %788 = vmatprep.subr.bf16.mxu0 0
    %789 = vmatpush1.bf16.xpose.msra.mxu0 0
    %790 = vmatprep.subr.bf16.mxu0 0
    %791 = vmatpush1.bf16.xpose.msra.mxu0 0
    %792 = vmatprep.subr.bf16.mxu0 0
    %793 = vmatpush1.bf16.xpose.msra.mxu0 %v776
    %794 = vmatprep.subr.bf16.mxu0 0
    %795 = vmatpush2.bf16.xpose.msra.mxu0 0
    %796 = vmatprep.subr.bf16.mxu0 0
    %797 = vmatpush2.bf16.xpose.msra.mxu0 0
    %798 = vmatprep.subr.bf16.mxu0 0
    %799 = vmatpush2.bf16.xpose.msra.mxu0 0
    %800 = vmatprep.subr.bf16.mxu0 0
    %801 = vmatpush2.bf16.xpose.msra.mxu0 0
    %802 = vmatprep.subr.bf16.mxu0 0
    %803 = vmatpush2.bf16.xpose.msra.mxu0 0
    %804 = vmatprep.subr.bf16.mxu0 0
    %805 = vmatpush2.bf16.xpose.msra.mxu0 0
    %806 = vmatprep.subr.bf16.mxu0 0
    %807 = vmatpush2.bf16.xpose.msra.mxu0 0
    %808 = vmatprep.subr.bf16.mxu0 0
    %809 = vmatpush2.bf16.xpose.msra.mxu0 0
    %810 = vmatprep.mubr.bf16.mxu0 0
    %811 = vmatmul.mubr.bf16.gmra.mxu0 %v773
    %v812 = vpop.f32.mrf.mxu0
    %v813 = vadd.f32 0.0, %v812
    %v814 = vpop.f32.mrf.mxu0
    %v815 = vpop.f32.mrf.mxu0
    %v816 = vpop.f32.mrf.mxu0
    %817 = vdwg.mxu0
    %v818 = vsel %vm449, %v491, -inf
    %819 = vmax.xlane.f32.xlu0 %v818
    %v820 = vpop.xlane.xlu0 %819
    %v821 = vsel %vm449, %v537, -inf
    %822 = vmax.xlane.f32.xlu0 %v821
    %v823 = vpop.xlane.xlu0 %822
    %v824 = vsel %vm449, %v583, -inf
    %825 = vmax.xlane.f32.xlu0 %v824
    %v826 = vpop.xlane.xlu0 %825
    %v827 = vsel %vm449, %v629, -inf
    %828 = vmax.xlane.f32.xlu0 %v827
    %v829 = vpop.xlane.xlu0 %828
    %v830 = vsel %vm449, %v675, -inf
    %831 = vmax.xlane.f32.xlu0 %v830
    %v832 = vpop.xlane.xlu0 %831
    %v833 = vsel %vm449, %v721, -inf
    %834 = vmax.xlane.f32.xlu0 %v833
    %v835 = vpop.xlane.xlu0 %834
    %v836 = vsel %vm449, %v767, -inf
    %837 = vmax.xlane.f32.xlu0 %v836
    %v838 = vpop.xlane.xlu0 %837
    %v839 = vsel %vm449, %v813, -inf
    %840 = vmax.xlane.f32.xlu0 %v839
    %v841 = vpop.xlane.xlu0 %840
    %v842 = vsub.f32 %v491, %v820
    %v843 = vsub.f32 %v537, %v823
    %v844 = vsub.f32 %v583, %v826
    %v845 = vsub.f32 %v629, %v829
    %v846 = vsub.f32 %v675, %v832
    %v847 = vsub.f32 %v721, %v835
    %v848 = vsub.f32 %v767, %v838
    %v849 = vsub.f32 %v813, %v841
    %v850 = vmul.f32 %v842, 1.442695
    %v851 = vpow.pop %v850
    %v852 = vmul.f32 %v843, 1.442695
    %v853 = vpow.pop %v852
    %v854 = vmul.f32 %v844, 1.442695
    %v855 = vpow.pop %v854
    %v856 = vmul.f32 %v845, 1.442695
    %v857 = vpow.pop %v856
    %v858 = vmul.f32 %v846, 1.442695
    %v859 = vpow.pop %v858
    %v860 = vmul.f32 %v847, 1.442695
    %v861 = vpow.pop %v860
    %v862 = vmul.f32 %v848, 1.442695
    %v863 = vpow.pop %v862
    %v864 = vmul.f32 %v849, 1.442695
    %v865 = vpow.pop %v864
    %v866 = vsel %vm449, %v851, 0.0
    %867 = vadd.xlane.f32.xlu0 %v866
    %v868 = vpop.xlane.xlu0 %867
    %v869 = vsel %vm449, %v853, 0.0
    %870 = vadd.xlane.f32.xlu0 %v869
    %v871 = vpop.xlane.xlu0 %870
    %v872 = vsel %vm449, %v855, 0.0
    %873 = vadd.xlane.f32.xlu0 %v872
    %v874 = vpop.xlane.xlu0 %873
    %v875 = vsel %vm449, %v857, 0.0
    %876 = vadd.xlane.f32.xlu0 %v875
    %v877 = vpop.xlane.xlu0 %876
    %v878 = vsel %vm449, %v859, 0.0
    %879 = vadd.xlane.f32.xlu0 %v878
    %v880 = vpop.xlane.xlu0 %879
    %v881 = vsel %vm449, %v861, 0.0
    %882 = vadd.xlane.f32.xlu0 %v881
    %v883 = vpop.xlane.xlu0 %882
    %v884 = vsel %vm449, %v863, 0.0
    %885 = vadd.xlane.f32.xlu0 %v884
    %v886 = vpop.xlane.xlu0 %885
    %v887 = vsel %vm449, %v865, 0.0
    %888 = vadd.xlane.f32.xlu0 %v887
    %v889 = vpop.xlane.xlu0 %888
    %v890 = vrcp.pop %v868
    %v891 = vrcp.pop %v871
    %v892 = vrcp.pop %v874
    %v893 = vrcp.pop %v877
    %v894 = vrcp.pop %v880
    %v895 = vrcp.pop %v883
    %v896 = vrcp.pop %v886
    %v897 = vrcp.pop %v889
    %v898 = vmul.f32 %v851, %v890
    %v899 = vmul.f32 %v853, %v891
    %v900 = vmul.f32 %v855, %v892
    %v901 = vmul.f32 %v857, %v893
    %v902 = vmul.f32 %v859, %v894
    %v903 = vmul.f32 %v861, %v895
    %v904 = vmul.f32 %v863, %v896
    %v905 = vmul.f32 %v865, %v897
    %v906 = vpack.c.bf16 %v898, %v898
    %v907 = vpack.c.bf16 %v899, %v899
    %v908 = vpack.c.bf16 %v900, %v900
    %v909 = vpack.c.bf16 %v901, %v901
    %v910 = vpack.c.bf16 %v902, %v902
    %v911 = vpack.c.bf16 %v903, %v903
    %v912 = vpack.c.bf16 %v904, %v904
    %v913 = vpack.c.bf16 %v905, %v905
    %v915 = vsel %vm449, %v906, 0
    %vm917 = vcmask 1043456
    %v919 = vsel %vm917, %v441, 0
    %921 = vmatprep.subr.bf16.mxu0 0
    %922 = vmatpush1.bf16.msra.mxu0 0
    %923 = vmatprep.subr.bf16.mxu0 0
    %924 = vmatpush1.bf16.msra.mxu0 0
    %925 = vmatprep.subr.bf16.mxu0 0
    %926 = vmatpush1.bf16.msra.mxu0 0
    %927 = vmatprep.subr.bf16.mxu0 0
    %928 = vmatpush1.bf16.msra.mxu0 0
    %929 = vmatprep.subr.bf16.mxu0 0
    %930 = vmatpush1.bf16.msra.mxu0 0
    %931 = vmatprep.subr.bf16.mxu0 0
    %932 = vmatpush1.bf16.msra.mxu0 0
    %933 = vmatprep.subr.bf16.mxu0 0
    %934 = vmatpush1.bf16.msra.mxu0 0
    %935 = vmatprep.subr.bf16.mxu0 0
    %936 = vmatpush1.bf16.msra.mxu0 %v919
    %937 = vmatprep.subr.bf16.mxu0 0
    %938 = vmatpush2.bf16.msra.mxu0 0
    %939 = vmatprep.subr.bf16.mxu0 0
    %940 = vmatpush2.bf16.msra.mxu0 0
    %941 = vmatprep.subr.bf16.mxu0 0
    %942 = vmatpush2.bf16.msra.mxu0 0
    %943 = vmatprep.subr.bf16.mxu0 0
    %944 = vmatpush2.bf16.msra.mxu0 0
    %945 = vmatprep.subr.bf16.mxu0 0
    %946 = vmatpush2.bf16.msra.mxu0 0
    %947 = vmatprep.subr.bf16.mxu0 0
    %948 = vmatpush2.bf16.msra.mxu0 0
    %949 = vmatprep.subr.bf16.mxu0 0
    %950 = vmatpush2.bf16.msra.mxu0 0
    %951 = vmatprep.subr.bf16.mxu0 0
    %952 = vmatpush2.bf16.msra.mxu0 0
    %953 = vmatprep.mubr.bf16.mxu0 0
    %954 = vmatmul.mubr.bf16.gmra.mxu0 %v915
    %v955 = vpop.f32.mrf.mxu0
    %v956 = vadd.f32 0.0, %v955
    %v957 = vpop.f32.mrf.mxu0
    %v958 = vpop.f32.mrf.mxu0
    %v959 = vpop.f32.mrf.mxu0
    %960 = vdwg.mxu0
    %v962 = vsel %vm449, %v907, 0
    %v965 = vsel %vm917, %v442, 0
    %967 = vmatprep.subr.bf16.mxu0 0
    %968 = vmatpush1.bf16.msra.mxu0 0
    %969 = vmatprep.subr.bf16.mxu0 0
    %970 = vmatpush1.bf16.msra.mxu0 0
    %971 = vmatprep.subr.bf16.mxu0 0
    %972 = vmatpush1.bf16.msra.mxu0 0
    %973 = vmatprep.subr.bf16.mxu0 0
    %974 = vmatpush1.bf16.msra.mxu0 0
    %975 = vmatprep.subr.bf16.mxu0 0
    %976 = vmatpush1.bf16.msra.mxu0 0
    %977 = vmatprep.subr.bf16.mxu0 0
    %978 = vmatpush1.bf16.msra.mxu0 0
    %979 = vmatprep.subr.bf16.mxu0 0
    %980 = vmatpush1.bf16.msra.mxu0 0
    %981 = vmatprep.subr.bf16.mxu0 0
    %982 = vmatpush1.bf16.msra.mxu0 %v965
    %983 = vmatprep.subr.bf16.mxu0 0
    %984 = vmatpush2.bf16.msra.mxu0 0
    %985 = vmatprep.subr.bf16.mxu0 0
    %986 = vmatpush2.bf16.msra.mxu0 0
    %987 = vmatprep.subr.bf16.mxu0 0
    %988 = vmatpush2.bf16.msra.mxu0 0
    %989 = vmatprep.subr.bf16.mxu0 0
    %990 = vmatpush2.bf16.msra.mxu0 0
    %991 = vmatprep.subr.bf16.mxu0 0
    %992 = vmatpush2.bf16.msra.mxu0 0
    %993 = vmatprep.subr.bf16.mxu0 0
    %994 = vmatpush2.bf16.msra.mxu0 0
    %995 = vmatprep.subr.bf16.mxu0 0
    %996 = vmatpush2.bf16.msra.mxu0 0
    %997 = vmatprep.subr.bf16.mxu0 0
    %998 = vmatpush2.bf16.msra.mxu0 0
    %999 = vmatprep.mubr.bf16.mxu0 0
    %1000 = vmatmul.mubr.bf16.gmra.mxu0 %v962
    %v1001 = vpop.f32.mrf.mxu0
    %v1002 = vadd.f32 0.0, %v1001
    %v1003 = vpop.f32.mrf.mxu0
    %v1004 = vpop.f32.mrf.mxu0
    %v1005 = vpop.f32.mrf.mxu0
    %1006 = vdwg.mxu0
    %v1008 = vsel %vm449, %v908, 0
    %v1011 = vsel %vm917, %v443, 0
    %1013 = vmatprep.subr.bf16.mxu0 0
    %1014 = vmatpush1.bf16.msra.mxu0 0
    %1015 = vmatprep.subr.bf16.mxu0 0
    %1016 = vmatpush1.bf16.msra.mxu0 0
    %1017 = vmatprep.subr.bf16.mxu0 0
    %1018 = vmatpush1.bf16.msra.mxu0 0
    %1019 = vmatprep.subr.bf16.mxu0 0
    %1020 = vmatpush1.bf16.msra.mxu0 0
    %1021 = vmatprep.subr.bf16.mxu0 0
    %1022 = vmatpush1.bf16.msra.mxu0 0
    %1023 = vmatprep.subr.bf16.mxu0 0
    %1024 = vmatpush1.bf16.msra.mxu0 0
    %1025 = vmatprep.subr.bf16.mxu0 0
    %1026 = vmatpush1.bf16.msra.mxu0 0
    %1027 = vmatprep.subr.bf16.mxu0 0
    %1028 = vmatpush1.bf16.msra.mxu0 %v1011
    %1029 = vmatprep.subr.bf16.mxu0 0
    %1030 = vmatpush2.bf16.msra.mxu0 0
    %1031 = vmatprep.subr.bf16.mxu0 0
    %1032 = vmatpush2.bf16.msra.mxu0 0
    %1033 = vmatprep.subr.bf16.mxu0 0
    %1034 = vmatpush2.bf16.msra.mxu0 0
    %1035 = vmatprep.subr.bf16.mxu0 0
    %1036 = vmatpush2.bf16.msra.mxu0 0
    %1037 = vmatprep.subr.bf16.mxu0 0
    %1038 = vmatpush2.bf16.msra.mxu0 0
    %1039 = vmatprep.subr.bf16.mxu0 0
    %1040 = vmatpush2.bf16.msra.mxu0 0
    %1041 = vmatprep.subr.bf16.mxu0 0
    %1042 = vmatpush2.bf16.msra.mxu0 0
    %1043 = vmatprep.subr.bf16.mxu0 0
    %1044 = vmatpush2.bf16.msra.mxu0 0
    %1045 = vmatprep.mubr.bf16.mxu0 0
    %1046 = vmatmul.mubr.bf16.gmra.mxu0 %v1008
    %v1047 = vpop.f32.mrf.mxu0
    %v1048 = vadd.f32 0.0, %v1047
    %v1049 = vpop.f32.mrf.mxu0
    %v1050 = vpop.f32.mrf.mxu0
    %v1051 = vpop.f32.mrf.mxu0
    %1052 = vdwg.mxu0
    %v1054 = vsel %vm449, %v909, 0
    %v1057 = vsel %vm917, %v444, 0
    %1059 = vmatprep.subr.bf16.mxu0 0
    %1060 = vmatpush1.bf16.msra.mxu0 0
    %1061 = vmatprep.subr.bf16.mxu0 0
    %1062 = vmatpush1.bf16.msra.mxu0 0
    %1063 = vmatprep.subr.bf16.mxu0 0
    %1064 = vmatpush1.bf16.msra.mxu0 0
    %1065 = vmatprep.subr.bf16.mxu0 0
    %1066 = vmatpush1.bf16.msra.mxu0 0
    %1067 = vmatprep.subr.bf16.mxu0 0
    %1068 = vmatpush1.bf16.msra.mxu0 0
    %1069 = vmatprep.subr.bf16.mxu0 0
    %1070 = vmatpush1.bf16.msra.mxu0 0
    %1071 = vmatprep.subr.bf16.mxu0 0
    %1072 = vmatpush1.bf16.msra.mxu0 0
    %1073 = vmatprep.subr.bf16.mxu0 0
    %1074 = vmatpush1.bf16.msra.mxu0 %v1057
    %1075 = vmatprep.subr.bf16.mxu0 0
    %1076 = vmatpush2.bf16.msra.mxu0 0
    %1077 = vmatprep.subr.bf16.mxu0 0
    %1078 = vmatpush2.bf16.msra.mxu0 0
    %1079 = vmatprep.subr.bf16.mxu0 0
    %1080 = vmatpush2.bf16.msra.mxu0 0
    %1081 = vmatprep.subr.bf16.mxu0 0
    %1082 = vmatpush2.bf16.msra.mxu0 0
    %1083 = vmatprep.subr.bf16.mxu0 0
    %1084 = vmatpush2.bf16.msra.mxu0 0
    %1085 = vmatprep.subr.bf16.mxu0 0
    %1086 = vmatpush2.bf16.msra.mxu0 0
    %1087 = vmatprep.subr.bf16.mxu0 0
    %1088 = vmatpush2.bf16.msra.mxu0 0
    %1089 = vmatprep.subr.bf16.mxu0 0
    %1090 = vmatpush2.bf16.msra.mxu0 0
    %1091 = vmatprep.mubr.bf16.mxu0 0
    %1092 = vmatmul.mubr.bf16.gmra.mxu0 %v1054
    %v1093 = vpop.f32.mrf.mxu0
    %v1094 = vadd.f32 0.0, %v1093
    %v1095 = vpop.f32.mrf.mxu0
    %v1096 = vpop.f32.mrf.mxu0
    %v1097 = vpop.f32.mrf.mxu0
    %1098 = vdwg.mxu0
    %v1100 = vsel %vm449, %v910, 0
    %v1103 = vsel %vm917, %v445, 0
    %1105 = vmatprep.subr.bf16.mxu0 0
    %1106 = vmatpush1.bf16.msra.mxu0 0
    %1107 = vmatprep.subr.bf16.mxu0 0
    %1108 = vmatpush1.bf16.msra.mxu0 0
    %1109 = vmatprep.subr.bf16.mxu0 0
    %1110 = vmatpush1.bf16.msra.mxu0 0
    %1111 = vmatprep.subr.bf16.mxu0 0
    %1112 = vmatpush1.bf16.msra.mxu0 0
    %1113 = vmatprep.subr.bf16.mxu0 0
    %1114 = vmatpush1.bf16.msra.mxu0 0
    %1115 = vmatprep.subr.bf16.mxu0 0
    %1116 = vmatpush1.bf16.msra.mxu0 0
    %1117 = vmatprep.subr.bf16.mxu0 0
    %1118 = vmatpush1.bf16.msra.mxu0 0
    %1119 = vmatprep.subr.bf16.mxu0 0
    %1120 = vmatpush1.bf16.msra.mxu0 %v1103
    %1121 = vmatprep.subr.bf16.mxu0 0
    %1122 = vmatpush2.bf16.msra.mxu0 0
    %1123 = vmatprep.subr.bf16.mxu0 0
    %1124 = vmatpush2.bf16.msra.mxu0 0
    %1125 = vmatprep.subr.bf16.mxu0 0
    %1126 = vmatpush2.bf16.msra.mxu0 0
    %1127 = vmatprep.subr.bf16.mxu0 0
    %1128 = vmatpush2.bf16.msra.mxu0 0
    %1129 = vmatprep.subr.bf16.mxu0 0
    %1130 = vmatpush2.bf16.msra.mxu0 0
    %1131 = vmatprep.subr.bf16.mxu0 0
    %1132 = vmatpush2.bf16.msra.mxu0 0
    %1133 = vmatprep.subr.bf16.mxu0 0
    %1134 = vmatpush2.bf16.msra.mxu0 0
    %1135 = vmatprep.subr.bf16.mxu0 0
    %1136 = vmatpush2.bf16.msra.mxu0 0
    %1137 = vmatprep.mubr.bf16.mxu0 0
    %1138 = vmatmul.mubr.bf16.gmra.mxu0 %v1100
    %v1139 = vpop.f32.mrf.mxu0
    %v1140 = vadd.f32 0.0, %v1139
    %v1141 = vpop.f32.mrf.mxu0
    %v1142 = vpop.f32.mrf.mxu0
    %v1143 = vpop.f32.mrf.mxu0
    %1144 = vdwg.mxu0
    %v1146 = vsel %vm449, %v911, 0
    %v1149 = vsel %vm917, %v446, 0
    %1151 = vmatprep.subr.bf16.mxu0 0
    %1152 = vmatpush1.bf16.msra.mxu0 0
    %1153 = vmatprep.subr.bf16.mxu0 0
    %1154 = vmatpush1.bf16.msra.mxu0 0
    %1155 = vmatprep.subr.bf16.mxu0 0
    %1156 = vmatpush1.bf16.msra.mxu0 0
    %1157 = vmatprep.subr.bf16.mxu0 0
    %1158 = vmatpush1.bf16.msra.mxu0 0
    %1159 = vmatprep.subr.bf16.mxu0 0
    %1160 = vmatpush1.bf16.msra.mxu0 0
    %1161 = vmatprep.subr.bf16.mxu0 0
    %1162 = vmatpush1.bf16.msra.mxu0 0
    %1163 = vmatprep.subr.bf16.mxu0 0
    %1164 = vmatpush1.bf16.msra.mxu0 0
    %1165 = vmatprep.subr.bf16.mxu0 0
    %1166 = vmatpush1.bf16.msra.mxu0 %v1149
    %1167 = vmatprep.subr.bf16.mxu0 0
    %1168 = vmatpush2.bf16.msra.mxu0 0
    %1169 = vmatprep.subr.bf16.mxu0 0
    %1170 = vmatpush2.bf16.msra.mxu0 0
    %1171 = vmatprep.subr.bf16.mxu0 0
    %1172 = vmatpush2.bf16.msra.mxu0 0
    %1173 = vmatprep.subr.bf16.mxu0 0
    %1174 = vmatpush2.bf16.msra.mxu0 0
    %1175 = vmatprep.subr.bf16.mxu0 0
    %1176 = vmatpush2.bf16.msra.mxu0 0
    %1177 = vmatprep.subr.bf16.mxu0 0
    %1178 = vmatpush2.bf16.msra.mxu0 0
    %1179 = vmatprep.subr.bf16.mxu0 0
    %1180 = vmatpush2.bf16.msra.mxu0 0
    %1181 = vmatprep.subr.bf16.mxu0 0
    %1182 = vmatpush2.bf16.msra.mxu0 0
    %1183 = vmatprep.mubr.bf16.mxu0 0
    %1184 = vmatmul.mubr.bf16.gmra.mxu0 %v1146
    %v1185 = vpop.f32.mrf.mxu0
    %v1186 = vadd.f32 0.0, %v1185
    %v1187 = vpop.f32.mrf.mxu0
    %v1188 = vpop.f32.mrf.mxu0
    %v1189 = vpop.f32.mrf.mxu0
    %1190 = vdwg.mxu0
    %v1192 = vsel %vm449, %v912, 0
    %v1195 = vsel %vm917, %v447, 0
    %1197 = vmatprep.subr.bf16.mxu0 0
    %1198 = vmatpush1.bf16.msra.mxu0 0
    %1199 = vmatprep.subr.bf16.mxu0 0
    %1200 = vmatpush1.bf16.msra.mxu0 0
    %1201 = vmatprep.subr.bf16.mxu0 0
    %1202 = vmatpush1.bf16.msra.mxu0 0
    %1203 = vmatprep.subr.bf16.mxu0 0
    %1204 = vmatpush1.bf16.msra.mxu0 0
    %1205 = vmatprep.subr.bf16.mxu0 0
    %1206 = vmatpush1.bf16.msra.mxu0 0
    %1207 = vmatprep.subr.bf16.mxu0 0
    %1208 = vmatpush1.bf16.msra.mxu0 0
    %1209 = vmatprep.subr.bf16.mxu0 0
    %1210 = vmatpush1.bf16.msra.mxu0 0
    %1211 = vmatprep.subr.bf16.mxu0 0
    %1212 = vmatpush1.bf16.msra.mxu0 %v1195
    %1213 = vmatprep.subr.bf16.mxu0 0
    %1214 = vmatpush2.bf16.msra.mxu0 0
    %1215 = vmatprep.subr.bf16.mxu0 0
    %1216 = vmatpush2.bf16.msra.mxu0 0
    %1217 = vmatprep.subr.bf16.mxu0 0
    %1218 = vmatpush2.bf16.msra.mxu0 0
    %1219 = vmatprep.subr.bf16.mxu0 0
    %1220 = vmatpush2.bf16.msra.mxu0 0
    %1221 = vmatprep.subr.bf16.mxu0 0
    %1222 = vmatpush2.bf16.msra.mxu0 0
    %1223 = vmatprep.subr.bf16.mxu0 0
    %1224 = vmatpush2.bf16.msra.mxu0 0
    %1225 = vmatprep.subr.bf16.mxu0 0
    %1226 = vmatpush2.bf16.msra.mxu0 0
    %1227 = vmatprep.subr.bf16.mxu0 0
    %1228 = vmatpush2.bf16.msra.mxu0 0
    %1229 = vmatprep.mubr.bf16.mxu0 0
    %1230 = vmatmul.mubr.bf16.gmra.mxu0 %v1192
    %v1231 = vpop.f32.mrf.mxu0
    %v1232 = vadd.f32 0.0, %v1231
    %v1233 = vpop.f32.mrf.mxu0
    %v1234 = vpop.f32.mrf.mxu0
    %v1235 = vpop.f32.mrf.mxu0
    %1236 = vdwg.mxu0
    %v1238 = vsel %vm449, %v913, 0
    %v1241 = vsel %vm917, %v448, 0
    %1243 = vmatprep.subr.bf16.mxu0 0
    %1244 = vmatpush1.bf16.msra.mxu0 0
    %1245 = vmatprep.subr.bf16.mxu0 0
    %1246 = vmatpush1.bf16.msra.mxu0 0
    %1247 = vmatprep.subr.bf16.mxu0 0
    %1248 = vmatpush1.bf16.msra.mxu0 0
    %1249 = vmatprep.subr.bf16.mxu0 0
    %1250 = vmatpush1.bf16.msra.mxu0 0
    %1251 = vmatprep.subr.bf16.mxu0 0
    %1252 = vmatpush1.bf16.msra.mxu0 0
    %1253 = vmatprep.subr.bf16.mxu0 0
    %1254 = vmatpush1.bf16.msra.mxu0 0
    %1255 = vmatprep.subr.bf16.mxu0 0
    %1256 = vmatpush1.bf16.msra.mxu0 0
    %1257 = vmatprep.subr.bf16.mxu0 0
    %1258 = vmatpush1.bf16.msra.mxu0 %v1241
    %1259 = vmatprep.subr.bf16.mxu0 0
    %1260 = vmatpush2.bf16.msra.mxu0 0
    %1261 = vmatprep.subr.bf16.mxu0 0
    %1262 = vmatpush2.bf16.msra.mxu0 0
    %1263 = vmatprep.subr.bf16.mxu0 0
    %1264 = vmatpush2.bf16.msra.mxu0 0
    %1265 = vmatprep.subr.bf16.mxu0 0
    %1266 = vmatpush2.bf16.msra.mxu0 0
    %1267 = vmatprep.subr.bf16.mxu0 0
    %1268 = vmatpush2.bf16.msra.mxu0 0
    %1269 = vmatprep.subr.bf16.mxu0 0
    %1270 = vmatpush2.bf16.msra.mxu0 0
    %1271 = vmatprep.subr.bf16.mxu0 0
    %1272 = vmatpush2.bf16.msra.mxu0 0
    %1273 = vmatprep.subr.bf16.mxu0 0
    %1274 = vmatpush2.bf16.msra.mxu0 0
    %1275 = vmatprep.mubr.bf16.mxu0 0
    %1276 = vmatmul.mubr.bf16.gmra.mxu0 %v1238
    %v1277 = vpop.f32.mrf.mxu0
    %v1278 = vadd.f32 0.0, %v1277
    %v1279 = vpop.f32.mrf.mxu0
    %v1280 = vpop.f32.mrf.mxu0
    %v1281 = vpop.f32.mrf.mxu0
    %1282 = vdwg.mxu0
    %1285 = vrot.lane.b32.xlu0 %v1048, 8
    %v1286 = vpop.permute.xlu0 %1285
    %1287 = vrot.lane.b32.xlu0 %v1094, 8
    %v1288 = vpop.permute.xlu0 %1287
    %1293 = vrot.lane.b32.xlu0 %v1140, 16
    %v1294 = vpop.permute.xlu0 %1293
    %1295 = vrot.lane.b32.xlu0 %v1186, 16
    %v1296 = vpop.permute.xlu0 %1295
    %1301 = vrot.lane.b32.xlu0 %v1232, 24
    %v1302 = vpop.permute.xlu0 %1301
    %1303 = vrot.lane.b32.xlu0 %v1278, 24
    %v1304 = vpop.permute.xlu0 %1303
    %v1307 = vsel %vm449, %v956, %v1286
    %v1308 = vsel %vm449, %v1002, %v1288
    %vm1309 = vcmask 130048
    %v1310 = vsel %vm1309, %v1307, %v1294
    %v1311 = vsel %vm1309, %v1308, %v1296
    %vm1312 = vcmask 195584
    %v1313 = vsel %vm1312, %v1310, %v1302
    %v1314 = vsel %vm1312, %v1311, %v1304
    %v1315 = vpack.c.bf16 %v1314, %v1313
    %v1316 = vlaneseq
    %v1317 = vshrl.u32 %v1316, 7
    %v1318 = vsub.s32 3, %v1317
    %v1319 = vrot.slane %v184, %v1318
    %v1324 = vunpack.c.l.b16 %v168
    %v1325 = vunpack.c.l.b16 %v169
    %v1326 = vunpack.c.l.b16 %v170
    %v1327 = vunpack.c.l.b16 %v171
    %v1328 = vpack.c.b16 %v1325, %v1324
    %v1329 = vpack.c.b16 %v1327, %v1326
    %v1333 = vsel %vm204, %v1315, 0
    %1335 = vmatprep.subr.bf16.mxu0 0
    %1336 = vmatpush1.bf16.msra.mxu0 0
    %1337 = vmatprep.subr.bf16.mxu0 0
    %1338 = vmatpush1.bf16.msra.mxu0 0
    %1339 = vmatprep.subr.bf16.mxu0 0
    %1340 = vmatpush1.bf16.msra.mxu0 0
    %1341 = vmatprep.subr.bf16.mxu0 0
    %1342 = vmatpush1.bf16.msra.mxu0 0
    %1343 = vmatprep.subr.bf16.mxu0 0
    %1344 = vmatpush1.bf16.msra.mxu0 0
    %1345 = vmatprep.subr.bf16.mxu0 0
    %1346 = vmatpush1.bf16.msra.mxu0 0
    %1347 = vmatprep.subr.bf16.mxu0 0
    %1348 = vmatpush1.bf16.msra.mxu0 %v1329
    %1349 = vmatprep.subr.bf16.mxu0 0
    %1350 = vmatpush1.bf16.msra.mxu0 %v1328
    %1351 = vmatprep.subr.bf16.mxu0 0
    %1352 = vmatpush2.bf16.msra.mxu0 0
    %1353 = vmatprep.subr.bf16.mxu0 0
    %1354 = vmatpush2.bf16.msra.mxu0 0
    %1355 = vmatprep.subr.bf16.mxu0 0
    %1356 = vmatpush2.bf16.msra.mxu0 0
    %1357 = vmatprep.subr.bf16.mxu0 0
    %1358 = vmatpush2.bf16.msra.mxu0 0
    %1359 = vmatprep.subr.bf16.mxu0 0
    %1360 = vmatpush2.bf16.msra.mxu0 0
    %1361 = vmatprep.subr.bf16.mxu0 0
    %1362 = vmatpush2.bf16.msra.mxu0 0
    %1363 = vmatprep.subr.bf16.mxu0 0
    %1364 = vmatpush2.bf16.msra.mxu0 0
    %1365 = vmatprep.subr.bf16.mxu0 0
    %1366 = vmatpush2.bf16.msra.mxu0 0
    %1367 = vmatprep.mubr.bf16.mxu0 0
    %1368 = vmatmul.mubr.bf16.gmra.mxu0 %v1333
    %v1369 = vpop.f32.mrf.mxu0
    %v1370 = vadd.f32 %v1319, %v1369
    %v1371 = vpop.f32.mrf.mxu0
    %v1372 = vpop.f32.mrf.mxu0
    %v1373 = vadd.f32 %v1319, %v1372
    %v1374 = vpop.f32.mrf.mxu0
    %1375 = vdwg.mxu0
    %v1376 = vadd.f32 %v147, %v1370
    %v1377 = vadd.f32 %v150, %v1373
    %v1378 = vsel %vm204, %v1376, 0.0
    %1379 = vadd.xlane.f32.xlu0 %v1378
    %v1380 = vpop.xlane.xlu0 %1379
    %v1381 = vsel %vm204, %v1377, 0.0
    %1382 = vadd.xlane.f32.xlu0 %v1381
    %v1383 = vpop.xlane.xlu0 %1382
    %v1384 = vrcp.pop 32.0
    %v1385 = vmul.f32 %v1380, %v1384
    %v1386 = vmul.f32 %v1383, %v1384
    %v1387 = vmul.f32 %v1376, %v1376
    %v1388 = vmul.f32 %v1377, %v1377
    %v1389 = vsel %vm204, %v1387, 0.0
    %1390 = vadd.xlane.f32.xlu0 %v1389
    %v1391 = vpop.xlane.xlu0 %1390
    %v1392 = vsel %vm204, %v1388, 0.0
    %1393 = vadd.xlane.f32.xlu0 %v1392
    %v1394 = vpop.xlane.xlu0 %1393
    %v1395 = vmul.f32 %v1391, %v1384
    %v1396 = vmul.f32 %v1394, %v1384
    %v1397 = vmul.f32 %v1385, %v1385
    %v1398 = vmul.f32 %v1386, %v1386
    %v1399 = vsub.f32 %v1395, %v1397
    %v1400 = vsub.f32 %v1396, %v1398
    %v1401 = vsub.f32 %v1376, %v1385
    %v1402 = vsub.f32 %v1377, %v1386
    %v1403 = vadd.f32 %v1399, 1e-05
    %v1404 = vadd.f32 %v1400, 1e-05
    %v1405 = vrsqrt.pop %v1403
    %v1406 = vrsqrt.pop %v1404
    %v1407 = vmul.f32 %v1401, %v1405
    %v1408 = vmul.f32 %v1402, %v1406
    %v1409 = vlaneseq
    %v1410 = vshrl.u32 %v1409, 7
    %v1411 = vsub.s32 0, %v1410
    %v1412 = vrot.slane %v186, %v1411
    %v1413 = vmul.f32 %v1407, %v1412
    %v1414 = vmul.f32 %v1408, %v1412
    %v1415 = vlaneseq
    %v1416 = vshrl.u32 %v1415, 7
    %v1417 = vsub.s32 1, %v1416
    %v1418 = vrot.slane %v186, %v1417
    %v1419 = vadd.f32 %v1413, %v1418
    %v1420 = vadd.f32 %v1414, %v1418
    %v1421 = vpack.c.bf16 %v1420, %v1419
    %v1423 = vlaneseq
    %v1424 = vshrl.u32 %v1423, 7
    %v1425 = vsub.s32 0, %v1424
    %v1426 = vrot.slane %v185, %v1425
    %v1432 = vunpack.c.l.b16 %v172
    %v1433 = vunpack.c.l.b16 %v173
    %v1434 = vunpack.c.l.b16 %v174
    %v1435 = vunpack.c.l.b16 %v175
    %v1436 = vpack.c.b16 %v1433, %v1432
    %v1437 = vpack.c.b16 %v1435, %v1434
    %v1441 = vsel %vm204, %v1421, 0
    %1443 = vmatprep.subr.bf16.mxu0 0
    %1444 = vmatpush1.bf16.msra.mxu0 0
    %1445 = vmatprep.subr.bf16.mxu0 0
    %1446 = vmatpush1.bf16.msra.mxu0 0
    %1447 = vmatprep.subr.bf16.mxu0 0
    %1448 = vmatpush1.bf16.msra.mxu0 0
    %1449 = vmatprep.subr.bf16.mxu0 0
    %1450 = vmatpush1.bf16.msra.mxu0 0
    %1451 = vmatprep.subr.bf16.mxu0 0
    %1452 = vmatpush1.bf16.msra.mxu0 0
    %1453 = vmatprep.subr.bf16.mxu0 0
    %1454 = vmatpush1.bf16.msra.mxu0 0
    %1455 = vmatprep.subr.bf16.mxu0 0
    %1456 = vmatpush1.bf16.msra.mxu0 %v1437
    %1457 = vmatprep.subr.bf16.mxu0 0
    %1458 = vmatpush1.bf16.msra.mxu0 %v1436
    %1459 = vmatprep.subr.bf16.mxu0 0
    %1460 = vmatpush2.bf16.msra.mxu0 0
    %1461 = vmatprep.subr.bf16.mxu0 0
    %1462 = vmatpush2.bf16.msra.mxu0 0
    %1463 = vmatprep.subr.bf16.mxu0 0
    %1464 = vmatpush2.bf16.msra.mxu0 0
    %1465 = vmatprep.subr.bf16.mxu0 0
    %1466 = vmatpush2.bf16.msra.mxu0 0
    %1467 = vmatprep.subr.bf16.mxu0 0
    %1468 = vmatpush2.bf16.msra.mxu0 0
    %1469 = vmatprep.subr.bf16.mxu0 0
    %1470 = vmatpush2.bf16.msra.mxu0 0
    %1471 = vmatprep.subr.bf16.mxu0 0
    %1472 = vmatpush2.bf16.msra.mxu0 0
    %1473 = vmatprep.subr.bf16.mxu0 0
    %1474 = vmatpush2.bf16.msra.mxu0 0
    %1475 = vmatprep.mubr.bf16.mxu0 0
    %1476 = vmatmul.mubr.bf16.gmra.mxu0 %v1441
    %v1477 = vpop.f32.mrf.mxu0
    %v1478 = vadd.f32 %v1426, %v1477
    %v1479 = vpop.f32.mrf.mxu0
    %v1480 = vpop.f32.mrf.mxu0
    %v1481 = vadd.f32 %v1426, %v1480
    %v1482 = vpop.f32.mrf.mxu0
    %1483 = vdwg.mxu0
    %v1484 = vmul.f32 %v1478, %v1478
    %v1485 = vmul.f32 %v1481, %v1481
    %v1486 = vmul.f32 %v1478, %v1484
    %v1487 = vmul.f32 %v1481, %v1485
    %v1488 = vmul.f32 %v1486, 0.044715
    %v1489 = vmul.f32 %v1487, 0.044715
    %v1490 = vadd.f32 %v1478, %v1488
    %v1491 = vadd.f32 %v1481, %v1489
    %v1492 = vmul.f32 %v1490, 0.7978846
    %v1493 = vmul.f32 %v1491, 0.7978846
    %v1494 = vtanh.pop %v1492
    %v1495 = vtanh.pop %v1493
    %v1496 = vadd.f32 %v1494, 1.0
    %v1497 = vadd.f32 %v1495, 1.0
    %v1498 = vmul.f32 %v1496, 0.5
    %v1499 = vmul.f32 %v1497, 0.5
    %v1500 = vmul.f32 %v1478, %v1498
    %v1501 = vmul.f32 %v1481, %v1499
    %v1502 = vpack.c.bf16 %v1501, %v1500
    %v1503 = vlaneseq
    %v1504 = vshrl.u32 %v1503, 7
    %v1505 = vsub.s32 4, %v1504
    %v1506 = vrot.slane %v184, %v1505
    %v1515 = vunpack.c.l.b16 %v176
    %v1516 = vunpack.c.l.b16 %v177
    %v1517 = vunpack.c.l.b16 %v178
    %v1518 = vunpack.c.l.b16 %v179
    %v1519 = vunpack.c.l.b16 %v180
    %v1520 = vunpack.c.l.b16 %v181
    %v1521 = vunpack.c.l.b16 %v182
    %v1522 = vunpack.c.l.b16 %v183
    %v1523 = vpack.c.b16 %v1516, %v1515
    %v1524 = vpack.c.b16 %v1518, %v1517
    %v1525 = vpack.c.b16 %v1520, %v1519
    %v1526 = vpack.c.b16 %v1522, %v1521
    %vm1531 = vcmask 523264
    %v1533 = vsel %vm1531, %v1502, 0
    %1535 = vmatprep.subr.bf16.mxu0 0
    %1536 = vmatpush1.bf16.msra.mxu0 0
    %1537 = vmatprep.subr.bf16.mxu0 0
    %1538 = vmatpush1.bf16.msra.mxu0 0
    %1539 = vmatprep.subr.bf16.mxu0 0
    %1540 = vmatpush1.bf16.msra.mxu0 0
    %1541 = vmatprep.subr.bf16.mxu0 0
    %1542 = vmatpush1.bf16.msra.mxu0 0
    %1543 = vmatprep.subr.bf16.mxu0 0
    %1544 = vmatpush1.bf16.msra.mxu0 %v1526
    %1545 = vmatprep.subr.bf16.mxu0 0
    %1546 = vmatpush1.bf16.msra.mxu0 %v1525
    %1547 = vmatprep.subr.bf16.mxu0 0
    %1548 = vmatpush1.bf16.msra.mxu0 %v1524
    %1549 = vmatprep.subr.bf16.mxu0 0
    %1550 = vmatpush1.bf16.msra.mxu0 %v1523
    %1551 = vmatprep.subr.bf16.mxu0 0
    %1552 = vmatpush2.bf16.msra.mxu0 0
    %1553 = vmatprep.subr.bf16.mxu0 0
    %1554 = vmatpush2.bf16.msra.mxu0 0
    %1555 = vmatprep.subr.bf16.mxu0 0
    %1556 = vmatpush2.bf16.msra.mxu0 0
    %1557 = vmatprep.subr.bf16.mxu0 0
    %1558 = vmatpush2.bf16.msra.mxu0 0
    %1559 = vmatprep.subr.bf16.mxu0 0
    %1560 = vmatpush2.bf16.msra.mxu0 0
    %1561 = vmatprep.subr.bf16.mxu0 0
    %1562 = vmatpush2.bf16.msra.mxu0 0
    %1563 = vmatprep.subr.bf16.mxu0 0
    %1564 = vmatpush2.bf16.msra.mxu0 0
    %1565 = vmatprep.subr.bf16.mxu0 0
    %1566 = vmatpush2.bf16.msra.mxu0 0
    %1567 = vmatprep.mubr.bf16.mxu0 0
    %1568 = vmatmul.mubr.bf16.gmra.mxu0 %v1533
    %v1569 = vpop.f32.mrf.mxu0
    %v1570 = vadd.f32 %v1506, %v1569
    %v1571 = vpop.f32.mrf.mxu0
    %v1572 = vpop.f32.mrf.mxu0
    %v1573 = vadd.f32 %v1506, %v1572
    %v1574 = vpop.f32.mrf.mxu0
    %1575 = vdwg.mxu0
    %v1576 = vadd.f32 %v1419, %v1570
    %v1577 = vadd.f32 %v1420, %v1573
    %v1578 = vsel %vm204, %v1576, 0.0
    %1579 = vadd.xlane.f32.xlu0 %v1578
    %v1580 = vpop.xlane.xlu0 %1579
    %v1581 = vsel %vm204, %v1577, 0.0
    %1582 = vadd.xlane.f32.xlu0 %v1581
    %v1583 = vpop.xlane.xlu0 %1582
    %v1584 = vmul.f32 %v1580, %v1384
    %v1585 = vmul.f32 %v1583, %v1384
    %v1586 = vmul.f32 %v1576, %v1576
    %v1587 = vmul.f32 %v1577, %v1577
    %v1588 = vsel %vm204, %v1586, 0.0
    %1589 = vadd.xlane.f32.xlu0 %v1588
    %v1590 = vpop.xlane.xlu0 %1589
    %v1591 = vsel %vm204, %v1587, 0.0
    %1592 = vadd.xlane.f32.xlu0 %v1591
    %v1593 = vpop.xlane.xlu0 %1592
    %v1594 = vmul.f32 %v1590, %v1384
    %v1595 = vmul.f32 %v1593, %v1384
    %v1596 = vmul.f32 %v1584, %v1584
    %v1597 = vmul.f32 %v1585, %v1585
    %v1598 = vsub.f32 %v1594, %v1596
    %v1599 = vsub.f32 %v1595, %v1597
    %v1600 = vsub.f32 %v1576, %v1584
    %v1601 = vsub.f32 %v1577, %v1585
    %v1602 = vadd.f32 %v1598, 1e-05
    %v1603 = vadd.f32 %v1599, 1e-05
    %v1604 = vrsqrt.pop %v1602
    %v1605 = vrsqrt.pop %v1603
    %v1606 = vmul.f32 %v1600, %v1604
    %v1607 = vmul.f32 %v1601, %v1605
    %v1608 = vlaneseq
    %v1609 = vshrl.u32 %v1608, 7
    %v1610 = vsub.s32 2, %v1609
    %v1611 = vrot.slane %v186, %v1610
    %v1612 = vmul.f32 %v1606, %v1611
    %v1613 = vmul.f32 %v1607, %v1611
    %v1614 = vlaneseq
    %v1615 = vshrl.u32 %v1614, 7
    %v1616 = vsub.s32 3, %v1615
    %v1617 = vrot.slane %v186, %v1616
    %v1618 = vadd.f32 %v1612, %v1617
    %v1619 = vadd.f32 %v1613, %v1617
    %s1620 = scalar_lea.vmem %s2, 64
    %v1621 = vld [vmem:[%s1620] sm:$0xf]
    %v1622 = vld [vmem:[%s1620 + $0x4] sm:$0xf]
    %v1623 = vld [vmem:[%s1620 + $0x8] sm:$0xf]
    %v1624 = vld [vmem:[%s1620 + $0xc] sm:$0xf]
    %s1625 = scalar_lea.vmem %s2, 80
    %v1626 = vld [vmem:[%s1625] sm:$0xf]
    %v1627 = vld [vmem:[%s1625 + $0x4] sm:$0xf]
    %v1628 = vld [vmem:[%s1625 + $0x8] sm:$0xf]
    %v1629 = vld [vmem:[%s1625 + $0xc] sm:$0xf]
    %s1630 = scalar_lea.vmem %s2, 96
    %v1631 = vld [vmem:[%s1630] sm:$0xf]
    %v1632 = vld [vmem:[%s1630 + $0x4] sm:$0xf]
    %v1633 = vld [vmem:[%s1630 + $0x8] sm:$0xf]
    %v1634 = vld [vmem:[%s1630 + $0xc] sm:$0xf]
    %s1635 = scalar_lea.vmem %s2, 112
    %v1636 = vld [vmem:[%s1635] sm:$0xf]
    %v1637 = vld [vmem:[%s1635 + $0x4] sm:$0xf]
    %v1638 = vld [vmem:[%s1635 + $0x8] sm:$0xf]
    %v1639 = vld [vmem:[%s1635 + $0xc] sm:$0xf]
    %s1640 = scalar_lea.vmem %s3, 16
    %v1641 = vld [vmem:[%s1640] sm:$0xf]
    %v1642 = vld [vmem:[%s1640 + $0x4] sm:$0xf]
    %v1643 = vld [vmem:[%s1640 + $0x8] sm:$0xf]
    %v1644 = vld [vmem:[%s1640 + $0xc] sm:$0xf]
    %s1645 = scalar_lea.vmem %s4, 32
    %v1646 = vld [vmem:[%s1645] sm:$0xf]
    %v1647 = vld [vmem:[%s1645 + $0x4] sm:$0xf]
    %v1648 = vld [vmem:[%s1645 + $0x8] sm:$0xf]
    %v1649 = vld [vmem:[%s1645 + $0xc] sm:$0xf]
    %v1650 = vld [vmem:[%s1645 + $0x10] sm:$0xf]
    %v1651 = vld [vmem:[%s1645 + $0x14] sm:$0xf]
    %v1652 = vld [vmem:[%s1645 + $0x18] sm:$0xf]
    %v1653 = vld [vmem:[%s1645 + $0x1c] sm:$0xf]
    %s1654 = scalar_lea.vmem %s5, 8
    %v1655 = vld [vmem:[%s1654] sm:$0x1f]
    %s1656 = scalar_lea.vmem %s6, 1
    %v1657 = vld [vmem:[%s1656] sm:$0x1]
    %s1658 = scalar_lea.vmem %s7, 4
    %v1659 = vld [vmem:[%s1658] sm:$0xf]
    %v1660 = vpack.c.bf16 %v1619, %v1618
    %v1661 = vlaneseq
    %v1662 = vshrl.u32 %v1661, 7
    %v1663 = vsub.s32 0, %v1662
    %v1664 = vrot.slane %v1655, %v1663
    %v1669 = vunpack.c.l.b16 %v1621
    %v1670 = vunpack.c.l.b16 %v1622
    %v1671 = vunpack.c.l.b16 %v1623
    %v1672 = vunpack.c.l.b16 %v1624
    %v1673 = vpack.c.b16 %v1670, %v1669
    %v1674 = vpack.c.b16 %v1672, %v1671
    %v1678 = vsel %vm204, %v1660, 0
    %1680 = vmatprep.subr.bf16.mxu0 0
    %1681 = vmatpush1.bf16.msra.mxu0 0
    %1682 = vmatprep.subr.bf16.mxu0 0
    %1683 = vmatpush1.bf16.msra.mxu0 0
    %1684 = vmatprep.subr.bf16.mxu0 0
    %1685 = vmatpush1.bf16.msra.mxu0 0
    %1686 = vmatprep.subr.bf16.mxu0 0
    %1687 = vmatpush1.bf16.msra.mxu0 0
    %1688 = vmatprep.subr.bf16.mxu0 0
    %1689 = vmatpush1.bf16.msra.mxu0 0
    %1690 = vmatprep.subr.bf16.mxu0 0
    %1691 = vmatpush1.bf16.msra.mxu0 0
    %1692 = vmatprep.subr.bf16.mxu0 0
    %1693 = vmatpush1.bf16.msra.mxu0 %v1674
    %1694 = vmatprep.subr.bf16.mxu0 0
    %1695 = vmatpush1.bf16.msra.mxu0 %v1673
    %1696 = vmatprep.subr.bf16.mxu0 0
    %1697 = vmatpush2.bf16.msra.mxu0 0
    %1698 = vmatprep.subr.bf16.mxu0 0
    %1699 = vmatpush2.bf16.msra.mxu0 0
    %1700 = vmatprep.subr.bf16.mxu0 0
    %1701 = vmatpush2.bf16.msra.mxu0 0
    %1702 = vmatprep.subr.bf16.mxu0 0
    %1703 = vmatpush2.bf16.msra.mxu0 0
    %1704 = vmatprep.subr.bf16.mxu0 0
    %1705 = vmatpush2.bf16.msra.mxu0 0
    %1706 = vmatprep.subr.bf16.mxu0 0
    %1707 = vmatpush2.bf16.msra.mxu0 0
    %1708 = vmatprep.subr.bf16.mxu0 0
    %1709 = vmatpush2.bf16.msra.mxu0 0
    %1710 = vmatprep.subr.bf16.mxu0 0
    %1711 = vmatpush2.bf16.msra.mxu0 0
    %1712 = vmatprep.mubr.bf16.mxu0 0
    %1713 = vmatmul.mubr.bf16.gmra.mxu0 %v1678
    %v1714 = vpop.f32.mrf.mxu0
    %v1715 = vadd.f32 %v1664, %v1714
    %v1716 = vpop.f32.mrf.mxu0
    %v1717 = vpop.f32.mrf.mxu0
    %v1718 = vadd.f32 %v1664, %v1717
    %v1719 = vpop.f32.mrf.mxu0
    %1720 = vdwg.mxu0
    %v1721 = vlaneseq
    %v1722 = vshrl.u32 %v1721, 7
    %v1723 = vsub.s32 1, %v1722
    %v1724 = vrot.slane %v1655, %v1723
    %v1729 = vunpack.c.l.b16 %v1626
    %v1730 = vunpack.c.l.b16 %v1627
    %v1731 = vunpack.c.l.b16 %v1628
    %v1732 = vunpack.c.l.b16 %v1629
    %v1733 = vpack.c.b16 %v1730, %v1729
    %v1734 = vpack.c.b16 %v1732, %v1731
    %1737 = vmatprep.subr.bf16.mxu0 0
    %1738 = vmatpush1.bf16.msra.mxu0 0
    %1739 = vmatprep.subr.bf16.mxu0 0
    %1740 = vmatpush1.bf16.msra.mxu0 0
    %1741 = vmatprep.subr.bf16.mxu0 0
    %1742 = vmatpush1.bf16.msra.mxu0 0
    %1743 = vmatprep.subr.bf16.mxu0 0
    %1744 = vmatpush1.bf16.msra.mxu0 0
    %1745 = vmatprep.subr.bf16.mxu0 0
    %1746 = vmatpush1.bf16.msra.mxu0 0
    %1747 = vmatprep.subr.bf16.mxu0 0
    %1748 = vmatpush1.bf16.msra.mxu0 0
    %1749 = vmatprep.subr.bf16.mxu0 0
    %1750 = vmatpush1.bf16.msra.mxu0 %v1734
    %1751 = vmatprep.subr.bf16.mxu0 0
    %1752 = vmatpush1.bf16.msra.mxu0 %v1733
    %1753 = vmatprep.subr.bf16.mxu0 0
    %1754 = vmatpush2.bf16.msra.mxu0 0
    %1755 = vmatprep.subr.bf16.mxu0 0
    %1756 = vmatpush2.bf16.msra.mxu0 0
    %1757 = vmatprep.subr.bf16.mxu0 0
    %1758 = vmatpush2.bf16.msra.mxu0 0
    %1759 = vmatprep.subr.bf16.mxu0 0
    %1760 = vmatpush2.bf16.msra.mxu0 0
    %1761 = vmatprep.subr.bf16.mxu0 0
    %1762 = vmatpush2.bf16.msra.mxu0 0
    %1763 = vmatprep.subr.bf16.mxu0 0
    %1764 = vmatpush2.bf16.msra.mxu0 0
    %1765 = vmatprep.subr.bf16.mxu0 0
    %1766 = vmatpush2.bf16.msra.mxu0 0
    %1767 = vmatprep.subr.bf16.mxu0 0
    %1768 = vmatpush2.bf16.msra.mxu0 0
    %1769 = vmatprep.mubr.bf16.mxu0 0
    %1770 = vmatmul.mubr.bf16.gmra.mxu0 %v1678
    %v1771 = vpop.f32.mrf.mxu0
    %v1772 = vadd.f32 %v1724, %v1771
    %v1773 = vpop.f32.mrf.mxu0
    %v1774 = vpop.f32.mrf.mxu0
    %v1775 = vadd.f32 %v1724, %v1774
    %v1776 = vpop.f32.mrf.mxu0
    %1777 = vdwg.mxu0
    %v1778 = vlaneseq
    %v1779 = vshrl.u32 %v1778, 7
    %v1780 = vsub.s32 2, %v1779
    %v1781 = vrot.slane %v1655, %v1780
    %v1786 = vunpack.c.l.b16 %v1631
    %v1787 = vunpack.c.l.b16 %v1632
    %v1788 = vunpack.c.l.b16 %v1633
    %v1789 = vunpack.c.l.b16 %v1634
    %v1790 = vpack.c.b16 %v1787, %v1786
    %v1791 = vpack.c.b16 %v1789, %v1788
    %1794 = vmatprep.subr.bf16.mxu0 0
    %1795 = vmatpush1.bf16.msra.mxu0 0
    %1796 = vmatprep.subr.bf16.mxu0 0
    %1797 = vmatpush1.bf16.msra.mxu0 0
    %1798 = vmatprep.subr.bf16.mxu0 0
    %1799 = vmatpush1.bf16.msra.mxu0 0
    %1800 = vmatprep.subr.bf16.mxu0 0
    %1801 = vmatpush1.bf16.msra.mxu0 0
    %1802 = vmatprep.subr.bf16.mxu0 0
    %1803 = vmatpush1.bf16.msra.mxu0 0
    %1804 = vmatprep.subr.bf16.mxu0 0
    %1805 = vmatpush1.bf16.msra.mxu0 0
    %1806 = vmatprep.subr.bf16.mxu0 0
    %1807 = vmatpush1.bf16.msra.mxu0 %v1791
    %1808 = vmatprep.subr.bf16.mxu0 0
    %1809 = vmatpush1.bf16.msra.mxu0 %v1790
    %1810 = vmatprep.subr.bf16.mxu0 0
    %1811 = vmatpush2.bf16.msra.mxu0 0
    %1812 = vmatprep.subr.bf16.mxu0 0
    %1813 = vmatpush2.bf16.msra.mxu0 0
    %1814 = vmatprep.subr.bf16.mxu0 0
    %1815 = vmatpush2.bf16.msra.mxu0 0
    %1816 = vmatprep.subr.bf16.mxu0 0
    %1817 = vmatpush2.bf16.msra.mxu0 0
    %1818 = vmatprep.subr.bf16.mxu0 0
    %1819 = vmatpush2.bf16.msra.mxu0 0
    %1820 = vmatprep.subr.bf16.mxu0 0
    %1821 = vmatpush2.bf16.msra.mxu0 0
    %1822 = vmatprep.subr.bf16.mxu0 0
    %1823 = vmatpush2.bf16.msra.mxu0 0
    %1824 = vmatprep.subr.bf16.mxu0 0
    %1825 = vmatpush2.bf16.msra.mxu0 0
    %1826 = vmatprep.mubr.bf16.mxu0 0
    %1827 = vmatmul.mubr.bf16.gmra.mxu0 %v1678
    %v1828 = vpop.f32.mrf.mxu0
    %v1829 = vadd.f32 %v1781, %v1828
    %v1830 = vpop.f32.mrf.mxu0
    %v1831 = vpop.f32.mrf.mxu0
    %v1832 = vadd.f32 %v1781, %v1831
    %v1833 = vpop.f32.mrf.mxu0
    %1834 = vdwg.mxu0
    %v1835 = vmul.f32 %v1715, 0.35355338
    %v1836 = vmul.f32 %v1718, 0.35355338
    %1839 = vrot.lane.b32.xlu0 %v1835, 120
    %v1840 = vpop.permute.xlu0 %1839
    %1841 = vrot.lane.b32.xlu0 %v1836, 120
    %v1842 = vpop.permute.xlu0 %1841
    %1845 = vrot.lane.b32.xlu0 %v1835, 112
    %v1846 = vpop.permute.xlu0 %1845
    %1847 = vrot.lane.b32.xlu0 %v1836, 112
    %v1848 = vpop.permute.xlu0 %1847
    %1851 = vrot.lane.b32.xlu0 %v1835, 104
    %v1852 = vpop.permute.xlu0 %1851
    %1853 = vrot.lane.b32.xlu0 %v1836, 104
    %v1854 = vpop.permute.xlu0 %1853
    %v1857 = vpack.c.bf16 %v1835, %v1835
    %v1858 = vpack.c.bf16 %v1836, %v1836
    %v1859 = vpack.c.bf16 %v1840, %v1840
    %v1860 = vpack.c.bf16 %v1842, %v1842
    %v1861 = vpack.c.bf16 %v1846, %v1846
    %v1862 = vpack.c.bf16 %v1848, %v1848
    %v1863 = vpack.c.bf16 %v1852, %v1852
    %v1864 = vpack.c.bf16 %v1854, %v1854
    %1867 = vrot.lane.b32.xlu0 %v1772, 120
    %v1868 = vpop.permute.xlu0 %1867
    %1869 = vrot.lane.b32.xlu0 %v1775, 120
    %v1870 = vpop.permute.xlu0 %1869
    %1873 = vrot.lane.b32.xlu0 %v1772, 112
    %v1874 = vpop.permute.xlu0 %1873
    %1875 = vrot.lane.b32.xlu0 %v1775, 112
    %v1876 = vpop.permute.xlu0 %1875
    %1879 = vrot.lane.b32.xlu0 %v1772, 104
    %v1880 = vpop.permute.xlu0 %1879
    %1881 = vrot.lane.b32.xlu0 %v1775, 104
    %v1882 = vpop.permute.xlu0 %1881
    %v1885 = vpack.c.bf16 %v1772, %v1772
    %v1886 = vpack.c.bf16 %v1775, %v1775
    %v1887 = vpack.c.bf16 %v1868, %v1868
    %v1888 = vpack.c.bf16 %v1870, %v1870
    %v1889 = vpack.c.bf16 %v1874, %v1874
    %v1890 = vpack.c.bf16 %v1876, %v1876
    %v1891 = vpack.c.bf16 %v1880, %v1880
    %v1892 = vpack.c.bf16 %v1882, %v1882
    %1895 = vrot.lane.b32.xlu0 %v1829, 120
    %v1896 = vpop.permute.xlu0 %1895
    %1897 = vrot.lane.b32.xlu0 %v1832, 120
    %v1898 = vpop.permute.xlu0 %1897
    %1901 = vrot.lane.b32.xlu0 %v1829, 112
    %v1902 = vpop.permute.xlu0 %1901
    %1903 = vrot.lane.b32.xlu0 %v1832, 112
    %v1904 = vpop.permute.xlu0 %1903
    %1907 = vrot.lane.b32.xlu0 %v1829, 104
    %v1908 = vpop.permute.xlu0 %1907
    %1909 = vrot.lane.b32.xlu0 %v1832, 104
    %v1910 = vpop.permute.xlu0 %1909
    %v1913 = vpack.c.bf16 %v1829, %v1829
    %v1914 = vpack.c.bf16 %v1832, %v1832
    %v1915 = vpack.c.bf16 %v1896, %v1896
    %v1916 = vpack.c.bf16 %v1898, %v1898
    %v1917 = vpack.c.bf16 %v1902, %v1902
    %v1918 = vpack.c.bf16 %v1904, %v1904
    %v1919 = vpack.c.bf16 %v1908, %v1908
    %v1920 = vpack.c.bf16 %v1910, %v1910
    %v1922 = vsel %vm449, %v1857, 0
    %v1925 = vsel %vm449, %v1885, 0
    %1927 = vmatprep.subr.bf16.mxu0 0
    %1928 = vmatpush1.bf16.xpose.msra.mxu0 0
    %1929 = vmatprep.subr.bf16.mxu0 0
    %1930 = vmatpush1.bf16.xpose.msra.mxu0 0
    %1931 = vmatprep.subr.bf16.mxu0 0
    %1932 = vmatpush1.bf16.xpose.msra.mxu0 0
    %1933 = vmatprep.subr.bf16.mxu0 0
    %1934 = vmatpush1.bf16.xpose.msra.mxu0 0
    %1935 = vmatprep.subr.bf16.mxu0 0
    %1936 = vmatpush1.bf16.xpose.msra.mxu0 0
    %1937 = vmatprep.subr.bf16.mxu0 0
    %1938 = vmatpush1.bf16.xpose.msra.mxu0 0
    %1939 = vmatprep.subr.bf16.mxu0 0
    %1940 = vmatpush1.bf16.xpose.msra.mxu0 0
    %1941 = vmatprep.subr.bf16.mxu0 0
    %1942 = vmatpush1.bf16.xpose.msra.mxu0 %v1925
    %1943 = vmatprep.subr.bf16.mxu0 0
    %1944 = vmatpush2.bf16.xpose.msra.mxu0 0
    %1945 = vmatprep.subr.bf16.mxu0 0
    %1946 = vmatpush2.bf16.xpose.msra.mxu0 0
    %1947 = vmatprep.subr.bf16.mxu0 0
    %1948 = vmatpush2.bf16.xpose.msra.mxu0 0
    %1949 = vmatprep.subr.bf16.mxu0 0
    %1950 = vmatpush2.bf16.xpose.msra.mxu0 0
    %1951 = vmatprep.subr.bf16.mxu0 0
    %1952 = vmatpush2.bf16.xpose.msra.mxu0 0
    %1953 = vmatprep.subr.bf16.mxu0 0
    %1954 = vmatpush2.bf16.xpose.msra.mxu0 0
    %1955 = vmatprep.subr.bf16.mxu0 0
    %1956 = vmatpush2.bf16.xpose.msra.mxu0 0
    %1957 = vmatprep.subr.bf16.mxu0 0
    %1958 = vmatpush2.bf16.xpose.msra.mxu0 0
    %1959 = vmatprep.mubr.bf16.mxu0 0
    %1960 = vmatmul.mubr.bf16.gmra.mxu0 %v1922
    %v1961 = vpop.f32.mrf.mxu0
    %v1962 = vadd.f32 0.0, %v1961
    %v1963 = vpop.f32.mrf.mxu0
    %v1964 = vpop.f32.mrf.mxu0
    %v1965 = vpop.f32.mrf.mxu0
    %1966 = vdwg.mxu0
    %v1968 = vsel %vm449, %v1858, 0
    %v1971 = vsel %vm449, %v1886, 0
    %1973 = vmatprep.subr.bf16.mxu0 0
    %1974 = vmatpush1.bf16.xpose.msra.mxu0 0
    %1975 = vmatprep.subr.bf16.mxu0 0
    %1976 = vmatpush1.bf16.xpose.msra.mxu0 0
    %1977 = vmatprep.subr.bf16.mxu0 0
    %1978 = vmatpush1.bf16.xpose.msra.mxu0 0
    %1979 = vmatprep.subr.bf16.mxu0 0
    %1980 = vmatpush1.bf16.xpose.msra.mxu0 0
    %1981 = vmatprep.subr.bf16.mxu0 0
    %1982 = vmatpush1.bf16.xpose.msra.mxu0 0
    %1983 = vmatprep.subr.bf16.mxu0 0
    %1984 = vmatpush1.bf16.xpose.msra.mxu0 0
    %1985 = vmatprep.subr.bf16.mxu0 0
    %1986 = vmatpush1.bf16.xpose.msra.mxu0 0
    %1987 = vmatprep.subr.bf16.mxu0 0
    %1988 = vmatpush1.bf16.xpose.msra.mxu0 %v1971
    %1989 = vmatprep.subr.bf16.mxu0 0
    %1990 = vmatpush2.bf16.xpose.msra.mxu0 0
    %1991 = vmatprep.subr.bf16.mxu0 0
    %1992 = vmatpush2.bf16.xpose.msra.mxu0 0
    %1993 = vmatprep.subr.bf16.mxu0 0
    %1994 = vmatpush2.bf16.xpose.msra.mxu0 0
    %1995 = vmatprep.subr.bf16.mxu0 0
    %1996 = vmatpush2.bf16.xpose.msra.mxu0 0
    %1997 = vmatprep.subr.bf16.mxu0 0
    %1998 = vmatpush2.bf16.xpose.msra.mxu0 0
    %1999 = vmatprep.subr.bf16.mxu0 0
    %2000 = vmatpush2.bf16.xpose.msra.mxu0 0
    %2001 = vmatprep.subr.bf16.mxu0 0
    %2002 = vmatpush2.bf16.xpose.msra.mxu0 0
    %2003 = vmatprep.subr.bf16.mxu0 0
    %2004 = vmatpush2.bf16.xpose.msra.mxu0 0
    %2005 = vmatprep.mubr.bf16.mxu0 0
    %2006 = vmatmul.mubr.bf16.gmra.mxu0 %v1968
    %v2007 = vpop.f32.mrf.mxu0
    %v2008 = vadd.f32 0.0, %v2007
    %v2009 = vpop.f32.mrf.mxu0
    %v2010 = vpop.f32.mrf.mxu0
    %v2011 = vpop.f32.mrf.mxu0
    %2012 = vdwg.mxu0
    %v2014 = vsel %vm449, %v1859, 0
    %v2017 = vsel %vm449, %v1887, 0
    %2019 = vmatprep.subr.bf16.mxu0 0
    %2020 = vmatpush1.bf16.xpose.msra.mxu0 0
    %2021 = vmatprep.subr.bf16.mxu0 0
    %2022 = vmatpush1.bf16.xpose.msra.mxu0 0
    %2023 = vmatprep.subr.bf16.mxu0 0
    %2024 = vmatpush1.bf16.xpose.msra.mxu0 0
    %2025 = vmatprep.subr.bf16.mxu0 0
    %2026 = vmatpush1.bf16.xpose.msra.mxu0 0
    %2027 = vmatprep.subr.bf16.mxu0 0
    %2028 = vmatpush1.bf16.xpose.msra.mxu0 0
    %2029 = vmatprep.subr.bf16.mxu0 0
    %2030 = vmatpush1.bf16.xpose.msra.mxu0 0
    %2031 = vmatprep.subr.bf16.mxu0 0
    %2032 = vmatpush1.bf16.xpose.msra.mxu0 0
    %2033 = vmatprep.subr.bf16.mxu0 0
    %2034 = vmatpush1.bf16.xpose.msra.mxu0 %v2017
    %2035 = vmatprep.subr.bf16.mxu0 0
    %2036 = vmatpush2.bf16.xpose.msra.mxu0 0
    %2037 = vmatprep.subr.bf16.mxu0 0
    %2038 = vmatpush2.bf16.xpose.msra.mxu0 0
    %2039 = vmatprep.subr.bf16.mxu0 0
    %2040 = vmatpush2.bf16.xpose.msra.mxu0 0
    %2041 = vmatprep.subr.bf16.mxu0 0
    %2042 = vmatpush2.bf16.xpose.msra.mxu0 0
    %2043 = vmatprep.subr.bf16.mxu0 0
    %2044 = vmatpush2.bf16.xpose.msra.mxu0 0
    %2045 = vmatprep.subr.bf16.mxu0 0
    %2046 = vmatpush2.bf16.xpose.msra.mxu0 0
    %2047 = vmatprep.subr.bf16.mxu0 0
    %2048 = vmatpush2.bf16.xpose.msra.mxu0 0
    %2049 = vmatprep.subr.bf16.mxu0 0
    %2050 = vmatpush2.bf16.xpose.msra.mxu0 0
    %2051 = vmatprep.mubr.bf16.mxu0 0
    %2052 = vmatmul.mubr.bf16.gmra.mxu0 %v2014
    %v2053 = vpop.f32.mrf.mxu0
    %v2054 = vadd.f32 0.0, %v2053
    %v2055 = vpop.f32.mrf.mxu0
    %v2056 = vpop.f32.mrf.mxu0
    %v2057 = vpop.f32.mrf.mxu0
    %2058 = vdwg.mxu0
    %v2060 = vsel %vm449, %v1860, 0
    %v2063 = vsel %vm449, %v1888, 0
    %2065 = vmatprep.subr.bf16.mxu0 0
    %2066 = vmatpush1.bf16.xpose.msra.mxu0 0
    %2067 = vmatprep.subr.bf16.mxu0 0
    %2068 = vmatpush1.bf16.xpose.msra.mxu0 0
    %2069 = vmatprep.subr.bf16.mxu0 0
    %2070 = vmatpush1.bf16.xpose.msra.mxu0 0
    %2071 = vmatprep.subr.bf16.mxu0 0
    %2072 = vmatpush1.bf16.xpose.msra.mxu0 0
    %2073 = vmatprep.subr.bf16.mxu0 0
    %2074 = vmatpush1.bf16.xpose.msra.mxu0 0
    %2075 = vmatprep.subr.bf16.mxu0 0
    %2076 = vmatpush1.bf16.xpose.msra.mxu0 0
    %2077 = vmatprep.subr.bf16.mxu0 0
    %2078 = vmatpush1.bf16.xpose.msra.mxu0 0
    %2079 = vmatprep.subr.bf16.mxu0 0
    %2080 = vmatpush1.bf16.xpose.msra.mxu0 %v2063
    %2081 = vmatprep.subr.bf16.mxu0 0
    %2082 = vmatpush2.bf16.xpose.msra.mxu0 0
    %2083 = vmatprep.subr.bf16.mxu0 0
    %2084 = vmatpush2.bf16.xpose.msra.mxu0 0
    %2085 = vmatprep.subr.bf16.mxu0 0
    %2086 = vmatpush2.bf16.xpose.msra.mxu0 0
    %2087 = vmatprep.subr.bf16.mxu0 0
    %2088 = vmatpush2.bf16.xpose.msra.mxu0 0
    %2089 = vmatprep.subr.bf16.mxu0 0
    %2090 = vmatpush2.bf16.xpose.msra.mxu0 0
    %2091 = vmatprep.subr.bf16.mxu0 0
    %2092 = vmatpush2.bf16.xpose.msra.mxu0 0
    %2093 = vmatprep.subr.bf16.mxu0 0
    %2094 = vmatpush2.bf16.xpose.msra.mxu0 0
    %2095 = vmatprep.subr.bf16.mxu0 0
    %2096 = vmatpush2.bf16.xpose.msra.mxu0 0
    %2097 = vmatprep.mubr.bf16.mxu0 0
    %2098 = vmatmul.mubr.bf16.gmra.mxu0 %v2060
    %v2099 = vpop.f32.mrf.mxu0
    %v2100 = vadd.f32 0.0, %v2099
    %v2101 = vpop.f32.mrf.mxu0
    %v2102 = vpop.f32.mrf.mxu0
    %v2103 = vpop.f32.mrf.mxu0
    %2104 = vdwg.mxu0
    %v2106 = vsel %vm449, %v1861, 0
    %v2109 = vsel %vm449, %v1889, 0
    %2111 = vmatprep.subr.bf16.mxu0 0
    %2112 = vmatpush1.bf16.xpose.msra.mxu0 0
    %2113 = vmatprep.subr.bf16.mxu0 0
    %2114 = vmatpush1.bf16.xpose.msra.mxu0 0
    %2115 = vmatprep.subr.bf16.mxu0 0
    %2116 = vmatpush1.bf16.xpose.msra.mxu0 0
    %2117 = vmatprep.subr.bf16.mxu0 0
    %2118 = vmatpush1.bf16.xpose.msra.mxu0 0
    %2119 = vmatprep.subr.bf16.mxu0 0
    %2120 = vmatpush1.bf16.xpose.msra.mxu0 0
    %2121 = vmatprep.subr.bf16.mxu0 0
    %2122 = vmatpush1.bf16.xpose.msra.mxu0 0
    %2123 = vmatprep.subr.bf16.mxu0 0
    %2124 = vmatpush1.bf16.xpose.msra.mxu0 0
    %2125 = vmatprep.subr.bf16.mxu0 0
    %2126 = vmatpush1.bf16.xpose.msra.mxu0 %v2109
    %2127 = vmatprep.subr.bf16.mxu0 0
    %2128 = vmatpush2.bf16.xpose.msra.mxu0 0
    %2129 = vmatprep.subr.bf16.mxu0 0
    %2130 = vmatpush2.bf16.xpose.msra.mxu0 0
    %2131 = vmatprep.subr.bf16.mxu0 0
    %2132 = vmatpush2.bf16.xpose.msra.mxu0 0
    %2133 = vmatprep.subr.bf16.mxu0 0
    %2134 = vmatpush2.bf16.xpose.msra.mxu0 0
    %2135 = vmatprep.subr.bf16.mxu0 0
    %2136 = vmatpush2.bf16.xpose.msra.mxu0 0
    %2137 = vmatprep.subr.bf16.mxu0 0
    %2138 = vmatpush2.bf16.xpose.msra.mxu0 0
    %2139 = vmatprep.subr.bf16.mxu0 0
    %2140 = vmatpush2.bf16.xpose.msra.mxu0 0
    %2141 = vmatprep.subr.bf16.mxu0 0
    %2142 = vmatpush2.bf16.xpose.msra.mxu0 0
    %2143 = vmatprep.mubr.bf16.mxu0 0
    %2144 = vmatmul.mubr.bf16.gmra.mxu0 %v2106
    %v2145 = vpop.f32.mrf.mxu0
    %v2146 = vadd.f32 0.0, %v2145
    %v2147 = vpop.f32.mrf.mxu0
    %v2148 = vpop.f32.mrf.mxu0
    %v2149 = vpop.f32.mrf.mxu0
    %2150 = vdwg.mxu0
    %v2152 = vsel %vm449, %v1862, 0
    %v2155 = vsel %vm449, %v1890, 0
    %2157 = vmatprep.subr.bf16.mxu0 0
    %2158 = vmatpush1.bf16.xpose.msra.mxu0 0
    %2159 = vmatprep.subr.bf16.mxu0 0
    %2160 = vmatpush1.bf16.xpose.msra.mxu0 0
    %2161 = vmatprep.subr.bf16.mxu0 0
    %2162 = vmatpush1.bf16.xpose.msra.mxu0 0
    %2163 = vmatprep.subr.bf16.mxu0 0
    %2164 = vmatpush1.bf16.xpose.msra.mxu0 0
    %2165 = vmatprep.subr.bf16.mxu0 0
    %2166 = vmatpush1.bf16.xpose.msra.mxu0 0
    %2167 = vmatprep.subr.bf16.mxu0 0
    %2168 = vmatpush1.bf16.xpose.msra.mxu0 0
    %2169 = vmatprep.subr.bf16.mxu0 0
    %2170 = vmatpush1.bf16.xpose.msra.mxu0 0
    %2171 = vmatprep.subr.bf16.mxu0 0
    %2172 = vmatpush1.bf16.xpose.msra.mxu0 %v2155
    %2173 = vmatprep.subr.bf16.mxu0 0
    %2174 = vmatpush2.bf16.xpose.msra.mxu0 0
    %2175 = vmatprep.subr.bf16.mxu0 0
    %2176 = vmatpush2.bf16.xpose.msra.mxu0 0
    %2177 = vmatprep.subr.bf16.mxu0 0
    %2178 = vmatpush2.bf16.xpose.msra.mxu0 0
    %2179 = vmatprep.subr.bf16.mxu0 0
    %2180 = vmatpush2.bf16.xpose.msra.mxu0 0
    %2181 = vmatprep.subr.bf16.mxu0 0
    %2182 = vmatpush2.bf16.xpose.msra.mxu0 0
    %2183 = vmatprep.subr.bf16.mxu0 0
    %2184 = vmatpush2.bf16.xpose.msra.mxu0 0
    %2185 = vmatprep.subr.bf16.mxu0 0
    %2186 = vmatpush2.bf16.xpose.msra.mxu0 0
    %2187 = vmatprep.subr.bf16.mxu0 0
    %2188 = vmatpush2.bf16.xpose.msra.mxu0 0
    %2189 = vmatprep.mubr.bf16.mxu0 0
    %2190 = vmatmul.mubr.bf16.gmra.mxu0 %v2152
    %v2191 = vpop.f32.mrf.mxu0
    %v2192 = vadd.f32 0.0, %v2191
    %v2193 = vpop.f32.mrf.mxu0
    %v2194 = vpop.f32.mrf.mxu0
    %v2195 = vpop.f32.mrf.mxu0
    %2196 = vdwg.mxu0
    %v2198 = vsel %vm449, %v1863, 0
    %v2201 = vsel %vm449, %v1891, 0
    %2203 = vmatprep.subr.bf16.mxu0 0
    %2204 = vmatpush1.bf16.xpose.msra.mxu0 0
    %2205 = vmatprep.subr.bf16.mxu0 0
    %2206 = vmatpush1.bf16.xpose.msra.mxu0 0
    %2207 = vmatprep.subr.bf16.mxu0 0
    %2208 = vmatpush1.bf16.xpose.msra.mxu0 0
    %2209 = vmatprep.subr.bf16.mxu0 0
    %2210 = vmatpush1.bf16.xpose.msra.mxu0 0
    %2211 = vmatprep.subr.bf16.mxu0 0
    %2212 = vmatpush1.bf16.xpose.msra.mxu0 0
    %2213 = vmatprep.subr.bf16.mxu0 0
    %2214 = vmatpush1.bf16.xpose.msra.mxu0 0
    %2215 = vmatprep.subr.bf16.mxu0 0
    %2216 = vmatpush1.bf16.xpose.msra.mxu0 0
    %2217 = vmatprep.subr.bf16.mxu0 0
    %2218 = vmatpush1.bf16.xpose.msra.mxu0 %v2201
    %2219 = vmatprep.subr.bf16.mxu0 0
    %2220 = vmatpush2.bf16.xpose.msra.mxu0 0
    %2221 = vmatprep.subr.bf16.mxu0 0
    %2222 = vmatpush2.bf16.xpose.msra.mxu0 0
    %2223 = vmatprep.subr.bf16.mxu0 0
    %2224 = vmatpush2.bf16.xpose.msra.mxu0 0
    %2225 = vmatprep.subr.bf16.mxu0 0
    %2226 = vmatpush2.bf16.xpose.msra.mxu0 0
    %2227 = vmatprep.subr.bf16.mxu0 0
    %2228 = vmatpush2.bf16.xpose.msra.mxu0 0
    %2229 = vmatprep.subr.bf16.mxu0 0
    %2230 = vmatpush2.bf16.xpose.msra.mxu0 0
    %2231 = vmatprep.subr.bf16.mxu0 0
    %2232 = vmatpush2.bf16.xpose.msra.mxu0 0
    %2233 = vmatprep.subr.bf16.mxu0 0
    %2234 = vmatpush2.bf16.xpose.msra.mxu0 0
    %2235 = vmatprep.mubr.bf16.mxu0 0
    %2236 = vmatmul.mubr.bf16.gmra.mxu0 %v2198
    %v2237 = vpop.f32.mrf.mxu0
    %v2238 = vadd.f32 0.0, %v2237
    %v2239 = vpop.f32.mrf.mxu0
    %v2240 = vpop.f32.mrf.mxu0
    %v2241 = vpop.f32.mrf.mxu0
    %2242 = vdwg.mxu0
    %v2244 = vsel %vm449, %v1864, 0
    %v2247 = vsel %vm449, %v1892, 0
    %2249 = vmatprep.subr.bf16.mxu0 0
    %2250 = vmatpush1.bf16.xpose.msra.mxu0 0
    %2251 = vmatprep.subr.bf16.mxu0 0
    %2252 = vmatpush1.bf16.xpose.msra.mxu0 0
    %2253 = vmatprep.subr.bf16.mxu0 0
    %2254 = vmatpush1.bf16.xpose.msra.mxu0 0
    %2255 = vmatprep.subr.bf16.mxu0 0
    %2256 = vmatpush1.bf16.xpose.msra.mxu0 0
    %2257 = vmatprep.subr.bf16.mxu0 0
    %2258 = vmatpush1.bf16.xpose.msra.mxu0 0
    %2259 = vmatprep.subr.bf16.mxu0 0
    %2260 = vmatpush1.bf16.xpose.msra.mxu0 0
    %2261 = vmatprep.subr.bf16.mxu0 0
    %2262 = vmatpush1.bf16.xpose.msra.mxu0 0
    %2263 = vmatprep.subr.bf16.mxu0 0
    %2264 = vmatpush1.bf16.xpose.msra.mxu0 %v2247
    %2265 = vmatprep.subr.bf16.mxu0 0
    %2266 = vmatpush2.bf16.xpose.msra.mxu0 0
    %2267 = vmatprep.subr.bf16.mxu0 0
    %2268 = vmatpush2.bf16.xpose.msra.mxu0 0
    %2269 = vmatprep.subr.bf16.mxu0 0
    %2270 = vmatpush2.bf16.xpose.msra.mxu0 0
    %2271 = vmatprep.subr.bf16.mxu0 0
    %2272 = vmatpush2.bf16.xpose.msra.mxu0 0
    %2273 = vmatprep.subr.bf16.mxu0 0
    %2274 = vmatpush2.bf16.xpose.msra.mxu0 0
    %2275 = vmatprep.subr.bf16.mxu0 0
    %2276 = vmatpush2.bf16.xpose.msra.mxu0 0
    %2277 = vmatprep.subr.bf16.mxu0 0
    %2278 = vmatpush2.bf16.xpose.msra.mxu0 0
    %2279 = vmatprep.subr.bf16.mxu0 0
    %2280 = vmatpush2.bf16.xpose.msra.mxu0 0
    %2281 = vmatprep.mubr.bf16.mxu0 0
    %2282 = vmatmul.mubr.bf16.gmra.mxu0 %v2244
    %v2283 = vpop.f32.mrf.mxu0
    %v2284 = vadd.f32 0.0, %v2283
    %v2285 = vpop.f32.mrf.mxu0
    %v2286 = vpop.f32.mrf.mxu0
    %v2287 = vpop.f32.mrf.mxu0
    %2288 = vdwg.mxu0
    %v2289 = vsel %vm449, %v1962, -inf
    %2290 = vmax.xlane.f32.xlu0 %v2289
    %v2291 = vpop.xlane.xlu0 %2290
    %v2292 = vsel %vm449, %v2008, -inf
    %2293 = vmax.xlane.f32.xlu0 %v2292
    %v2294 = vpop.xlane.xlu0 %2293
    %v2295 = vsel %vm449, %v2054, -inf
    %2296 = vmax.xlane.f32.xlu0 %v2295
    %v2297 = vpop.xlane.xlu0 %2296
    %v2298 = vsel %vm449, %v2100, -inf
    %2299 = vmax.xlane.f32.xlu0 %v2298
    %v2300 = vpop.xlane.xlu0 %2299
    %v2301 = vsel %vm449, %v2146, -inf
    %2302 = vmax.xlane.f32.xlu0 %v2301
    %v2303 = vpop.xlane.xlu0 %2302
    %v2304 = vsel %vm449, %v2192, -inf
    %2305 = vmax.xlane.f32.xlu0 %v2304
    %v2306 = vpop.xlane.xlu0 %2305
    %v2307 = vsel %vm449, %v2238, -inf
    %2308 = vmax.xlane.f32.xlu0 %v2307
    %v2309 = vpop.xlane.xlu0 %2308
    %v2310 = vsel %vm449, %v2284, -inf
    %2311 = vmax.xlane.f32.xlu0 %v2310
    %v2312 = vpop.xlane.xlu0 %2311
    %v2313 = vsub.f32 %v1962, %v2291
    %v2314 = vsub.f32 %v2008, %v2294
    %v2315 = vsub.f32 %v2054, %v2297
    %v2316 = vsub.f32 %v2100, %v2300
    %v2317 = vsub.f32 %v2146, %v2303
    %v2318 = vsub.f32 %v2192, %v2306
    %v2319 = vsub.f32 %v2238, %v2309
    %v2320 = vsub.f32 %v2284, %v2312
    %v2321 = vmul.f32 %v2313, 1.442695
    %v2322 = vpow.pop %v2321
    %v2323 = vmul.f32 %v2314, 1.442695
    %v2324 = vpow.pop %v2323
    %v2325 = vmul.f32 %v2315, 1.442695
    %v2326 = vpow.pop %v2325
    %v2327 = vmul.f32 %v2316, 1.442695
    %v2328 = vpow.pop %v2327
    %v2329 = vmul.f32 %v2317, 1.442695
    %v2330 = vpow.pop %v2329
    %v2331 = vmul.f32 %v2318, 1.442695
    %v2332 = vpow.pop %v2331
    %v2333 = vmul.f32 %v2319, 1.442695
    %v2334 = vpow.pop %v2333
    %v2335 = vmul.f32 %v2320, 1.442695
    %v2336 = vpow.pop %v2335
    %v2337 = vsel %vm449, %v2322, 0.0
    %2338 = vadd.xlane.f32.xlu0 %v2337
    %v2339 = vpop.xlane.xlu0 %2338
    %v2340 = vsel %vm449, %v2324, 0.0
    %2341 = vadd.xlane.f32.xlu0 %v2340
    %v2342 = vpop.xlane.xlu0 %2341
    %v2343 = vsel %vm449, %v2326, 0.0
    %2344 = vadd.xlane.f32.xlu0 %v2343
    %v2345 = vpop.xlane.xlu0 %2344
    %v2346 = vsel %vm449, %v2328, 0.0
    %2347 = vadd.xlane.f32.xlu0 %v2346
    %v2348 = vpop.xlane.xlu0 %2347
    %v2349 = vsel %vm449, %v2330, 0.0
    %2350 = vadd.xlane.f32.xlu0 %v2349
    %v2351 = vpop.xlane.xlu0 %2350
    %v2352 = vsel %vm449, %v2332, 0.0
    %2353 = vadd.xlane.f32.xlu0 %v2352
    %v2354 = vpop.xlane.xlu0 %2353
    %v2355 = vsel %vm449, %v2334, 0.0
    %2356 = vadd.xlane.f32.xlu0 %v2355
    %v2357 = vpop.xlane.xlu0 %2356
    %v2358 = vsel %vm449, %v2336, 0.0
    %2359 = vadd.xlane.f32.xlu0 %v2358
    %v2360 = vpop.xlane.xlu0 %2359
    %v2361 = vrcp.pop %v2339
    %v2362 = vrcp.pop %v2342
    %v2363 = vrcp.pop %v2345
    %v2364 = vrcp.pop %v2348
    %v2365 = vrcp.pop %v2351
    %v2366 = vrcp.pop %v2354
    %v2367 = vrcp.pop %v2357
    %v2368 = vrcp.pop %v2360
    %v2369 = vmul.f32 %v2322, %v2361
    %v2370 = vmul.f32 %v2324, %v2362
    %v2371 = vmul.f32 %v2326, %v2363
    %v2372 = vmul.f32 %v2328, %v2364
    %v2373 = vmul.f32 %v2330, %v2365
    %v2374 = vmul.f32 %v2332, %v2366
    %v2375 = vmul.f32 %v2334, %v2367
    %v2376 = vmul.f32 %v2336, %v2368
    %v2377 = vpack.c.bf16 %v2369, %v2369
    %v2378 = vpack.c.bf16 %v2370, %v2370
    %v2379 = vpack.c.bf16 %v2371, %v2371
    %v2380 = vpack.c.bf16 %v2372, %v2372
    %v2381 = vpack.c.bf16 %v2373, %v2373
    %v2382 = vpack.c.bf16 %v2374, %v2374
    %v2383 = vpack.c.bf16 %v2375, %v2375
    %v2384 = vpack.c.bf16 %v2376, %v2376
    %v2386 = vsel %vm449, %v2377, 0
    %v2389 = vsel %vm917, %v1913, 0
    %2391 = vmatprep.subr.bf16.mxu0 0
    %2392 = vmatpush1.bf16.msra.mxu0 0
    %2393 = vmatprep.subr.bf16.mxu0 0
    %2394 = vmatpush1.bf16.msra.mxu0 0
    %2395 = vmatprep.subr.bf16.mxu0 0
    %2396 = vmatpush1.bf16.msra.mxu0 0
    %2397 = vmatprep.subr.bf16.mxu0 0
    %2398 = vmatpush1.bf16.msra.mxu0 0
    %2399 = vmatprep.subr.bf16.mxu0 0
    %2400 = vmatpush1.bf16.msra.mxu0 0
    %2401 = vmatprep.subr.bf16.mxu0 0
    %2402 = vmatpush1.bf16.msra.mxu0 0
    %2403 = vmatprep.subr.bf16.mxu0 0
    %2404 = vmatpush1.bf16.msra.mxu0 0
    %2405 = vmatprep.subr.bf16.mxu0 0
    %2406 = vmatpush1.bf16.msra.mxu0 %v2389
    %2407 = vmatprep.subr.bf16.mxu0 0
    %2408 = vmatpush2.bf16.msra.mxu0 0
    %2409 = vmatprep.subr.bf16.mxu0 0
    %2410 = vmatpush2.bf16.msra.mxu0 0
    %2411 = vmatprep.subr.bf16.mxu0 0
    %2412 = vmatpush2.bf16.msra.mxu0 0
    %2413 = vmatprep.subr.bf16.mxu0 0
    %2414 = vmatpush2.bf16.msra.mxu0 0
    %2415 = vmatprep.subr.bf16.mxu0 0
    %2416 = vmatpush2.bf16.msra.mxu0 0
    %2417 = vmatprep.subr.bf16.mxu0 0
    %2418 = vmatpush2.bf16.msra.mxu0 0
    %2419 = vmatprep.subr.bf16.mxu0 0
    %2420 = vmatpush2.bf16.msra.mxu0 0
    %2421 = vmatprep.subr.bf16.mxu0 0
    %2422 = vmatpush2.bf16.msra.mxu0 0
    %2423 = vmatprep.mubr.bf16.mxu0 0
    %2424 = vmatmul.mubr.bf16.gmra.mxu0 %v2386
    %v2425 = vpop.f32.mrf.mxu0
    %v2426 = vadd.f32 0.0, %v2425
    %v2427 = vpop.f32.mrf.mxu0
    %v2428 = vpop.f32.mrf.mxu0
    %v2429 = vpop.f32.mrf.mxu0
    %2430 = vdwg.mxu0
    %v2432 = vsel %vm449, %v2378, 0
    %v2435 = vsel %vm917, %v1914, 0
    %2437 = vmatprep.subr.bf16.mxu0 0
    %2438 = vmatpush1.bf16.msra.mxu0 0
    %2439 = vmatprep.subr.bf16.mxu0 0
    %2440 = vmatpush1.bf16.msra.mxu0 0
    %2441 = vmatprep.subr.bf16.mxu0 0
    %2442 = vmatpush1.bf16.msra.mxu0 0
    %2443 = vmatprep.subr.bf16.mxu0 0
    %2444 = vmatpush1.bf16.msra.mxu0 0
    %2445 = vmatprep.subr.bf16.mxu0 0
    %2446 = vmatpush1.bf16.msra.mxu0 0
    %2447 = vmatprep.subr.bf16.mxu0 0
    %2448 = vmatpush1.bf16.msra.mxu0 0
    %2449 = vmatprep.subr.bf16.mxu0 0
    %2450 = vmatpush1.bf16.msra.mxu0 0
    %2451 = vmatprep.subr.bf16.mxu0 0
    %2452 = vmatpush1.bf16.msra.mxu0 %v2435
    %2453 = vmatprep.subr.bf16.mxu0 0
    %2454 = vmatpush2.bf16.msra.mxu0 0
    %2455 = vmatprep.subr.bf16.mxu0 0
    %2456 = vmatpush2.bf16.msra.mxu0 0
    %2457 = vmatprep.subr.bf16.mxu0 0
    %2458 = vmatpush2.bf16.msra.mxu0 0
    %2459 = vmatprep.subr.bf16.mxu0 0
    %2460 = vmatpush2.bf16.msra.mxu0 0
    %2461 = vmatprep.subr.bf16.mxu0 0
    %2462 = vmatpush2.bf16.msra.mxu0 0
    %2463 = vmatprep.subr.bf16.mxu0 0
    %2464 = vmatpush2.bf16.msra.mxu0 0
    %2465 = vmatprep.subr.bf16.mxu0 0
    %2466 = vmatpush2.bf16.msra.mxu0 0
    %2467 = vmatprep.subr.bf16.mxu0 0
    %2468 = vmatpush2.bf16.msra.mxu0 0
    %2469 = vmatprep.mubr.bf16.mxu0 0
    %2470 = vmatmul.mubr.bf16.gmra.mxu0 %v2432
    %v2471 = vpop.f32.mrf.mxu0
    %v2472 = vadd.f32 0.0, %v2471
    %v2473 = vpop.f32.mrf.mxu0
    %v2474 = vpop.f32.mrf.mxu0
    %v2475 = vpop.f32.mrf.mxu0
    %2476 = vdwg.mxu0
    %v2478 = vsel %vm449, %v2379, 0
    %v2481 = vsel %vm917, %v1915, 0
    %2483 = vmatprep.subr.bf16.mxu0 0
    %2484 = vmatpush1.bf16.msra.mxu0 0
    %2485 = vmatprep.subr.bf16.mxu0 0
    %2486 = vmatpush1.bf16.msra.mxu0 0
    %2487 = vmatprep.subr.bf16.mxu0 0
    %2488 = vmatpush1.bf16.msra.mxu0 0
    %2489 = vmatprep.subr.bf16.mxu0 0
    %2490 = vmatpush1.bf16.msra.mxu0 0
    %2491 = vmatprep.subr.bf16.mxu0 0
    %2492 = vmatpush1.bf16.msra.mxu0 0
    %2493 = vmatprep.subr.bf16.mxu0 0
    %2494 = vmatpush1.bf16.msra.mxu0 0
    %2495 = vmatprep.subr.bf16.mxu0 0
    %2496 = vmatpush1.bf16.msra.mxu0 0
    %2497 = vmatprep.subr.bf16.mxu0 0
    %2498 = vmatpush1.bf16.msra.mxu0 %v2481
    %2499 = vmatprep.subr.bf16.mxu0 0
    %2500 = vmatpush2.bf16.msra.mxu0 0
    %2501 = vmatprep.subr.bf16.mxu0 0
    %2502 = vmatpush2.bf16.msra.mxu0 0
    %2503 = vmatprep.subr.bf16.mxu0 0
    %2504 = vmatpush2.bf16.msra.mxu0 0
    %2505 = vmatprep.subr.bf16.mxu0 0
    %2506 = vmatpush2.bf16.msra.mxu0 0
    %2507 = vmatprep.subr.bf16.mxu0 0
    %2508 = vmatpush2.bf16.msra.mxu0 0
    %2509 = vmatprep.subr.bf16.mxu0 0
    %2510 = vmatpush2.bf16.msra.mxu0 0
    %2511 = vmatprep.subr.bf16.mxu0 0
    %2512 = vmatpush2.bf16.msra.mxu0 0
    %2513 = vmatprep.subr.bf16.mxu0 0
    %2514 = vmatpush2.bf16.msra.mxu0 0
    %2515 = vmatprep.mubr.bf16.mxu0 0
    %2516 = vmatmul.mubr.bf16.gmra.mxu0 %v2478
    %v2517 = vpop.f32.mrf.mxu0
    %v2518 = vadd.f32 0.0, %v2517
    %v2519 = vpop.f32.mrf.mxu0
    %v2520 = vpop.f32.mrf.mxu0
    %v2521 = vpop.f32.mrf.mxu0
    %2522 = vdwg.mxu0
    %v2524 = vsel %vm449, %v2380, 0
    %v2527 = vsel %vm917, %v1916, 0
    %2529 = vmatprep.subr.bf16.mxu0 0
    %2530 = vmatpush1.bf16.msra.mxu0 0
    %2531 = vmatprep.subr.bf16.mxu0 0
    %2532 = vmatpush1.bf16.msra.mxu0 0
    %2533 = vmatprep.subr.bf16.mxu0 0
    %2534 = vmatpush1.bf16.msra.mxu0 0
    %2535 = vmatprep.subr.bf16.mxu0 0
    %2536 = vmatpush1.bf16.msra.mxu0 0
    %2537 = vmatprep.subr.bf16.mxu0 0
    %2538 = vmatpush1.bf16.msra.mxu0 0
    %2539 = vmatprep.subr.bf16.mxu0 0
    %2540 = vmatpush1.bf16.msra.mxu0 0
    %2541 = vmatprep.subr.bf16.mxu0 0
    %2542 = vmatpush1.bf16.msra.mxu0 0
    %2543 = vmatprep.subr.bf16.mxu0 0
    %2544 = vmatpush1.bf16.msra.mxu0 %v2527
    %2545 = vmatprep.subr.bf16.mxu0 0
    %2546 = vmatpush2.bf16.msra.mxu0 0
    %2547 = vmatprep.subr.bf16.mxu0 0
    %2548 = vmatpush2.bf16.msra.mxu0 0
    %2549 = vmatprep.subr.bf16.mxu0 0
    %2550 = vmatpush2.bf16.msra.mxu0 0
    %2551 = vmatprep.subr.bf16.mxu0 0
    %2552 = vmatpush2.bf16.msra.mxu0 0
    %2553 = vmatprep.subr.bf16.mxu0 0
    %2554 = vmatpush2.bf16.msra.mxu0 0
    %2555 = vmatprep.subr.bf16.mxu0 0
    %2556 = vmatpush2.bf16.msra.mxu0 0
    %2557 = vmatprep.subr.bf16.mxu0 0
    %2558 = vmatpush2.bf16.msra.mxu0 0
    %2559 = vmatprep.subr.bf16.mxu0 0
    %2560 = vmatpush2.bf16.msra.mxu0 0
    %2561 = vmatprep.mubr.bf16.mxu0 0
    %2562 = vmatmul.mubr.bf16.gmra.mxu0 %v2524
    %v2563 = vpop.f32.mrf.mxu0
    %v2564 = vadd.f32 0.0, %v2563
    %v2565 = vpop.f32.mrf.mxu0
    %v2566 = vpop.f32.mrf.mxu0
    %v2567 = vpop.f32.mrf.mxu0
    %2568 = vdwg.mxu0
    %v2570 = vsel %vm449, %v2381, 0
    %v2573 = vsel %vm917, %v1917, 0
    %2575 = vmatprep.subr.bf16.mxu0 0
    %2576 = vmatpush1.bf16.msra.mxu0 0
    %2577 = vmatprep.subr.bf16.mxu0 0
    %2578 = vmatpush1.bf16.msra.mxu0 0
    %2579 = vmatprep.subr.bf16.mxu0 0
    %2580 = vmatpush1.bf16.msra.mxu0 0
    %2581 = vmatprep.subr.bf16.mxu0 0
    %2582 = vmatpush1.bf16.msra.mxu0 0
    %2583 = vmatprep.subr.bf16.mxu0 0
    %2584 = vmatpush1.bf16.msra.mxu0 0
    %2585 = vmatprep.subr.bf16.mxu0 0
    %2586 = vmatpush1.bf16.msra.mxu0 0
    %2587 = vmatprep.subr.bf16.mxu0 0
    %2588 = vmatpush1.bf16.msra.mxu0 0
    %2589 = vmatprep.subr.bf16.mxu0 0
    %2590 = vmatpush1.bf16.msra.mxu0 %v2573
    %2591 = vmatprep.subr.bf16.mxu0 0
    %2592 = vmatpush2.bf16.msra.mxu0 0
    %2593 = vmatprep.subr.bf16.mxu0 0
    %2594 = vmatpush2.bf16.msra.mxu0 0
    %2595 = vmatprep.subr.bf16.mxu0 0
    %2596 = vmatpush2.bf16.msra.mxu0 0
    %2597 = vmatprep.subr.bf16.mxu0 0
    %2598 = vmatpush2.bf16.msra.mxu0 0
    %2599 = vmatprep.subr.bf16.mxu0 0
    %2600 = vmatpush2.bf16.msra.mxu0 0
    %2601 = vmatprep.subr.bf16.mxu0 0
    %2602 = vmatpush2.bf16.msra.mxu0 0
    %2603 = vmatprep.subr.bf16.mxu0 0
    %2604 = vmatpush2.bf16.msra.mxu0 0
    %2605 = vmatprep.subr.bf16.mxu0 0
    %2606 = vmatpush2.bf16.msra.mxu0 0
    %2607 = vmatprep.mubr.bf16.mxu0 0
    %2608 = vmatmul.mubr.bf16.gmra.mxu0 %v2570
    %v2609 = vpop.f32.mrf.mxu0
    %v2610 = vadd.f32 0.0, %v2609
    %v2611 = vpop.f32.mrf.mxu0
    %v2612 = vpop.f32.mrf.mxu0
    %v2613 = vpop.f32.mrf.mxu0
    %2614 = vdwg.mxu0
    %v2616 = vsel %vm449, %v2382, 0
    %v2619 = vsel %vm917, %v1918, 0
    %2621 = vmatprep.subr.bf16.mxu0 0
    %2622 = vmatpush1.bf16.msra.mxu0 0
    %2623 = vmatprep.subr.bf16.mxu0 0
    %2624 = vmatpush1.bf16.msra.mxu0 0
    %2625 = vmatprep.subr.bf16.mxu0 0
    %2626 = vmatpush1.bf16.msra.mxu0 0
    %2627 = vmatprep.subr.bf16.mxu0 0
    %2628 = vmatpush1.bf16.msra.mxu0 0
    %2629 = vmatprep.subr.bf16.mxu0 0
    %2630 = vmatpush1.bf16.msra.mxu0 0
    %2631 = vmatprep.subr.bf16.mxu0 0
    %2632 = vmatpush1.bf16.msra.mxu0 0
    %2633 = vmatprep.subr.bf16.mxu0 0
    %2634 = vmatpush1.bf16.msra.mxu0 0
    %2635 = vmatprep.subr.bf16.mxu0 0
    %2636 = vmatpush1.bf16.msra.mxu0 %v2619
    %2637 = vmatprep.subr.bf16.mxu0 0
    %2638 = vmatpush2.bf16.msra.mxu0 0
    %2639 = vmatprep.subr.bf16.mxu0 0
    %2640 = vmatpush2.bf16.msra.mxu0 0
    %2641 = vmatprep.subr.bf16.mxu0 0
    %2642 = vmatpush2.bf16.msra.mxu0 0
    %2643 = vmatprep.subr.bf16.mxu0 0
    %2644 = vmatpush2.bf16.msra.mxu0 0
    %2645 = vmatprep.subr.bf16.mxu0 0
    %2646 = vmatpush2.bf16.msra.mxu0 0
    %2647 = vmatprep.subr.bf16.mxu0 0
    %2648 = vmatpush2.bf16.msra.mxu0 0
    %2649 = vmatprep.subr.bf16.mxu0 0
    %2650 = vmatpush2.bf16.msra.mxu0 0
    %2651 = vmatprep.subr.bf16.mxu0 0
    %2652 = vmatpush2.bf16.msra.mxu0 0
    %2653 = vmatprep.mubr.bf16.mxu0 0
    %2654 = vmatmul.mubr.bf16.gmra.mxu0 %v2616
    %v2655 = vpop.f32.mrf.mxu0
    %v2656 = vadd.f32 0.0, %v2655
    %v2657 = vpop.f32.mrf.mxu0
    %v2658 = vpop.f32.mrf.mxu0
    %v2659 = vpop.f32.mrf.mxu0
    %2660 = vdwg.mxu0
    %v2662 = vsel %vm449, %v2383, 0
    %v2665 = vsel %vm917, %v1919, 0
    %2667 = vmatprep.subr.bf16.mxu0 0
    %2668 = vmatpush1.bf16.msra.mxu0 0
    %2669 = vmatprep.subr.bf16.mxu0 0
    %2670 = vmatpush1.bf16.msra.mxu0 0
    %2671 = vmatprep.subr.bf16.mxu0 0
    %2672 = vmatpush1.bf16.msra.mxu0 0
    %2673 = vmatprep.subr.bf16.mxu0 0
    %2674 = vmatpush1.bf16.msra.mxu0 0
    %2675 = vmatprep.subr.bf16.mxu0 0
    %2676 = vmatpush1.bf16.msra.mxu0 0
    %2677 = vmatprep.subr.bf16.mxu0 0
    %2678 = vmatpush1.bf16.msra.mxu0 0
    %2679 = vmatprep.subr.bf16.mxu0 0
    %2680 = vmatpush1.bf16.msra.mxu0 0
    %2681 = vmatprep.subr.bf16.mxu0 0
    %2682 = vmatpush1.bf16.msra.mxu0 %v2665
    %2683 = vmatprep.subr.bf16.mxu0 0
    %2684 = vmatpush2.bf16.msra.mxu0 0
    %2685 = vmatprep.subr.bf16.mxu0 0
    %2686 = vmatpush2.bf16.msra.mxu0 0
    %2687 = vmatprep.subr.bf16.mxu0 0
    %2688 = vmatpush2.bf16.msra.mxu0 0
    %2689 = vmatprep.subr.bf16.mxu0 0
    %2690 = vmatpush2.bf16.msra.mxu0 0
    %2691 = vmatprep.subr.bf16.mxu0 0
    %2692 = vmatpush2.bf16.msra.mxu0 0
    %2693 = vmatprep.subr.bf16.mxu0 0
    %2694 = vmatpush2.bf16.msra.mxu0 0
    %2695 = vmatprep.subr.bf16.mxu0 0
    %2696 = vmatpush2.bf16.msra.mxu0 0
    %2697 = vmatprep.subr.bf16.mxu0 0
    %2698 = vmatpush2.bf16.msra.mxu0 0
    %2699 = vmatprep.mubr.bf16.mxu0 0
    %2700 = vmatmul.mubr.bf16.gmra.mxu0 %v2662
    %v2701 = vpop.f32.mrf.mxu0
    %v2702 = vadd.f32 0.0, %v2701
    %v2703 = vpop.f32.mrf.mxu0
    %v2704 = vpop.f32.mrf.mxu0
    %v2705 = vpop.f32.mrf.mxu0
    %2706 = vdwg.mxu0
    %v2708 = vsel %vm449, %v2384, 0
    %v2711 = vsel %vm917, %v1920, 0
    %2713 = vmatprep.subr.bf16.mxu0 0
    %2714 = vmatpush1.bf16.msra.mxu0 0
    %2715 = vmatprep.subr.bf16.mxu0 0
    %2716 = vmatpush1.bf16.msra.mxu0 0
    %2717 = vmatprep.subr.bf16.mxu0 0
    %2718 = vmatpush1.bf16.msra.mxu0 0
    %2719 = vmatprep.subr.bf16.mxu0 0
    %2720 = vmatpush1.bf16.msra.mxu0 0
    %2721 = vmatprep.subr.bf16.mxu0 0
    %2722 = vmatpush1.bf16.msra.mxu0 0
    %2723 = vmatprep.subr.bf16.mxu0 0
    %2724 = vmatpush1.bf16.msra.mxu0 0
    %2725 = vmatprep.subr.bf16.mxu0 0
    %2726 = vmatpush1.bf16.msra.mxu0 0
    %2727 = vmatprep.subr.bf16.mxu0 0
    %2728 = vmatpush1.bf16.msra.mxu0 %v2711
    %2729 = vmatprep.subr.bf16.mxu0 0
    %2730 = vmatpush2.bf16.msra.mxu0 0
    %2731 = vmatprep.subr.bf16.mxu0 0
    %2732 = vmatpush2.bf16.msra.mxu0 0
    %2733 = vmatprep.subr.bf16.mxu0 0
    %2734 = vmatpush2.bf16.msra.mxu0 0
    %2735 = vmatprep.subr.bf16.mxu0 0
    %2736 = vmatpush2.bf16.msra.mxu0 0
    %2737 = vmatprep.subr.bf16.mxu0 0
    %2738 = vmatpush2.bf16.msra.mxu0 0
    %2739 = vmatprep.subr.bf16.mxu0 0
    %2740 = vmatpush2.bf16.msra.mxu0 0
    %2741 = vmatprep.subr.bf16.mxu0 0
    %2742 = vmatpush2.bf16.msra.mxu0 0
    %2743 = vmatprep.subr.bf16.mxu0 0
    %2744 = vmatpush2.bf16.msra.mxu0 0
    %2745 = vmatprep.mubr.bf16.mxu0 0
    %2746 = vmatmul.mubr.bf16.gmra.mxu0 %v2708
    %v2747 = vpop.f32.mrf.mxu0
    %v2748 = vadd.f32 0.0, %v2747
    %v2749 = vpop.f32.mrf.mxu0
    %v2750 = vpop.f32.mrf.mxu0
    %v2751 = vpop.f32.mrf.mxu0
    %2752 = vdwg.mxu0
    %2755 = vrot.lane.b32.xlu0 %v2518, 8
    %v2756 = vpop.permute.xlu0 %2755
    %2757 = vrot.lane.b32.xlu0 %v2564, 8
    %v2758 = vpop.permute.xlu0 %2757
    %2763 = vrot.lane.b32.xlu0 %v2610, 16
    %v2764 = vpop.permute.xlu0 %2763
    %2765 = vrot.lane.b32.xlu0 %v2656, 16
    %v2766 = vpop.permute.xlu0 %2765
    %2771 = vrot.lane.b32.xlu0 %v2702, 24
    %v2772 = vpop.permute.xlu0 %2771
    %2773 = vrot.lane.b32.xlu0 %v2748, 24
    %v2774 = vpop.permute.xlu0 %2773
    %v2777 = vsel %vm449, %v2426, %v2756
    %v2778 = vsel %vm449, %v2472, %v2758
    %v2779 = vsel %vm1309, %v2777, %v2764
    %v2780 = vsel %vm1309, %v2778, %v2766
    %v2781 = vsel %vm1312, %v2779, %v2772
    %v2782 = vsel %vm1312, %v2780, %v2774
    %v2783 = vpack.c.bf16 %v2782, %v2781
    %v2784 = vlaneseq
    %v2785 = vshrl.u32 %v2784, 7
    %v2786 = vsub.s32 3, %v2785
    %v2787 = vrot.slane %v1655, %v2786
    %v2792 = vunpack.c.l.b16 %v1636
    %v2793 = vunpack.c.l.b16 %v1637
    %v2794 = vunpack.c.l.b16 %v1638
    %v2795 = vunpack.c.l.b16 %v1639
    %v2796 = vpack.c.b16 %v2793, %v2792
    %v2797 = vpack.c.b16 %v2795, %v2794
    %v2801 = vsel %vm204, %v2783, 0
    %2803 = vmatprep.subr.bf16.mxu0 0
    %2804 = vmatpush1.bf16.msra.mxu0 0
    %2805 = vmatprep.subr.bf16.mxu0 0
    %2806 = vmatpush1.bf16.msra.mxu0 0
    %2807 = vmatprep.subr.bf16.mxu0 0
    %2808 = vmatpush1.bf16.msra.mxu0 0
    %2809 = vmatprep.subr.bf16.mxu0 0
    %2810 = vmatpush1.bf16.msra.mxu0 0
    %2811 = vmatprep.subr.bf16.mxu0 0
    %2812 = vmatpush1.bf16.msra.mxu0 0
    %2813 = vmatprep.subr.bf16.mxu0 0
    %2814 = vmatpush1.bf16.msra.mxu0 0
    %2815 = vmatprep.subr.bf16.mxu0 0
    %2816 = vmatpush1.bf16.msra.mxu0 %v2797
    %2817 = vmatprep.subr.bf16.mxu0 0
    %2818 = vmatpush1.bf16.msra.mxu0 %v2796
    %2819 = vmatprep.subr.bf16.mxu0 0
    %2820 = vmatpush2.bf16.msra.mxu0 0
    %2821 = vmatprep.subr.bf16.mxu0 0
    %2822 = vmatpush2.bf16.msra.mxu0 0
    %2823 = vmatprep.subr.bf16.mxu0 0
    %2824 = vmatpush2.bf16.msra.mxu0 0
    %2825 = vmatprep.subr.bf16.mxu0 0
    %2826 = vmatpush2.bf16.msra.mxu0 0
    %2827 = vmatprep.subr.bf16.mxu0 0
    %2828 = vmatpush2.bf16.msra.mxu0 0
    %2829 = vmatprep.subr.bf16.mxu0 0
    %2830 = vmatpush2.bf16.msra.mxu0 0
    %2831 = vmatprep.subr.bf16.mxu0 0
    %2832 = vmatpush2.bf16.msra.mxu0 0
    %2833 = vmatprep.subr.bf16.mxu0 0
    %2834 = vmatpush2.bf16.msra.mxu0 0
    %2835 = vmatprep.mubr.bf16.mxu0 0
    %2836 = vmatmul.mubr.bf16.gmra.mxu0 %v2801
    %v2837 = vpop.f32.mrf.mxu0
    %v2838 = vadd.f32 %v2787, %v2837
    %v2839 = vpop.f32.mrf.mxu0
    %v2840 = vpop.f32.mrf.mxu0
    %v2841 = vadd.f32 %v2787, %v2840
    %v2842 = vpop.f32.mrf.mxu0
    %2843 = vdwg.mxu0
    %v2844 = vadd.f32 %v1618, %v2838
    %v2845 = vadd.f32 %v1619, %v2841
    %v2846 = vsel %vm204, %v2844, 0.0
    %2847 = vadd.xlane.f32.xlu0 %v2846
    %v2848 = vpop.xlane.xlu0 %2847
    %v2849 = vsel %vm204, %v2845, 0.0
    %2850 = vadd.xlane.f32.xlu0 %v2849
    %v2851 = vpop.xlane.xlu0 %2850
    %v2852 = vmul.f32 %v2848, %v1384
    %v2853 = vmul.f32 %v2851, %v1384
    %v2854 = vmul.f32 %v2844, %v2844
    %v2855 = vmul.f32 %v2845, %v2845
    %v2856 = vsel %vm204, %v2854, 0.0
    %2857 = vadd.xlane.f32.xlu0 %v2856
    %v2858 = vpop.xlane.xlu0 %2857
    %v2859 = vsel %vm204, %v2855, 0.0
    %2860 = vadd.xlane.f32.xlu0 %v2859
    %v2861 = vpop.xlane.xlu0 %2860
    %v2862 = vmul.f32 %v2858, %v1384
    %v2863 = vmul.f32 %v2861, %v1384
    %v2864 = vmul.f32 %v2852, %v2852
    %v2865 = vmul.f32 %v2853, %v2853
    %v2866 = vsub.f32 %v2862, %v2864
    %v2867 = vsub.f32 %v2863, %v2865
    %v2868 = vsub.f32 %v2844, %v2852
    %v2869 = vsub.f32 %v2845, %v2853
    %v2870 = vadd.f32 %v2866, 1e-05
    %v2871 = vadd.f32 %v2867, 1e-05
    %v2872 = vrsqrt.pop %v2870
    %v2873 = vrsqrt.pop %v2871
    %v2874 = vmul.f32 %v2868, %v2872
    %v2875 = vmul.f32 %v2869, %v2873
    %v2876 = vlaneseq
    %v2877 = vshrl.u32 %v2876, 7
    %v2878 = vsub.s32 0, %v2877
    %v2879 = vrot.slane %v1659, %v2878
    %v2880 = vmul.f32 %v2874, %v2879
    %v2881 = vmul.f32 %v2875, %v2879
    %v2882 = vlaneseq
    %v2883 = vshrl.u32 %v2882, 7
    %v2884 = vsub.s32 1, %v2883
    %v2885 = vrot.slane %v1659, %v2884
    %v2886 = vadd.f32 %v2880, %v2885
    %v2887 = vadd.f32 %v2881, %v2885
    %v2888 = vpack.c.bf16 %v2887, %v2886
    %v2890 = vlaneseq
    %v2891 = vshrl.u32 %v2890, 7
    %v2892 = vsub.s32 0, %v2891
    %v2893 = vrot.slane %v1657, %v2892
    %v2899 = vunpack.c.l.b16 %v1641
    %v2900 = vunpack.c.l.b16 %v1642
    %v2901 = vunpack.c.l.b16 %v1643
    %v2902 = vunpack.c.l.b16 %v1644
    %v2903 = vpack.c.b16 %v2900, %v2899
    %v2904 = vpack.c.b16 %v2902, %v2901
    %v2908 = vsel %vm204, %v2888, 0
    %2910 = vmatprep.subr.bf16.mxu0 0
    %2911 = vmatpush1.bf16.msra.mxu0 0
    %2912 = vmatprep.subr.bf16.mxu0 0
    %2913 = vmatpush1.bf16.msra.mxu0 0
    %2914 = vmatprep.subr.bf16.mxu0 0
    %2915 = vmatpush1.bf16.msra.mxu0 0
    %2916 = vmatprep.subr.bf16.mxu0 0
    %2917 = vmatpush1.bf16.msra.mxu0 0
    %2918 = vmatprep.subr.bf16.mxu0 0
    %2919 = vmatpush1.bf16.msra.mxu0 0
    %2920 = vmatprep.subr.bf16.mxu0 0
    %2921 = vmatpush1.bf16.msra.mxu0 0
    %2922 = vmatprep.subr.bf16.mxu0 0
    %2923 = vmatpush1.bf16.msra.mxu0 %v2904
    %2924 = vmatprep.subr.bf16.mxu0 0
    %2925 = vmatpush1.bf16.msra.mxu0 %v2903
    %2926 = vmatprep.subr.bf16.mxu0 0
    %2927 = vmatpush2.bf16.msra.mxu0 0
    %2928 = vmatprep.subr.bf16.mxu0 0
    %2929 = vmatpush2.bf16.msra.mxu0 0
    %2930 = vmatprep.subr.bf16.mxu0 0
    %2931 = vmatpush2.bf16.msra.mxu0 0
    %2932 = vmatprep.subr.bf16.mxu0 0
    %2933 = vmatpush2.bf16.msra.mxu0 0
    %2934 = vmatprep.subr.bf16.mxu0 0
    %2935 = vmatpush2.bf16.msra.mxu0 0
    %2936 = vmatprep.subr.bf16.mxu0 0
    %2937 = vmatpush2.bf16.msra.mxu0 0
    %2938 = vmatprep.subr.bf16.mxu0 0
    %2939 = vmatpush2.bf16.msra.mxu0 0
    %2940 = vmatprep.subr.bf16.mxu0 0
    %2941 = vmatpush2.bf16.msra.mxu0 0
    %2942 = vmatprep.mubr.bf16.mxu0 0
    %2943 = vmatmul.mubr.bf16.gmra.mxu0 %v2908
    %v2944 = vpop.f32.mrf.mxu0
    %v2945 = vadd.f32 %v2893, %v2944
    %v2946 = vpop.f32.mrf.mxu0
    %v2947 = vpop.f32.mrf.mxu0
    %v2948 = vadd.f32 %v2893, %v2947
    %v2949 = vpop.f32.mrf.mxu0
    %2950 = vdwg.mxu0
    %v2951 = vmul.f32 %v2945, %v2945
    %v2952 = vmul.f32 %v2948, %v2948
    %v2953 = vmul.f32 %v2945, %v2951
    %v2954 = vmul.f32 %v2948, %v2952
    %v2955 = vmul.f32 %v2953, 0.044715
    %v2956 = vmul.f32 %v2954, 0.044715
    %v2957 = vadd.f32 %v2945, %v2955
    %v2958 = vadd.f32 %v2948, %v2956
    %v2959 = vmul.f32 %v2957, 0.7978846
    %v2960 = vmul.f32 %v2958, 0.7978846
    %v2961 = vtanh.pop %v2959
    %v2962 = vtanh.pop %v2960
    %v2963 = vadd.f32 %v2961, 1.0
    %v2964 = vadd.f32 %v2962, 1.0
    %v2965 = vmul.f32 %v2963, 0.5
    %v2966 = vmul.f32 %v2964, 0.5
    %v2967 = vmul.f32 %v2945, %v2965
    %v2968 = vmul.f32 %v2948, %v2966
    %v2969 = vpack.c.bf16 %v2968, %v2967
    %v2970 = vlaneseq
    %v2971 = vshrl.u32 %v2970, 7
    %v2972 = vsub.s32 4, %v2971
    %v2973 = vrot.slane %v1655, %v2972
    %v2982 = vunpack.c.l.b16 %v1646
    %v2983 = vunpack.c.l.b16 %v1647
    %v2984 = vunpack.c.l.b16 %v1648
    %v2985 = vunpack.c.l.b16 %v1649
    %v2986 = vunpack.c.l.b16 %v1650
    %v2987 = vunpack.c.l.b16 %v1651
    %v2988 = vunpack.c.l.b16 %v1652
    %v2989 = vunpack.c.l.b16 %v1653
    %v2990 = vpack.c.b16 %v2983, %v2982
    %v2991 = vpack.c.b16 %v2985, %v2984
    %v2992 = vpack.c.b16 %v2987, %v2986
    %v2993 = vpack.c.b16 %v2989, %v2988
    %v2999 = vsel %vm1531, %v2969, 0
    %3001 = vmatprep.subr.bf16.mxu0 0
    %3002 = vmatpush1.bf16.msra.mxu0 0
    %3003 = vmatprep.subr.bf16.mxu0 0
    %3004 = vmatpush1.bf16.msra.mxu0 0
    %3005 = vmatprep.subr.bf16.mxu0 0
    %3006 = vmatpush1.bf16.msra.mxu0 0
    %3007 = vmatprep.subr.bf16.mxu0 0
    %3008 = vmatpush1.bf16.msra.mxu0 0
    %3009 = vmatprep.subr.bf16.mxu0 0
    %3010 = vmatpush1.bf16.msra.mxu0 %v2993
    %3011 = vmatprep.subr.bf16.mxu0 0
    %3012 = vmatpush1.bf16.msra.mxu0 %v2992
    %3013 = vmatprep.subr.bf16.mxu0 0
    %3014 = vmatpush1.bf16.msra.mxu0 %v2991
    %3015 = vmatprep.subr.bf16.mxu0 0
    %3016 = vmatpush1.bf16.msra.mxu0 %v2990
    %3017 = vmatprep.subr.bf16.mxu0 0
    %3018 = vmatpush2.bf16.msra.mxu0 0
    %3019 = vmatprep.subr.bf16.mxu0 0
    %3020 = vmatpush2.bf16.msra.mxu0 0
    %3021 = vmatprep.subr.bf16.mxu0 0
    %3022 = vmatpush2.bf16.msra.mxu0 0
    %3023 = vmatprep.subr.bf16.mxu0 0
    %3024 = vmatpush2.bf16.msra.mxu0 0
    %3025 = vmatprep.subr.bf16.mxu0 0
    %3026 = vmatpush2.bf16.msra.mxu0 0
    %3027 = vmatprep.subr.bf16.mxu0 0
    %3028 = vmatpush2.bf16.msra.mxu0 0
    %3029 = vmatprep.subr.bf16.mxu0 0
    %3030 = vmatpush2.bf16.msra.mxu0 0
    %3031 = vmatprep.subr.bf16.mxu0 0
    %3032 = vmatpush2.bf16.msra.mxu0 0
    %3033 = vmatprep.mubr.bf16.mxu0 0
    %3034 = vmatmul.mubr.bf16.gmra.mxu0 %v2999
    %v3035 = vpop.f32.mrf.mxu0
    %v3036 = vadd.f32 %v2973, %v3035
    %v3037 = vpop.f32.mrf.mxu0
    %v3038 = vpop.f32.mrf.mxu0
    %v3039 = vadd.f32 %v2973, %v3038
    %v3040 = vpop.f32.mrf.mxu0
    %3041 = vdwg.mxu0
    %v3042 = vadd.f32 %v2886, %v3036
    %v3043 = vadd.f32 %v2887, %v3039
    %v3044 = vsel %vm204, %v3042, 0.0
    %3045 = vadd.xlane.f32.xlu0 %v3044
    %v3046 = vpop.xlane.xlu0 %3045
    %v3047 = vsel %vm204, %v3043, 0.0
    %3048 = vadd.xlane.f32.xlu0 %v3047
    %v3049 = vpop.xlane.xlu0 %3048
    %v3050 = vmul.f32 %v3046, %v1384
    %v3051 = vmul.f32 %v3049, %v1384
    %v3052 = vmul.f32 %v3042, %v3042
    %v3053 = vmul.f32 %v3043, %v3043
    %v3054 = vsel %vm204, %v3052, 0.0
    %3055 = vadd.xlane.f32.xlu0 %v3054
    %v3056 = vpop.xlane.xlu0 %3055
    %v3057 = vsel %vm204, %v3053, 0.0
    %3058 = vadd.xlane.f32.xlu0 %v3057
    %v3059 = vpop.xlane.xlu0 %3058
    %v3060 = vmul.f32 %v3056, %v1384
    %v3061 = vmul.f32 %v3059, %v1384
    %v3062 = vmul.f32 %v3050, %v3050
    %v3063 = vmul.f32 %v3051, %v3051
    %v3064 = vsub.f32 %v3060, %v3062
    %v3065 = vsub.f32 %v3061, %v3063
    %v3066 = vsub.f32 %v3042, %v3050
    %v3067 = vsub.f32 %v3043, %v3051
    %v3068 = vadd.f32 %v3064, 1e-05
    %v3069 = vadd.f32 %v3065, 1e-05
    %v3070 = vrsqrt.pop %v3068
    %v3071 = vrsqrt.pop %v3069
    %v3072 = vmul.f32 %v3066, %v3070
    %v3073 = vmul.f32 %v3067, %v3071
    %v3074 = vlaneseq
    %v3075 = vshrl.u32 %v3074, 7
    %v3076 = vsub.s32 2, %v3075
    %v3077 = vrot.slane %v1659, %v3076
    %v3078 = vmul.f32 %v3072, %v3077
    %v3079 = vmul.f32 %v3073, %v3077
    %v3080 = vlaneseq
    %v3081 = vshrl.u32 %v3080, 7
    %v3082 = vsub.s32 3, %v3081
    %v3083 = vrot.slane %v1659, %v3082
    %v3084 = vadd.f32 %v3078, %v3083
    %v3085 = vadd.f32 %v3079, %v3083
    %v3086 = vsel %vm204, %v3084, 0.0
    %v3087 = vrot.slane %v3086, 4
    %v3088 = vadd.f32 %v3086, %v3087
    %v3089 = vrot.slane %v3088, 2
    %v3090 = vadd.f32 %v3088, %v3089
    %v3091 = vrot.slane %v3090, 1
    %v3092 = vadd.f32 %v3090, %v3091
    %v3093 = vsel %vm204, %v3085, 0.0
    %v3094 = vrot.slane %v3093, 4
    %v3095 = vadd.f32 %v3093, %v3094
    %v3096 = vrot.slane %v3095, 2
    %v3097 = vadd.f32 %v3095, %v3096
    %v3098 = vrot.slane %v3097, 1
    %v3099 = vadd.f32 %v3097, %v3098
    %v3100 = vrcp.pop 8.0
    %v3101 = vmul.f32 %v3092, %v3100
    %v3102 = vmul.f32 %v3099, %v3100
    %vm3105 = vcmask 1041409
    %v3106 = vsel %vm3105, %v3102, %v3101
    %vm3108 = vcmask 254976
    %3109 = vst.msk [vmem:[#allocation2] sm:$0x3] %vm3108, %v3106
    // Predicated region
    $region34: #{tpu_custom_call.1} parent=1 // pred_check
      _
    $region35: #{tpu_custom_call.1} parent=1 // pred_check_branch
      %3111 = sbr.rel (0) target = $region37
    $region36: #{tpu_custom_call.1} parent=1 // pred_region
      %s3113 = ssub.s32 32, 32
      %3114 = vsyncadd [#allocation3], %s3113
      %s3116 = sshll.u32 [#allocation2], 4
      %s3117 = int_to_ptr.vmem [resolvable:$true] %s3116
      %3119 = dma.vmem_to_hbm [thread:$0]  %s3117, 32, %s8, [#allocation3]
    $region37: #{tpu_custom_call.1} parent=1 // pred_fallthru
      _
    // Predicated region
    $region38: #{tpu_custom_call.1} parent=1 // pred_check
      _
    $region39: #{tpu_custom_call.1} parent=1 // pred_check_branch
      %3121 = sbr.rel (0) target = $region41
    $region40: #{tpu_custom_call.1} parent=1 // pred_region
      %3122 = dma.done [#allocation3], 32
    $region41: #{tpu_custom_call.1} parent=1 // pred_fallthru
      _
    %3123 = vsyncpa [#allocation3], 1

</llo_original>
